<compile_context>
chip_gen: v7x
topology: tpu7x:2x2x1
jax: 0.10.0
libtpu: 0.0.40
codegen_flags: <defaults>
</compile_context>

<pallas_src>
import functools

import numpy as np
import jax
import jax.numpy as jnp
from jax import lax
from jax.experimental import pallas as pl
from jax.experimental.pallas import tpu as pltpu


LANE = 128                   # TPU lane width; all feature dims padded to this
MXU_DTYPE = jnp.bfloat16     # matmul input dtype (f32 accumulation)


def _round_up(x, m):
    return (x + m - 1) // m * m


def _pad2d(a, rows, cols):
    r, c = a.shape
    return jnp.pad(a, ((0, rows - r), (0, cols - c)))


def _vmem_limit_bytes():
    # Generation-aware VMEM budget: ~96 MiB on v5e/v6e (128 MiB), ~48 MiB on v7x (64 MiB).
    try:
        cap = int(pltpu.get_tpu_info().vmem_capacity_bytes)
        return min(cap * 3 // 4, 96 * 1024 * 1024)
    except Exception:
        return 48 * 1024 * 1024


def _act(h, kind):
    if kind == "sigmoid":
        return jax.nn.sigmoid(h)
    if kind == "relu":
        return jnp.maximum(h, 0.0)
    return h


# ---------------------------------------------------------------------------
# Fused DLRM forward kernel (one batch tile per grid step).
#   refs: x, dense_idx, table_bd, (W,b) x n_bot, (W,b) x n_top, out
# ---------------------------------------------------------------------------
def _dlrm_fwd_kernel(*refs, n_bot, n_top, acts_bot, acts_top, mxu_dtype):
    x_ref, idx_ref, table_ref = refs[0], refs[1], refs[2]
    p = 3
    bot = [(refs[p + 2 * i], refs[p + 2 * i + 1]) for i in range(n_bot)]
    p += 2 * n_bot
    top = [(refs[p + 2 * i], refs[p + 2 * i + 1]) for i in range(n_top)]
    p += 2 * n_top
    o_ref = refs[p]

    # ---- bottom MLP: all layers chained, activations stay in vregs ----
    h = x_ref[...]                                            # bf16 (tb, X0_pad)
    for i, (w_ref, b_ref) in enumerate(bot):
        h = jnp.dot(h, w_ref[...], preferred_element_type=jnp.float32) + b_ref[...]
        h = _act(h, acts_bot[i]).astype(mxu_dtype)
    x_act = h                                                 # bf16 (tb, X_pad)

    # ---- EmbeddingBag(sum) for all tables: count matrix @ block-diagonal table ----
    ids = idx_ref[...]                                        # int32 (tb, S_pad), -1 = pad
    tb = ids.shape[0]
    r_pad = table_ref.shape[0]
    r_iota = lax.broadcasted_iota(jnp.int32, (tb, r_pad), 1)
    counts = jnp.zeros((tb, r_pad), jnp.float32)
    for s in range(ids.shape[1]):                             # S_pad is small & static
        counts = counts + (ids[:, s:s + 1] == r_iota).astype(jnp.float32)
    pooled = jnp.dot(counts.astype(mxu_dtype), table_ref[...],
                     preferred_element_type=jnp.float32)      # f32 (tb, E_pad)

    # ---- top MLP: first layer is one fused K=(X_pad+E_pad) contraction ----
    h = jnp.concatenate([x_act, pooled.astype(mxu_dtype)], axis=1)
    for i, (w_ref, b_ref) in enumerate(top):
        h = jnp.dot(h, w_ref[...], preferred_element_type=jnp.float32) + b_ref[...]
        h = _act(h, acts_top[i])
        if i + 1 < n_top:
            h = h.astype(mxu_dtype)

    o_ref[...] = h.astype(o_ref.dtype)                        # lane-dense (tb, OUT_pad)


# ---------------------------------------------------------------------------
# One-time parameter packing (lane padding, bf16 casts, block-diag table, W0 stack).
# ---------------------------------------------------------------------------
def _pack_mlp(params, mxu_dtype):
    out = []
    for W, b in params:
        n, m = W.shape
        Wp = _pad2d(W, _round_up(n, LANE), _round_up(m, LANE)).astype(mxu_dtype)
        bp = _pad2d(b, 1, _round_up(m, LANE)).astype(jnp.float32)
        out.append((Wp, bp))
    return out


def pack_dlrm_params(bot_params, top_params, tables, mxu_dtype=MXU_DTYPE):
    emb_dim = tables[0].shape[1]
    T = len(tables)
    bot_out = bot_params[-1][0].shape[1]

    # block-diagonal stacked embedding table: row = global row id,
    # columns [t*D, (t+1)*D) hold table t.
    row_bases = np.concatenate([[0], np.cumsum([t.shape[0] for t in tables])]).astype(np.int64)
    num_rows = int(row_bases[-1])
    r_pad = _round_up(num_rows, LANE)
    e_pad = _round_up(T * emb_dim, LANE)
    table_bd = jnp.zeros((r_pad, e_pad), jnp.float32)
    for t in range(T):
        table_bd = table_bd.at[int(row_bases[t]):int(row_bases[t + 1]),
                               t * emb_dim:(t + 1) * emb_dim].set(
            jnp.asarray(tables[t], jnp.float32))
    table_bd = table_bd.astype(mxu_dtype)

    bot_packed = _pack_mlp(bot_params, mxu_dtype)
    x_pad_dim = bot_packed[-1][0].shape[1]          # padded bottom-MLP output width

    # top first layer: stack x-part and embedding-part so the in-kernel
    # concat([x, pooled]) feeds one K = (x_pad + e_pad) matmul (interaction fused away).
    W0, b0 = top_params[0]
    h_pad = _round_up(W0.shape[1], LANE)
    W0_st = jnp.zeros((x_pad_dim + e_pad, h_pad), jnp.float32)
    W0_st = W0_st.at[:bot_out, :W0.shape[1]].set(W0[:bot_out])
    W0_st = W0_st.at[x_pad_dim:x_pad_dim + T * emb_dim, :W0.shape[1]].set(W0[bot_out:])
    W0_st = W0_st.astype(mxu_dtype)
    b0_p = _pad2d(b0, 1, h_pad).astype(jnp.float32)
    top_packed = [(W0_st, b0_p)] + _pack_mlp(top_params[1:], mxu_dtype)

    meta = dict(emb_dim=emb_dim, num_tables=T, row_bases=row_bases,
                x0_pad=_round_up(bot_params[0][0].shape[0], LANE),
                out_dim=top_params[-1][0].shape[1],
                out_pad=top_packed[-1][0].shape[1])
    return dict(table_bd=table_bd, bot=bot_packed, top=top_packed, meta=meta)


# ---------------------------------------------------------------------------
# Host-side marshaling of ragged (indices, offsets) -> dense padded row-id matrix.
# ---------------------------------------------------------------------------
def build_dense_indices(indices_list, offsets_list, num_bags, row_bases):
    """Returns (num_bags, round_up(T*max_len, 8)) int32 of GLOBAL row ids, -1 = padding.
    Offsets may have length num_bags (torch EmbeddingBag) or num_bags+1."""
    T = len(indices_list)
    idx_np, off_np, lens = [], [], []
    for t in range(T):
        idx = np.asarray(indices_list[t]).astype(np.int64)
        off = np.asarray(offsets_list[t]).astype(np.int64)
        if off.shape[0] == num_bags:                 # torch convention: append total
            off = np.concatenate([off, [idx.shape[0]]])
        assert off.shape[0] == num_bags + 1, "offsets must have length num_bags(+1)"
        assert off[-1] == idx.shape[0]
        idx_np.append(idx)
        off_np.append(off)
        lens.append(off[1:] - off[:-1])
    max_len = int(max(int(l.max()) for l in lens))   # derived -> never truncates
    cols = np.arange(max_len)[None, :]
    blocks = []
    for t in range(T):
        pos = off_np[t][:num_bags, None] + cols                      # (B, max_len)
        valid = cols < lens[t][:, None]
        safe = np.clip(pos, 0, max(idx_np[t].shape[0] - 1, 0))
        blocks.append(np.where(valid, idx_np[t][safe] + int(row_bases[t]), -1))
    dense = np.concatenate(blocks, axis=1).astype(np.int32)          # (B, T*max_len)
    s_pad = _round_up(dense.shape[1], 8)
    if s_pad != dense.shape[1]:
        dense = np.pad(dense, ((0, 0), (0, s_pad - dense.shape[1])), constant_values=-1)
    return jnp.asarray(dense)


# ---------------------------------------------------------------------------
# pallas_call wrapper + jitted forward.
# ---------------------------------------------------------------------------
def _dlrm_pallas_call(x_p, idx_p, packed, acts_bot, acts_top, tile_b):
    meta = packed["meta"]
    b_pad = x_p.shape[0]

    in_specs = [
        pl.BlockSpec((tile_b, x_p.shape[1]), lambda i: (i, 0)),
        pl.BlockSpec((tile_b, idx_p.shape[1]), lambda i: (i, 0)),
        pl.BlockSpec(packed["table_bd"].shape, lambda i: (0, 0)),
    ]
    args = [x_p, idx_p, packed["table_bd"]]
    for (w, b) in packed["bot"] + packed["top"]:
        in_specs.append(pl.BlockSpec(w.shape, lambda i: (0, 0)))
        args.append(w)
        in_specs.append(pl.BlockSpec(b.shape, lambda i: (0, 0)))
        args.append(b)

    kernel = functools.partial(
        _dlrm_fwd_kernel, n_bot=len(packed["bot"]), n_top=len(packed["top"]),
        acts_bot=tuple(acts_bot), acts_top=tuple(acts_top), mxu_dtype=MXU_DTYPE)

    return pl.pallas_call(
        kernel,
        grid_spec=pltpu.PrefetchScalarGridSpec(
            num_scalar_prefetch=0,
            grid=(b_pad // tile_b,),
            in_specs=in_specs,
            out_specs=pl.BlockSpec((tile_b, meta["out_pad"]), lambda i: (i, 0)),
        ),
        out_shape=jax.ShapeDtypeStruct((b_pad, meta["out_pad"]), jnp.float32),
        compiler_params=pltpu.CompilerParams(
            dimension_semantics=("parallel",),
            vmem_limit_bytes=_vmem_limit_bytes()),
    )(*args)


def make_dlrm_forward(bot_params, top_params, tables, sigmoid_bot, sigmoid_top,
                      *, tile_b=128):
    """Packs parameters once and returns (jitted forward, packed params)."""
    packed = pack_dlrm_params(bot_params, top_params, tables)
    meta = packed["meta"]
    acts_bot = ["sigmoid" if i == sigmoid_bot else "relu" for i in range(len(bot_params))]
    acts_top = ["sigmoid" if i == sigmoid_top else "relu" for i in range(len(top_params))]

    @jax.jit
    def fwd(dense_input, dense_idx):
        B = dense_input.shape[0]
        b_pad = _round_up(max(B, tile_b), tile_b)      # pad batch, never shrink the tile
        x_p = _pad2d(dense_input.astype(MXU_DTYPE), b_pad, meta["x0_pad"])
        idx_p = jnp.pad(dense_idx, ((0, b_pad - B), (0, 0)), constant_values=-1)
        p = _dlrm_pallas_call(x_p, idx_p, packed, acts_bot, acts_top, tile_b)
        return p[:B, :meta["out_dim"]]

    return fwd, packed


if __name__ == "__main__":
    # ---- model config (small, consistent with DLRM_Net.__init__) ----
    B = 256                     # batch size -> grid of 2 tiles of 128
    m_spa = 16                  # embedding dim
    ln_emb = [20, 30, 40]       # rows per embedding table
    ln_bot = [13, 32, 16]       # bottom MLP dims
    ln_top = [ln_bot[-1] + len(ln_emb) * m_spa, 32, 1]   # 64 -> 32 -> 1
    sigmoid_bot = -1                                     # all ReLU
    sigmoid_top = len(ln_top) - 2                        # last layer Sigmoid

    key = jax.random.PRNGKey(0)
    keys = iter(jax.random.split(key, 64))

    def make_mlp_params(ln, k):
        params = []
        ks = jax.random.split(k, 2 * (len(ln) - 1))
        for i in range(len(ln) - 1):
            n, m = int(ln[i]), int(ln[i + 1])
            std_w = (2.0 / (m + n)) ** 0.5
            std_b = (1.0 / m) ** 0.5
            W = std_w * jax.random.normal(ks[2 * i], (n, m), jnp.float32)   # (in, out)
            b = std_b * jax.random.normal(ks[2 * i + 1], (1, m), jnp.float32)
            params.append((W, b))
        return params

    bot_params = make_mlp_params(ln_bot, next(keys))
    top_params = make_mlp_params(ln_top, next(keys))
    tables = [jax.random.normal(next(keys), (rows, m_spa), jnp.float32) for rows in ln_emb]

    dense_input = jax.random.normal(next(keys), (B, ln_bot[0]), jnp.float32)

    base_lengths = np.array([2, 3, 1, 2], dtype=np.int64)        # pooling factors
    lengths = np.tile(base_lengths, B // 4)                      # (B,)
    offsets_np = np.concatenate([[0], np.cumsum(lengths)]).astype(np.int64)   # (B+1,)
    total = int(lengths.sum())

    indices, offsets = [], []
    for rows in ln_emb:
        idx = np.asarray(jax.random.randint(next(keys), (total,), 0, rows, dtype=jnp.int32))
        indices.append(idx)
        offsets.append(offsets_np)

    # ---- build forward (one-time packing) and marshal the ragged index inputs ----
    fwd, packed = make_dlrm_forward(bot_params, top_params, tables,
                                    sigmoid_bot, sigmoid_top, tile_b=128)
    dense_idx = build_dense_indices(indices, offsets, B, packed["meta"]["row_bases"])

    # ---- run the fused Pallas forward ----
    p = jax.block_until_ready(fwd(dense_input, dense_idx))
    assert p.shape == (B, 1) and p.dtype == jnp.float32

    # ---- pure f32 reference (bf16 MXU inputs -> loose tolerance) ----
    def ref_mlp(x, params, sig):
        for i, (W, b) in enumerate(params):
            x = x @ W + b
            x = jax.nn.sigmoid(x) if i == sig else jnp.maximum(x, 0.0)
        return x

    bag_ids = np.repeat(np.arange(B), lengths)
    ly_ref = []
    for t in range(len(tables)):
        tab = np.asarray(tables[t])
        pooled = np.zeros((B, m_spa), np.float32)
        np.add.at(pooled, bag_ids, tab[indices[t]])
        ly_ref.append(jnp.asarray(pooled))
    x_ref = ref_mlp(dense_input, bot_params, sigmoid_bot)
    z_ref = jnp.concatenate([x_ref] + ly_ref, axis=1)
    p_ref = ref_mlp(z_ref, top_params, sigmoid_top)

    err = float(jnp.max(jnp.abs(p - p_ref)))
    assert jnp.allclose(p, p_ref, atol=3e-2, rtol=3e-2), err

    print("KERNEL_OK")
</pallas_src>

<mosaic_0001>
module attributes {stable_mosaic.version = 11 : i64} {
  func.func @_dlrm_fwd_kernel(%arg0: i32, %arg1: memref<128x128xbf16, #tpu.memory_space<vmem>>, %arg2: memref<128x16xi32, #tpu.memory_space<vmem>>, %arg3: memref<128x128xbf16, #tpu.memory_space<vmem>>, %arg4: memref<128x128xbf16, #tpu.memory_space<vmem>>, %arg5: memref<1x128xf32, #tpu.memory_space<vmem>>, %arg6: memref<128x128xbf16, #tpu.memory_space<vmem>>, %arg7: memref<1x128xf32, #tpu.memory_space<vmem>>, %arg8: memref<256x128xbf16, #tpu.memory_space<vmem>>, %arg9: memref<1x128xf32, #tpu.memory_space<vmem>>, %arg10: memref<128x128xbf16, #tpu.memory_space<vmem>>, %arg11: memref<1x128xf32, #tpu.memory_space<vmem>>, %arg12: memref<128x128xf32, #tpu.memory_space<vmem>>) attributes {dimension_semantics = [#tpu.dimension_semantics<parallel>], iteration_bounds = array<i64: 2>, scalar_prefetch = 0 : i64, scratch_operands = 0 : i64, tpu.core_type = #tpu.core_type<tc>, window_params = [{transform_indices = @transform_0, window_bounds = array<i64: 128, 128>}, {transform_indices = @transform_1, window_bounds = array<i64: 128, 16>}, {pipeline_mode = #tpu.pipeline_mode<synchronous>, transform_indices = @transform_2, window_bounds = array<i64: 128, 128>}, {pipeline_mode = #tpu.pipeline_mode<synchronous>, transform_indices = @transform_3, window_bounds = array<i64: 128, 128>}, {pipeline_mode = #tpu.pipeline_mode<synchronous>, transform_indices = @transform_4, window_bounds = array<i64: 1, 128>}, {pipeline_mode = #tpu.pipeline_mode<synchronous>, transform_indices = @transform_5, window_bounds = array<i64: 128, 128>}, {pipeline_mode = #tpu.pipeline_mode<synchronous>, transform_indices = @transform_6, window_bounds = array<i64: 1, 128>}, {pipeline_mode = #tpu.pipeline_mode<synchronous>, transform_indices = @transform_7, window_bounds = array<i64: 256, 128>}, {pipeline_mode = #tpu.pipeline_mode<synchronous>, transform_indices = @transform_8, window_bounds = array<i64: 1, 128>}, {pipeline_mode = #tpu.pipeline_mode<synchronous>, transform_indices = @transform_9, window_bounds = array<i64: 128, 128>}, {pipeline_mode = #tpu.pipeline_mode<synchronous>, transform_indices = @transform_10, window_bounds = array<i64: 1, 128>}, {transform_indices = @transform_11, window_bounds = array<i64: 128, 128>}]} {
    %c0 = arith.constant 0 : index
    %c0_0 = arith.constant 0 : index
    %0 = vector.load %arg1[%c0, %c0_0] : memref<128x128xbf16, #tpu.memory_space<vmem>>, vector<128x128xbf16>
    %c0_1 = arith.constant 0 : index
    %c0_2 = arith.constant 0 : index
    %1 = vector.load %arg4[%c0_1, %c0_2] : memref<128x128xbf16, #tpu.memory_space<vmem>>, vector<128x128xbf16>
    %cst = arith.constant dense<0.000000e+00> : vector<128x128xf32>
    %2 = tpu.matmul %0, %1, %cst {dimension_numbers = #tpu.dot_dimension_numbers<[1], [0], [0], [1], [0, 0, 1, 1], [], []>} : vector<128x128xbf16>, vector<128x128xbf16>, vector<128x128xf32> -> vector<128x128xf32>
    %c0_3 = arith.constant 0 : index
    %c0_4 = arith.constant 0 : index
    %3 = vector.load %arg5[%c0_3, %c0_4] : memref<1x128xf32, #tpu.memory_space<vmem>>, vector<1x128xf32>
    %4 = vector.broadcast %3 : vector<1x128xf32> to vector<128x128xf32>
    %5 = arith.addf %2, %4 : vector<128x128xf32>
    %cst_5 = arith.constant 0.000000e+00 : f32
    %6 = vector.broadcast %cst_5 : f32 to vector<128x128xf32>
    %7 = arith.maximumf %5, %6 : vector<128x128xf32>
    %8 = arith.truncf %7 : vector<128x128xf32> to vector<128x128xbf16>
    %c0_6 = arith.constant 0 : index
    %c0_7 = arith.constant 0 : index
    %9 = vector.load %arg6[%c0_6, %c0_7] : memref<128x128xbf16, #tpu.memory_space<vmem>>, vector<128x128xbf16>
    %cst_8 = arith.constant dense<0.000000e+00> : vector<128x128xf32>
    %10 = tpu.matmul %8, %9, %cst_8 {dimension_numbers = #tpu.dot_dimension_numbers<[1], [0], [0], [1], [0, 0, 1, 1], [], []>} : vector<128x128xbf16>, vector<128x128xbf16>, vector<128x128xf32> -> vector<128x128xf32>
    %c0_9 = arith.constant 0 : index
    %c0_10 = arith.constant 0 : index
    %11 = vector.load %arg7[%c0_9, %c0_10] : memref<1x128xf32, #tpu.memory_space<vmem>>, vector<1x128xf32>
    %12 = vector.broadcast %11 : vector<1x128xf32> to vector<128x128xf32>
    %13 = arith.addf %10, %12 : vector<128x128xf32>
    %cst_11 = arith.constant 0.000000e+00 : f32
    %14 = vector.broadcast %cst_11 : f32 to vector<128x128xf32>
    %15 = arith.maximumf %13, %14 : vector<128x128xf32>
    %16 = arith.truncf %15 : vector<128x128xf32> to vector<128x128xbf16>
    %c0_12 = arith.constant 0 : index
    %c0_13 = arith.constant 0 : index
    %17 = vector.load %arg2[%c0_12, %c0_13] : memref<128x16xi32, #tpu.memory_space<vmem>>, vector<128x16xi32>
    %18 = tpu.iota {dimensions = array<i32: 1>} : vector<128x128xi32>
    %cst_14 = arith.constant 0.000000e+00 : f32
    %19 = vector.broadcast %cst_14 : f32 to vector<128x128xf32>
    %20 = vector.extract_strided_slice %17 {offsets = [0, 0], sizes = [128, 1], strides = [1, 1]} : vector<128x16xi32> to vector<128x1xi32>
    %21 = vector.broadcast %20 : vector<128x1xi32> to vector<128x128xi32>
    %22 = arith.cmpi eq, %21, %18 : vector<128x128xi32>
    %23 = arith.extui %22 : vector<128x128xi1> to vector<128x128xi32>
    %24 = arith.sitofp %23 : vector<128x128xi32> to vector<128x128xf32>
    %25 = arith.addf %19, %24 : vector<128x128xf32>
    %26 = vector.extract_strided_slice %17 {offsets = [0, 1], sizes = [128, 1], strides = [1, 1]} : vector<128x16xi32> to vector<128x1xi32>
    %27 = vector.broadcast %26 : vector<128x1xi32> to vector<128x128xi32>
    %28 = arith.cmpi eq, %27, %18 : vector<128x128xi32>
    %29 = arith.extui %28 : vector<128x128xi1> to vector<128x128xi32>
    %30 = arith.sitofp %29 : vector<128x128xi32> to vector<128x128xf32>
    %31 = arith.addf %25, %30 : vector<128x128xf32>
    %32 = vector.extract_strided_slice %17 {offsets = [0, 2], sizes = [128, 1], strides = [1, 1]} : vector<128x16xi32> to vector<128x1xi32>
    %33 = vector.broadcast %32 : vector<128x1xi32> to vector<128x128xi32>
    %34 = arith.cmpi eq, %33, %18 : vector<128x128xi32>
    %35 = arith.extui %34 : vector<128x128xi1> to vector<128x128xi32>
    %36 = arith.sitofp %35 : vector<128x128xi32> to vector<128x128xf32>
    %37 = arith.addf %31, %36 : vector<128x128xf32>
    %38 = vector.extract_strided_slice %17 {offsets = [0, 3], sizes = [128, 1], strides = [1, 1]} : vector<128x16xi32> to vector<128x1xi32>
    %39 = vector.broadcast %38 : vector<128x1xi32> to vector<128x128xi32>
    %40 = arith.cmpi eq, %39, %18 : vector<128x128xi32>
    %41 = arith.extui %40 : vector<128x128xi1> to vector<128x128xi32>
    %42 = arith.sitofp %41 : vector<128x128xi32> to vector<128x128xf32>
    %43 = arith.addf %37, %42 : vector<128x128xf32>
    %44 = vector.extract_strided_slice %17 {offsets = [0, 4], sizes = [128, 1], strides = [1, 1]} : vector<128x16xi32> to vector<128x1xi32>
    %45 = vector.broadcast %44 : vector<128x1xi32> to vector<128x128xi32>
    %46 = arith.cmpi eq, %45, %18 : vector<128x128xi32>
    %47 = arith.extui %46 : vector<128x128xi1> to vector<128x128xi32>
    %48 = arith.sitofp %47 : vector<128x128xi32> to vector<128x128xf32>
    %49 = arith.addf %43, %48 : vector<128x128xf32>
    %50 = vector.extract_strided_slice %17 {offsets = [0, 5], sizes = [128, 1], strides = [1, 1]} : vector<128x16xi32> to vector<128x1xi32>
    %51 = vector.broadcast %50 : vector<128x1xi32> to vector<128x128xi32>
    %52 = arith.cmpi eq, %51, %18 : vector<128x128xi32>
    %53 = arith.extui %52 : vector<128x128xi1> to vector<128x128xi32>
    %54 = arith.sitofp %53 : vector<128x128xi32> to vector<128x128xf32>
    %55 = arith.addf %49, %54 : vector<128x128xf32>
    %56 = vector.extract_strided_slice %17 {offsets = [0, 6], sizes = [128, 1], strides = [1, 1]} : vector<128x16xi32> to vector<128x1xi32>
    %57 = vector.broadcast %56 : vector<128x1xi32> to vector<128x128xi32>
    %58 = arith.cmpi eq, %57, %18 : vector<128x128xi32>
    %59 = arith.extui %58 : vector<128x128xi1> to vector<128x128xi32>
    %60 = arith.sitofp %59 : vector<128x128xi32> to vector<128x128xf32>
    %61 = arith.addf %55, %60 : vector<128x128xf32>
    %62 = vector.extract_strided_slice %17 {offsets = [0, 7], sizes = [128, 1], strides = [1, 1]} : vector<128x16xi32> to vector<128x1xi32>
    %63 = vector.broadcast %62 : vector<128x1xi32> to vector<128x128xi32>
    %64 = arith.cmpi eq, %63, %18 : vector<128x128xi32>
    %65 = arith.extui %64 : vector<128x128xi1> to vector<128x128xi32>
    %66 = arith.sitofp %65 : vector<128x128xi32> to vector<128x128xf32>
    %67 = arith.addf %61, %66 : vector<128x128xf32>
    %68 = vector.extract_strided_slice %17 {offsets = [0, 8], sizes = [128, 1], strides = [1, 1]} : vector<128x16xi32> to vector<128x1xi32>
    %69 = vector.broadcast %68 : vector<128x1xi32> to vector<128x128xi32>
    %70 = arith.cmpi eq, %69, %18 : vector<128x128xi32>
    %71 = arith.extui %70 : vector<128x128xi1> to vector<128x128xi32>
    %72 = arith.sitofp %71 : vector<128x128xi32> to vector<128x128xf32>
    %73 = arith.addf %67, %72 : vector<128x128xf32>
    %74 = vector.extract_strided_slice %17 {offsets = [0, 9], sizes = [128, 1], strides = [1, 1]} : vector<128x16xi32> to vector<128x1xi32>
    %75 = vector.broadcast %74 : vector<128x1xi32> to vector<128x128xi32>
    %76 = arith.cmpi eq, %75, %18 : vector<128x128xi32>
    %77 = arith.extui %76 : vector<128x128xi1> to vector<128x128xi32>
    %78 = arith.sitofp %77 : vector<128x128xi32> to vector<128x128xf32>
    %79 = arith.addf %73, %78 : vector<128x128xf32>
    %80 = vector.extract_strided_slice %17 {offsets = [0, 10], sizes = [128, 1], strides = [1, 1]} : vector<128x16xi32> to vector<128x1xi32>
    %81 = vector.broadcast %80 : vector<128x1xi32> to vector<128x128xi32>
    %82 = arith.cmpi eq, %81, %18 : vector<128x128xi32>
    %83 = arith.extui %82 : vector<128x128xi1> to vector<128x128xi32>
    %84 = arith.sitofp %83 : vector<128x128xi32> to vector<128x128xf32>
    %85 = arith.addf %79, %84 : vector<128x128xf32>
    %86 = vector.extract_strided_slice %17 {offsets = [0, 11], sizes = [128, 1], strides = [1, 1]} : vector<128x16xi32> to vector<128x1xi32>
    %87 = vector.broadcast %86 : vector<128x1xi32> to vector<128x128xi32>
    %88 = arith.cmpi eq, %87, %18 : vector<128x128xi32>
    %89 = arith.extui %88 : vector<128x128xi1> to vector<128x128xi32>
    %90 = arith.sitofp %89 : vector<128x128xi32> to vector<128x128xf32>
    %91 = arith.addf %85, %90 : vector<128x128xf32>
    %92 = vector.extract_strided_slice %17 {offsets = [0, 12], sizes = [128, 1], strides = [1, 1]} : vector<128x16xi32> to vector<128x1xi32>
    %93 = vector.broadcast %92 : vector<128x1xi32> to vector<128x128xi32>
    %94 = arith.cmpi eq, %93, %18 : vector<128x128xi32>
    %95 = arith.extui %94 : vector<128x128xi1> to vector<128x128xi32>
    %96 = arith.sitofp %95 : vector<128x128xi32> to vector<128x128xf32>
    %97 = arith.addf %91, %96 : vector<128x128xf32>
    %98 = vector.extract_strided_slice %17 {offsets = [0, 13], sizes = [128, 1], strides = [1, 1]} : vector<128x16xi32> to vector<128x1xi32>
    %99 = vector.broadcast %98 : vector<128x1xi32> to vector<128x128xi32>
    %100 = arith.cmpi eq, %99, %18 : vector<128x128xi32>
    %101 = arith.extui %100 : vector<128x128xi1> to vector<128x128xi32>
    %102 = arith.sitofp %101 : vector<128x128xi32> to vector<128x128xf32>
    %103 = arith.addf %97, %102 : vector<128x128xf32>
    %104 = vector.extract_strided_slice %17 {offsets = [0, 14], sizes = [128, 1], strides = [1, 1]} : vector<128x16xi32> to vector<128x1xi32>
    %105 = vector.broadcast %104 : vector<128x1xi32> to vector<128x128xi32>
    %106 = arith.cmpi eq, %105, %18 : vector<128x128xi32>
    %107 = arith.extui %106 : vector<128x128xi1> to vector<128x128xi32>
    %108 = arith.sitofp %107 : vector<128x128xi32> to vector<128x128xf32>
    %109 = arith.addf %103, %108 : vector<128x128xf32>
    %110 = vector.extract_strided_slice %17 {offsets = [0, 15], sizes = [128, 1], strides = [1, 1]} : vector<128x16xi32> to vector<128x1xi32>
    %111 = vector.broadcast %110 : vector<128x1xi32> to vector<128x128xi32>
    %112 = arith.cmpi eq, %111, %18 : vector<128x128xi32>
    %113 = arith.extui %112 : vector<128x128xi1> to vector<128x128xi32>
    %114 = arith.sitofp %113 : vector<128x128xi32> to vector<128x128xf32>
    %115 = arith.addf %109, %114 : vector<128x128xf32>
    %116 = arith.truncf %115 : vector<128x128xf32> to vector<128x128xbf16>
    %c0_15 = arith.constant 0 : index
    %c0_16 = arith.constant 0 : index
    %117 = vector.load %arg3[%c0_15, %c0_16] : memref<128x128xbf16, #tpu.memory_space<vmem>>, vector<128x128xbf16>
    %cst_17 = arith.constant dense<0.000000e+00> : vector<128x128xf32>
    %118 = tpu.matmul %116, %117, %cst_17 {dimension_numbers = #tpu.dot_dimension_numbers<[1], [0], [0], [1], [0, 0, 1, 1], [], []>} : vector<128x128xbf16>, vector<128x128xbf16>, vector<128x128xf32> -> vector<128x128xf32>
    %119 = arith.truncf %118 : vector<128x128xf32> to vector<128x128xbf16>
    %120 = tpu.concatenate %16, %119 in 1 : vector<128x128xbf16>, vector<128x128xbf16> -> vector<128x256xbf16>
    %c0_18 = arith.constant 0 : index
    %c0_19 = arith.constant 0 : index
    %121 = vector.load %arg8[%c0_18, %c0_19] : memref<256x128xbf16, #tpu.memory_space<vmem>>, vector<256x128xbf16>
    %cst_20 = arith.constant dense<0.000000e+00> : vector<128x128xf32>
    %122 = tpu.matmul %120, %121, %cst_20 {dimension_numbers = #tpu.dot_dimension_numbers<[1], [0], [0], [1], [0, 0, 1, 1], [], []>} : vector<128x256xbf16>, vector<256x128xbf16>, vector<128x128xf32> -> vector<128x128xf32>
    %c0_21 = arith.constant 0 : index
    %c0_22 = arith.constant 0 : index
    %123 = vector.load %arg9[%c0_21, %c0_22] : memref<1x128xf32, #tpu.memory_space<vmem>>, vector<1x128xf32>
    %124 = vector.broadcast %123 : vector<1x128xf32> to vector<128x128xf32>
    %125 = arith.addf %122, %124 : vector<128x128xf32>
    %cst_23 = arith.constant 0.000000e+00 : f32
    %126 = vector.broadcast %cst_23 : f32 to vector<128x128xf32>
    %127 = arith.maximumf %125, %126 : vector<128x128xf32>
    %128 = arith.truncf %127 : vector<128x128xf32> to vector<128x128xbf16>
    %c0_24 = arith.constant 0 : index
    %c0_25 = arith.constant 0 : index
    %129 = vector.load %arg10[%c0_24, %c0_25] : memref<128x128xbf16, #tpu.memory_space<vmem>>, vector<128x128xbf16>
    %cst_26 = arith.constant dense<0.000000e+00> : vector<128x128xf32>
    %130 = tpu.matmul %128, %129, %cst_26 {dimension_numbers = #tpu.dot_dimension_numbers<[1], [0], [0], [1], [0, 0, 1, 1], [], []>} : vector<128x128xbf16>, vector<128x128xbf16>, vector<128x128xf32> -> vector<128x128xf32>
    %c0_27 = arith.constant 0 : index
    %c0_28 = arith.constant 0 : index
    %131 = vector.load %arg11[%c0_27, %c0_28] : memref<1x128xf32, #tpu.memory_space<vmem>>, vector<1x128xf32>
    %132 = vector.broadcast %131 : vector<1x128xf32> to vector<128x128xf32>
    %133 = arith.addf %130, %132 : vector<128x128xf32>
    %134 = arith.negf %133 : vector<128x128xf32>
    %135 = math.exp %134 : vector<128x128xf32>
    %cst_29 = arith.constant 1.000000e+00 : f32
    %136 = vector.broadcast %cst_29 : f32 to vector<128x128xf32>
    %137 = arith.addf %136, %135 : vector<128x128xf32>
    %138 = arith.divf %136, %137 : vector<128x128xf32>
    %c0_30 = arith.constant 0 : index
    %c0_31 = arith.constant 0 : index
    %139 = vector.load %arg12[%c0_30, %c0_31] : memref<128x128xf32, #tpu.memory_space<vmem>>, vector<128x128xf32>
    tpu.vector_store %arg12[%c0_30, %c0_31], %138 {strides = array<i32>} : memref<128x128xf32, #tpu.memory_space<vmem>>, vector<128x128xf32>,
    return
  }
  func.func @transform_0(%arg0: i32) -> (i32, i32) {
    %c0_i32 = arith.constant 0 : i32
    %c0_i32_0 = arith.constant 0 : i32
    return %arg0, %c0_i32 : i32, i32
  }
  func.func @transform_1(%arg0: i32) -> (i32, i32) {
    %c0_i32 = arith.constant 0 : i32
    %c0_i32_0 = arith.constant 0 : i32
    return %arg0, %c0_i32 : i32, i32
  }
  func.func @transform_2(%arg0: i32) -> (i32, i32) {
    %c0_i32 = arith.constant 0 : i32
    %c0_i32_0 = arith.constant 0 : i32
    %c0_i32_1 = arith.constant 0 : i32
    return %c0_i32, %c0_i32_0 : i32, i32
  }
  func.func @transform_3(%arg0: i32) -> (i32, i32) {
    %c0_i32 = arith.constant 0 : i32
    %c0_i32_0 = arith.constant 0 : i32
    %c0_i32_1 = arith.constant 0 : i32
    return %c0_i32, %c0_i32_0 : i32, i32
  }
  func.func @transform_4(%arg0: i32) -> (i32, i32) {
    %c0_i32 = arith.constant 0 : i32
    %c0_i32_0 = arith.constant 0 : i32
    %c0_i32_1 = arith.constant 0 : i32
    return %c0_i32, %c0_i32_0 : i32, i32
  }
  func.func @transform_5(%arg0: i32) -> (i32, i32) {
    %c0_i32 = arith.constant 0 : i32
    %c0_i32_0 = arith.constant 0 : i32
    %c0_i32_1 = arith.constant 0 : i32
    return %c0_i32, %c0_i32_0 : i32, i32
  }
  func.func @transform_6(%arg0: i32) -> (i32, i32) {
    %c0_i32 = arith.constant 0 : i32
    %c0_i32_0 = arith.constant 0 : i32
    %c0_i32_1 = arith.constant 0 : i32
    return %c0_i32, %c0_i32_0 : i32, i32
  }
  func.func @transform_7(%arg0: i32) -> (i32, i32) {
    %c0_i32 = arith.constant 0 : i32
    %c0_i32_0 = arith.constant 0 : i32
    %c0_i32_1 = arith.constant 0 : i32
    return %c0_i32, %c0_i32_0 : i32, i32
  }
  func.func @transform_8(%arg0: i32) -> (i32, i32) {
    %c0_i32 = arith.constant 0 : i32
    %c0_i32_0 = arith.constant 0 : i32
    %c0_i32_1 = arith.constant 0 : i32
    return %c0_i32, %c0_i32_0 : i32, i32
  }
  func.func @transform_9(%arg0: i32) -> (i32, i32) {
    %c0_i32 = arith.constant 0 : i32
    %c0_i32_0 = arith.constant 0 : i32
    %c0_i32_1 = arith.constant 0 : i32
    return %c0_i32, %c0_i32_0 : i32, i32
  }
  func.func @transform_10(%arg0: i32) -> (i32, i32) {
    %c0_i32 = arith.constant 0 : i32
    %c0_i32_0 = arith.constant 0 : i32
    %c0_i32_1 = arith.constant 0 : i32
    return %c0_i32, %c0_i32_0 : i32, i32
  }
  func.func @transform_11(%arg0: i32) -> (i32, i32) {
    %c0_i32 = arith.constant 0 : i32
    %c0_i32_0 = arith.constant 0 : i32
    return %arg0, %c0_i32 : i32, i32
  }
}

</mosaic_0001>

<llo_original>
// kernel: fwd.1
$region0: #{fwd.1}
  #allocation0 [shape = 'u32[]', space=smem, size = 0x4, offset = 0x4, fixed_abs, tag = 'smem constant byte address 0x4 - core index']
  #allocation1 [shape = 'u32[144,128]{1,0:T(1,128)}', space=vmem, size = 0x12000, scoped, tag = 'internal scratch']
  %s0 = inlined_call_operand.vmem [shape: bf16[256,128], index: 0, kind: input, shape index: {}]
  %s1 = inlined_call_operand.vmem [shape: s32[256,16], index: 1, kind: input, shape index: {}]
  %s2 = inlined_call_operand.vmem [shape: bf16[128,128], index: 2, kind: input, shape index: {}]
  %s3 = inlined_call_operand.vmem [shape: bf16[128,128], index: 3, kind: input, shape index: {}]
  %s4 = inlined_call_operand.vmem [shape: f32[1,128], index: 4, kind: input, shape index: {}]
  %s5 = inlined_call_operand.vmem [shape: bf16[128,128], index: 5, kind: input, shape index: {}]
  %s6 = inlined_call_operand.vmem [shape: f32[1,128], index: 6, kind: input, shape index: {}]
  %s7 = inlined_call_operand.vmem [shape: bf16[256,128], index: 7, kind: input, shape index: {}]
  %s8 = inlined_call_operand.vmem [shape: f32[1,128], index: 8, kind: input, shape index: {}]
  %s9 = inlined_call_operand.vmem [shape: bf16[128,128], index: 9, kind: input, shape index: {}]
  %s10 = inlined_call_operand.vmem [shape: f32[1,128], index: 10, kind: input, shape index: {}]
  %s11 = inlined_call_operand.vmem [shape: f32[256,128], index: 11, kind: output, shape index: {}]
  %s12 = sld [smem:[#allocation0]]
  $region77: #{fwd.1} parent=0
    _
  %s14 = ssub.s32 1, %s12
  %s15 = scalar_select 0, %s14, %s12
  loop: start=0, step=1, limit=4
  $region2: #{fwd.1} parent=0 // loop_pre_header
    _
  $region3: #{fwd.1} parent=0 // loop_header
    %s17 = sphi 0, %s21
    %p18 = scmp.ge.s32.totalorder %s17, 4
    %s27 = sphi 0, %s29
    %s30 = sphi 0, %s27
    %s31 = sphi 0, %s30
    %s47 = sphi 0, %s31
    %s53 = sphi 0, %s55
    %s56 = sphi 0, %s53
    %s57 = sphi 0, %s56
    %s73 = sphi 0, %s57
    %s77 = sphi 0, %s77
    %s79 = sphi 0, %s77
    %s80 = sphi 0, %s79
    %s94 = sphi 0, %s80
    %s98 = sphi 0, %s98
    %s100 = sphi 0, %s98
    %s101 = sphi 0, %s100
    %s115 = sphi 0, %s101
    %s119 = sphi 0, %s119
    %s121 = sphi 0, %s119
    %s122 = sphi 0, %s121
    %s136 = sphi 0, %s122
    %s140 = sphi 0, %s140
    %s142 = sphi 0, %s140
    %s143 = sphi 0, %s142
    %s157 = sphi 0, %s143
    %s161 = sphi 0, %s161
    %s163 = sphi 0, %s161
    %s164 = sphi 0, %s163
    %s178 = sphi 0, %s164
    %s182 = sphi 0, %s182
    %s184 = sphi 0, %s182
    %s185 = sphi 0, %s184
    %s199 = sphi 0, %s185
    %s203 = sphi 0, %s203
    %s205 = sphi 0, %s203
    %s206 = sphi 0, %s205
    %s220 = sphi 0, %s206
    %s224 = sphi 0, %s224
    %s226 = sphi 0, %s224
    %s227 = sphi 0, %s226
    %s241 = sphi 0, %s227
    %s245 = sphi 0, %s245
    %s247 = sphi 0, %s245
    %s248 = sphi 0, %s247
    %s262 = sphi 0, %s248
    %s268 = sphi 0, %s270
    %s271 = sphi 0, %s268
    %s272 = sphi 0, %s271
    %s288 = sphi 0, %s272
  $region4: #{fwd.1} parent=0 // loop_header_branch
    %20 = sbr.rel (%p18) target = $region8
  $region5: #{fwd.1} parent=0 // loop_body
    %s22 = ssub.s32 %s17, 1
    %s23 = ssub.s32 %s17, 2
    %s24 = sadd.s32 %s17, 1
    %s25 = ssub.s32 %s17, %s24
    %p26 = scmp.eq.s32.totalorder %s25, 0
    %s28 = sadd.s32 %s27, 1
    %s29 = scalar_select %p26, %s27, %s28
    %p32 = pneg %p26
    %p33 = scmp.eq.s32.totalorder %s17, 1
    %p34 = por %p32, %p33
    %p35 = scmp.ne.s32.totalorder %s27, %s30
    %p36 = scmp.eq.s32.totalorder %s17, 0
    %p37 = por %p35, %p36
    %p38 = scmp.ne.s32.totalorder %s27, %s30
    %p39 = scmp.eq.s32.totalorder %s22, 1
    %p40 = por %p38, %p39
    %p41 = scmp.ne.s32.totalorder %s30, %s31
    %p42 = scmp.eq.s32.totalorder %s22, 0
    %p43 = por %p41, %p42
    %p44 = scmp.ne.s32.totalorder %s30, %s31
    %p45 = scmp.eq.s32.totalorder %s23, 1
    %p46 = por %p44, %p45
    %p48 = scmp.ne.s32.totalorder %s31, %s47
    %p49 = scmp.eq.s32.totalorder %s23, 0
    %p50 = por %p48, %p49
    %s51 = ssub.s32 %s17, %s24
    %p52 = scmp.eq.s32.totalorder %s51, 0
    %s54 = sadd.s32 %s53, 1
    %s55 = scalar_select %p52, %s53, %s54
    %p58 = pneg %p52
    %p59 = scmp.eq.s32.totalorder %s17, 1
    %p60 = por %p58, %p59
    %p61 = scmp.ne.s32.totalorder %s53, %s56
    %p62 = scmp.eq.s32.totalorder %s17, 0
    %p63 = por %p61, %p62
    %p64 = scmp.ne.s32.totalorder %s53, %s56
    %p65 = scmp.eq.s32.totalorder %s22, 1
    %p66 = por %p64, %p65
    %p67 = scmp.ne.s32.totalorder %s56, %s57
    %p68 = scmp.eq.s32.totalorder %s22, 0
    %p69 = por %p67, %p68
    %p70 = scmp.ne.s32.totalorder %s56, %s57
    %p71 = scmp.eq.s32.totalorder %s23, 1
    %p72 = por %p70, %p71
    %p74 = scmp.ne.s32.totalorder %s57, %s73
    %p75 = scmp.eq.s32.totalorder %s23, 0
    %p76 = por %p74, %p75
    %s78 = sadd.s32 %s77, 1
    %p81 = scmp.eq.s32.totalorder %s17, 1
    %p82 = scmp.ne.s32.totalorder %s77, %s79
    %p83 = scmp.eq.s32.totalorder %s17, 0
    %p84 = por %p82, %p83
    %p85 = scmp.ne.s32.totalorder %s77, %s79
    %p86 = scmp.eq.s32.totalorder %s22, 1
    %p87 = por %p85, %p86
    %p88 = scmp.ne.s32.totalorder %s79, %s80
    %p89 = scmp.eq.s32.totalorder %s22, 0
    %p90 = por %p88, %p89
    %p91 = scmp.ne.s32.totalorder %s79, %s80
    %p92 = scmp.eq.s32.totalorder %s23, 1
    %p93 = por %p91, %p92
    %p95 = scmp.ne.s32.totalorder %s80, %s94
    %p96 = scmp.eq.s32.totalorder %s23, 0
    %p97 = por %p95, %p96
    %s99 = sadd.s32 %s98, 1
    %p102 = scmp.eq.s32.totalorder %s17, 1
    %p103 = scmp.ne.s32.totalorder %s98, %s100
    %p104 = scmp.eq.s32.totalorder %s17, 0
    %p105 = por %p103, %p104
    %p106 = scmp.ne.s32.totalorder %s98, %s100
    %p107 = scmp.eq.s32.totalorder %s22, 1
    %p108 = por %p106, %p107
    %p109 = scmp.ne.s32.totalorder %s100, %s101
    %p110 = scmp.eq.s32.totalorder %s22, 0
    %p111 = por %p109, %p110
    %p112 = scmp.ne.s32.totalorder %s100, %s101
    %p113 = scmp.eq.s32.totalorder %s23, 1
    %p114 = por %p112, %p113
    %p116 = scmp.ne.s32.totalorder %s101, %s115
    %p117 = scmp.eq.s32.totalorder %s23, 0
    %p118 = por %p116, %p117
    %s120 = sadd.s32 %s119, 1
    %p123 = scmp.eq.s32.totalorder %s17, 1
    %p124 = scmp.ne.s32.totalorder %s119, %s121
    %p125 = scmp.eq.s32.totalorder %s17, 0
    %p126 = por %p124, %p125
    %p127 = scmp.ne.s32.totalorder %s119, %s121
    %p128 = scmp.eq.s32.totalorder %s22, 1
    %p129 = por %p127, %p128
    %p130 = scmp.ne.s32.totalorder %s121, %s122
    %p131 = scmp.eq.s32.totalorder %s22, 0
    %p132 = por %p130, %p131
    %p133 = scmp.ne.s32.totalorder %s121, %s122
    %p134 = scmp.eq.s32.totalorder %s23, 1
    %p135 = por %p133, %p134
    %p137 = scmp.ne.s32.totalorder %s122, %s136
    %p138 = scmp.eq.s32.totalorder %s23, 0
    %p139 = por %p137, %p138
    %s141 = sadd.s32 %s140, 1
    %p144 = scmp.eq.s32.totalorder %s17, 1
    %p145 = scmp.ne.s32.totalorder %s140, %s142
    %p146 = scmp.eq.s32.totalorder %s17, 0
    %p147 = por %p145, %p146
    %p148 = scmp.ne.s32.totalorder %s140, %s142
    %p149 = scmp.eq.s32.totalorder %s22, 1
    %p150 = por %p148, %p149
    %p151 = scmp.ne.s32.totalorder %s142, %s143
    %p152 = scmp.eq.s32.totalorder %s22, 0
    %p153 = por %p151, %p152
    %p154 = scmp.ne.s32.totalorder %s142, %s143
    %p155 = scmp.eq.s32.totalorder %s23, 1
    %p156 = por %p154, %p155
    %p158 = scmp.ne.s32.totalorder %s143, %s157
    %p159 = scmp.eq.s32.totalorder %s23, 0
    %p160 = por %p158, %p159
    %s162 = sadd.s32 %s161, 1
    %p165 = scmp.eq.s32.totalorder %s17, 1
    %p166 = scmp.ne.s32.totalorder %s161, %s163
    %p167 = scmp.eq.s32.totalorder %s17, 0
    %p168 = por %p166, %p167
    %p169 = scmp.ne.s32.totalorder %s161, %s163
    %p170 = scmp.eq.s32.totalorder %s22, 1
    %p171 = por %p169, %p170
    %p172 = scmp.ne.s32.totalorder %s163, %s164
    %p173 = scmp.eq.s32.totalorder %s22, 0
    %p174 = por %p172, %p173
    %p175 = scmp.ne.s32.totalorder %s163, %s164
    %p176 = scmp.eq.s32.totalorder %s23, 1
    %p177 = por %p175, %p176
    %p179 = scmp.ne.s32.totalorder %s164, %s178
    %p180 = scmp.eq.s32.totalorder %s23, 0
    %p181 = por %p179, %p180
    %s183 = sadd.s32 %s182, 1
    %p186 = scmp.eq.s32.totalorder %s17, 1
    %p187 = scmp.ne.s32.totalorder %s182, %s184
    %p188 = scmp.eq.s32.totalorder %s17, 0
    %p189 = por %p187, %p188
    %p190 = scmp.ne.s32.totalorder %s182, %s184
    %p191 = scmp.eq.s32.totalorder %s22, 1
    %p192 = por %p190, %p191
    %p193 = scmp.ne.s32.totalorder %s184, %s185
    %p194 = scmp.eq.s32.totalorder %s22, 0
    %p195 = por %p193, %p194
    %p196 = scmp.ne.s32.totalorder %s184, %s185
    %p197 = scmp.eq.s32.totalorder %s23, 1
    %p198 = por %p196, %p197
    %p200 = scmp.ne.s32.totalorder %s185, %s199
    %p201 = scmp.eq.s32.totalorder %s23, 0
    %p202 = por %p200, %p201
    %s204 = sadd.s32 %s203, 1
    %p207 = scmp.eq.s32.totalorder %s17, 1
    %p208 = scmp.ne.s32.totalorder %s203, %s205
    %p209 = scmp.eq.s32.totalorder %s17, 0
    %p210 = por %p208, %p209
    %p211 = scmp.ne.s32.totalorder %s203, %s205
    %p212 = scmp.eq.s32.totalorder %s22, 1
    %p213 = por %p211, %p212
    %p214 = scmp.ne.s32.totalorder %s205, %s206
    %p215 = scmp.eq.s32.totalorder %s22, 0
    %p216 = por %p214, %p215
    %p217 = scmp.ne.s32.totalorder %s205, %s206
    %p218 = scmp.eq.s32.totalorder %s23, 1
    %p219 = por %p217, %p218
    %p221 = scmp.ne.s32.totalorder %s206, %s220
    %p222 = scmp.eq.s32.totalorder %s23, 0
    %p223 = por %p221, %p222
    %s225 = sadd.s32 %s224, 1
    %p228 = scmp.eq.s32.totalorder %s17, 1
    %p229 = scmp.ne.s32.totalorder %s224, %s226
    %p230 = scmp.eq.s32.totalorder %s17, 0
    %p231 = por %p229, %p230
    %p232 = scmp.ne.s32.totalorder %s224, %s226
    %p233 = scmp.eq.s32.totalorder %s22, 1
    %p234 = por %p232, %p233
    %p235 = scmp.ne.s32.totalorder %s226, %s227
    %p236 = scmp.eq.s32.totalorder %s22, 0
    %p237 = por %p235, %p236
    %p238 = scmp.ne.s32.totalorder %s226, %s227
    %p239 = scmp.eq.s32.totalorder %s23, 1
    %p240 = por %p238, %p239
    %p242 = scmp.ne.s32.totalorder %s227, %s241
    %p243 = scmp.eq.s32.totalorder %s23, 0
    %p244 = por %p242, %p243
    %s246 = sadd.s32 %s245, 1
    %p249 = scmp.eq.s32.totalorder %s17, 1
    %p250 = scmp.ne.s32.totalorder %s245, %s247
    %p251 = scmp.eq.s32.totalorder %s17, 0
    %p252 = por %p250, %p251
    %p253 = scmp.ne.s32.totalorder %s245, %s247
    %p254 = scmp.eq.s32.totalorder %s22, 1
    %p255 = por %p253, %p254
    %p256 = scmp.ne.s32.totalorder %s247, %s248
    %p257 = scmp.eq.s32.totalorder %s22, 0
    %p258 = por %p256, %p257
    %p259 = scmp.ne.s32.totalorder %s247, %s248
    %p260 = scmp.eq.s32.totalorder %s23, 1
    %p261 = por %p259, %p260
    %p263 = scmp.ne.s32.totalorder %s248, %s262
    %p264 = scmp.eq.s32.totalorder %s23, 0
    %p265 = por %p263, %p264
    %s266 = ssub.s32 %s17, %s24
    %p267 = scmp.eq.s32.totalorder %s266, 0
    %s269 = sadd.s32 %s268, 1
    %s270 = scalar_select %p267, %s268, %s269
    %p273 = pneg %p267
    %p274 = scmp.eq.s32.totalorder %s17, 1
    %p275 = por %p273, %p274
    %p276 = scmp.ne.s32.totalorder %s268, %s271
    %p277 = scmp.eq.s32.totalorder %s17, 0
    %p278 = por %p276, %p277
    %p279 = scmp.ne.s32.totalorder %s268, %s271
    %p280 = scmp.eq.s32.totalorder %s22, 1
    %p281 = por %p279, %p280
    %p282 = scmp.ne.s32.totalorder %s271, %s272
    %p283 = scmp.eq.s32.totalorder %s22, 0
    %p284 = por %p282, %p283
    %p285 = scmp.ne.s32.totalorder %s271, %s272
    %p286 = scmp.eq.s32.totalorder %s23, 1
    %p287 = por %p285, %p286
    %p289 = scmp.ne.s32.totalorder %s272, %s288
    %p290 = scmp.eq.s32.totalorder %s23, 0
    %p291 = por %p289, %p290
    %p292 = scmp.le.s32.totalorder 1, %s17
    %p293 = scmp.lt.s32.totalorder %s17, 3
    %p294 = pnand %p292, %p293
    %p295 = pneg %p294
    // Predicated region
    $region9: #{fwd.1} parent=5 // pred_check
      _
    $region10: #{fwd.1} parent=5 // pred_check_branch
      %297 = sbr.rel (%p294) target = $region12
    $region11: #{fwd.1} parent=5 // pred_region
      %s298 = ssub.s32 %s17, 1
      // Predicated region
      $region13: #{fwd.1} parent=11 // pred_check
        %p299 = pneg %p90
      $region14: #{fwd.1} parent=11 // pred_check_branch
        %301 = sbr.rel (%p299) target = $region16
      $region15: #{fwd.1} parent=11 // pred_region
        _
      $region16: #{fwd.1} parent=11 // pred_fallthru
        _
      // Predicated region
      $region17: #{fwd.1} parent=11 // pred_check
        %p302 = pneg %p111
      $region18: #{fwd.1} parent=11 // pred_check_branch
        %304 = sbr.rel (%p302) target = $region20
      $region19: #{fwd.1} parent=11 // pred_region
        _
      $region20: #{fwd.1} parent=11 // pred_fallthru
        _
      // Predicated region
      $region21: #{fwd.1} parent=11 // pred_check
        %p305 = pneg %p132
      $region22: #{fwd.1} parent=11 // pred_check_branch
        %307 = sbr.rel (%p305) target = $region24
      $region23: #{fwd.1} parent=11 // pred_region
        _
      $region24: #{fwd.1} parent=11 // pred_fallthru
        _
      // Predicated region
      $region25: #{fwd.1} parent=11 // pred_check
        %p308 = pneg %p153
      $region26: #{fwd.1} parent=11 // pred_check_branch
        %310 = sbr.rel (%p308) target = $region28
      $region27: #{fwd.1} parent=11 // pred_region
        _
      $region28: #{fwd.1} parent=11 // pred_fallthru
        _
      // Predicated region
      $region29: #{fwd.1} parent=11 // pred_check
        %p311 = pneg %p174
      $region30: #{fwd.1} parent=11 // pred_check_branch
        %313 = sbr.rel (%p311) target = $region32
      $region31: #{fwd.1} parent=11 // pred_region
        _
      $region32: #{fwd.1} parent=11 // pred_fallthru
        _
      // Predicated region
      $region33: #{fwd.1} parent=11 // pred_check
        %p314 = pneg %p195
      $region34: #{fwd.1} parent=11 // pred_check_branch
        %316 = sbr.rel (%p314) target = $region36
      $region35: #{fwd.1} parent=11 // pred_region
        _
      $region36: #{fwd.1} parent=11 // pred_fallthru
        _
      // Predicated region
      $region37: #{fwd.1} parent=11 // pred_check
        %p317 = pneg %p216
      $region38: #{fwd.1} parent=11 // pred_check_branch
        %319 = sbr.rel (%p317) target = $region40
      $region39: #{fwd.1} parent=11 // pred_region
        _
      $region40: #{fwd.1} parent=11 // pred_fallthru
        _
      // Predicated region
      $region41: #{fwd.1} parent=11 // pred_check
        %p320 = pneg %p237
      $region42: #{fwd.1} parent=11 // pred_check_branch
        %322 = sbr.rel (%p320) target = $region44
      $region43: #{fwd.1} parent=11 // pred_region
        _
      $region44: #{fwd.1} parent=11 // pred_fallthru
        _
      // Predicated region
      $region45: #{fwd.1} parent=11 // pred_check
        %p323 = pneg %p258
      $region46: #{fwd.1} parent=11 // pred_check_branch
        %325 = sbr.rel (%p323) target = $region48
      $region47: #{fwd.1} parent=11 // pred_region
        _
      $region48: #{fwd.1} parent=11 // pred_fallthru
        _
    $region12: #{fwd.1} parent=5 // pred_fallthru
      _
    %p326 = scmp.lt.s32.totalorder %s17, 2
    // Predicated region
    $region49: #{fwd.1} parent=5 // pred_check
      %p327 = pneg %p326
    $region50: #{fwd.1} parent=5 // pred_check_branch
      %329 = sbr.rel (%p327) target = $region52
    $region51: #{fwd.1} parent=5 // pred_region
      // Predicated region
      $region53: #{fwd.1} parent=51 // pred_check
        %p330 = pneg %p37
      $region54: #{fwd.1} parent=51 // pred_check_branch
        %332 = sbr.rel (%p330) target = $region56
      $region55: #{fwd.1} parent=51 // pred_region
        %s333 = smul.u32 16, %s17
        %p334 = scmp.lt.s32.totalorder %s333, 31
        %s335 = scalar_select %p334, %s333, 31
        %s336 = smul.addr %s335, 4
        %s337 = scalar_lea.vmem %s0, %s336
        %s338 = smul.u32 16, %s17
      $region56: #{fwd.1} parent=51 // pred_fallthru
        _
      // Predicated region
      $region57: #{fwd.1} parent=51 // pred_check
        %p339 = pneg %p63
      $region58: #{fwd.1} parent=51 // pred_check_branch
        %341 = sbr.rel (%p339) target = $region60
      $region59: #{fwd.1} parent=51 // pred_region
        %s342 = smul.u32 16, %s17
        %p343 = scmp.lt.s32.totalorder %s342, 31
        %s344 = scalar_select %p343, %s342, 31
        %s345 = smul.addr %s344, 8
        %s346 = scalar_lea.vmem %s1, %s345
        %s347 = smul.u32 16, %s17
      $region60: #{fwd.1} parent=51 // pred_fallthru
        _
    $region52: #{fwd.1} parent=5 // pred_fallthru
      _
    %p348 = scmp.le.s32.totalorder 1, %s17
    %p349 = scmp.lt.s32.totalorder %s17, 3
    %p350 = pnand %p348, %p349
    %p351 = pneg %p350
    // Predicated region
    $region61: #{fwd.1} parent=5 // pred_check
      _
    $region62: #{fwd.1} parent=5 // pred_check_branch
      %353 = sbr.rel (%p350) target = $region64
    $region63: #{fwd.1} parent=5 // pred_region
      %s354 = ssub.s32 %s17, 1
      %s355 = smul.u32 16, %s22
      %p356 = scmp.lt.s32.totalorder %s355, 31
      %s357 = scalar_select %p356, %s355, 31
      %s358 = smul.addr %s357, 4
      %s359 = scalar_lea.vmem %s0, %s358
      %p360 = pneg %p43
      %p361 = pneg %p40
      %s362 = smul.u32 16, %s22
      %p363 = scmp.lt.s32.totalorder %s362, 31
      %s364 = scalar_select %p363, %s362, 31
      %s365 = smul.addr %s364, 8
      %s366 = scalar_lea.vmem %s1, %s365
      %p367 = pneg %p69
      %p368 = pneg %p66
      %p369 = pneg %p90
      %p370 = pneg %p87
      %p371 = pneg %p111
      %p372 = pneg %p108
      %p373 = pneg %p132
      %p374 = pneg %p129
      %p375 = pneg %p153
      %p376 = pneg %p150
      %p377 = pneg %p174
      %p378 = pneg %p171
      %p379 = pneg %p195
      %p380 = pneg %p192
      %p381 = pneg %p216
      %p382 = pneg %p213
      %p383 = pneg %p237
      %p384 = pneg %p234
      %p385 = pneg %p258
      %p386 = pneg %p255
      %p387 = pneg %p284
      %p388 = pneg %p281
      %s389 = smul.u32 16, %s22
      %p390 = scmp.lt.s32.totalorder %s389, 31
      %s391 = scalar_select %p390, %s389, 31
      %s392 = smul.addr %s391, 8
      %s393 = scalar_lea.vmem %s11, %s392
      %s394 = smul.u32 16, %s22
      %p395 = scmp.lt.s32.totalorder %s394, 31
      %s396 = scalar_select %p395, %s394, 31
      %s397 = smul.addr %s396, 4
      %s398 = scalar_lea.vmem %s0, %s397
      %s399 = smul.u32 16, %s22
      %s400 = smul.u32 16, %s22
      %p401 = scmp.lt.s32.totalorder %s400, 31
      %s402 = scalar_select %p401, %s400, 31
      %s403 = smul.addr %s402, 8
      %s404 = scalar_lea.vmem %s1, %s403
      %s405 = smul.u32 16, %s22
      %s406 = smul.u32 16, %s22
      %p407 = scmp.lt.s32.totalorder %s406, 31
      %s408 = scalar_select %p407, %s406, 31
      %s409 = smul.addr %s408, 8
      %s410 = scalar_lea.vmem %s11, %s409
      %s411 = smul.u32 16, %s22
      %v413 = vld [vmem:[%s398] sm:$0xf]
      %v414 = vld [vmem:[%s398 + $0x4] sm:$0xf]
      %v415 = vld [vmem:[%s398 + $0x8] sm:$0xf]
      %v416 = vld [vmem:[%s398 + $0xc] sm:$0xf]
      %v417 = vld [vmem:[%s398 + $0x10] sm:$0xf]
      %v418 = vld [vmem:[%s398 + $0x14] sm:$0xf]
      %v419 = vld [vmem:[%s398 + $0x18] sm:$0xf]
      %v420 = vld [vmem:[%s398 + $0x1c] sm:$0xf]
      %v421 = vld [vmem:[%s398 + $0x20] sm:$0xf]
      %v422 = vld [vmem:[%s398 + $0x24] sm:$0xf]
      %v423 = vld [vmem:[%s398 + $0x28] sm:$0xf]
      %v424 = vld [vmem:[%s398 + $0x2c] sm:$0xf]
      %v425 = vld [vmem:[%s398 + $0x30] sm:$0xf]
      %v426 = vld [vmem:[%s398 + $0x34] sm:$0xf]
      %v427 = vld [vmem:[%s398 + $0x38] sm:$0xf]
      %v428 = vld [vmem:[%s398 + $0x3c] sm:$0xf]
      %v429 = vld [vmem:[%s3] sm:$0xf]
      %v430 = vld [vmem:[%s3 + $0x4] sm:$0xf]
      %v431 = vld [vmem:[%s3 + $0x8] sm:$0xf]
      %v432 = vld [vmem:[%s3 + $0xc] sm:$0xf]
      %v433 = vld [vmem:[%s3 + $0x10] sm:$0xf]
      %v434 = vld [vmem:[%s3 + $0x14] sm:$0xf]
      %v435 = vld [vmem:[%s3 + $0x18] sm:$0xf]
      %v436 = vld [vmem:[%s3 + $0x1c] sm:$0xf]
      %v437 = vld [vmem:[%s3 + $0x20] sm:$0xf]
      %v438 = vld [vmem:[%s3 + $0x24] sm:$0xf]
      %v439 = vld [vmem:[%s3 + $0x28] sm:$0xf]
      %v440 = vld [vmem:[%s3 + $0x2c] sm:$0xf]
      %v441 = vld [vmem:[%s3 + $0x30] sm:$0xf]
      %v442 = vld [vmem:[%s3 + $0x34] sm:$0xf]
      %v443 = vld [vmem:[%s3 + $0x38] sm:$0xf]
      %v444 = vld [vmem:[%s3 + $0x3c] sm:$0xf]
      %v445 = vld [vmem:[%s4] sm:$0x1]
      %v447 = vlaneseq
      %v448 = vshrl.u32 %v447, 7
      %v449 = vsub.s32 0, %v448
      %v450 = vrot.slane %v445, %v449
      %v468 = vunpack.c.l.b16 %v413
      %v469 = vunpack.c.l.b16 %v414
      %v470 = vunpack.c.l.b16 %v415
      %v471 = vunpack.c.l.b16 %v416
      %v472 = vunpack.c.l.b16 %v417
      %v473 = vunpack.c.l.b16 %v418
      %v474 = vunpack.c.l.b16 %v419
      %v475 = vunpack.c.l.b16 %v420
      %v476 = vunpack.c.l.b16 %v421
      %v477 = vunpack.c.l.b16 %v422
      %v478 = vunpack.c.l.b16 %v423
      %v479 = vunpack.c.l.b16 %v424
      %v480 = vunpack.c.l.b16 %v425
      %v481 = vunpack.c.l.b16 %v426
      %v482 = vunpack.c.l.b16 %v427
      %v483 = vunpack.c.l.b16 %v428
      %v484 = vpack.c.b16 %v469, %v468
      %v485 = vpack.c.b16 %v471, %v470
      %v486 = vpack.c.b16 %v473, %v472
      %v487 = vpack.c.b16 %v475, %v474
      %v488 = vpack.c.b16 %v477, %v476
      %v489 = vpack.c.b16 %v479, %v478
      %v490 = vpack.c.b16 %v481, %v480
      %v491 = vpack.c.b16 %v483, %v482
      %v516 = vunpack.c.l.b16 %v429
      %v517 = vunpack.c.l.b16 %v430
      %v518 = vunpack.c.l.b16 %v431
      %v519 = vunpack.c.l.b16 %v432
      %v520 = vunpack.c.l.b16 %v433
      %v521 = vunpack.c.l.b16 %v434
      %v522 = vunpack.c.l.b16 %v435
      %v523 = vunpack.c.l.b16 %v436
      %v524 = vunpack.c.l.b16 %v437
      %v525 = vunpack.c.l.b16 %v438
      %v526 = vunpack.c.l.b16 %v439
      %v527 = vunpack.c.l.b16 %v440
      %v528 = vunpack.c.l.b16 %v441
      %v529 = vunpack.c.l.b16 %v442
      %v530 = vunpack.c.l.b16 %v443
      %v531 = vunpack.c.l.b16 %v444
      %v532 = vpack.c.b16 %v517, %v516
      %v533 = vpack.c.b16 %v519, %v518
      %v534 = vpack.c.b16 %v521, %v520
      %v535 = vpack.c.b16 %v523, %v522
      %v536 = vpack.c.b16 %v525, %v524
      %v537 = vpack.c.b16 %v527, %v526
      %v538 = vpack.c.b16 %v529, %v528
      %v539 = vpack.c.b16 %v531, %v530
      %548 = vmatprep.subr.bf16.mxu0 0
      %549 = vmatpush1.bf16.msra.mxu0 %v532
      %550 = vmatprep.subr.bf16.mxu0 0
      %551 = vmatpush1.bf16.msra.mxu0 %v533
      %552 = vmatprep.subr.bf16.mxu0 0
      %553 = vmatpush1.bf16.msra.mxu0 %v534
      %554 = vmatprep.subr.bf16.mxu0 0
      %555 = vmatpush1.bf16.msra.mxu0 %v535
      %556 = vmatprep.subr.bf16.mxu0 0
      %557 = vmatpush1.bf16.msra.mxu0 %v536
      %558 = vmatprep.subr.bf16.mxu0 0
      %559 = vmatpush1.bf16.msra.mxu0 %v537
      %560 = vmatprep.subr.bf16.mxu0 0
      %561 = vmatpush1.bf16.msra.mxu0 %v538
      %562 = vmatprep.subr.bf16.mxu0 0
      %563 = vmatpush1.bf16.msra.mxu0 %v539
      %564 = vmatprep.subr.bf16.mxu0 0
      %565 = vmatpush1.bf16.msra.mxu0 0
      %566 = vmatprep.subr.bf16.mxu0 0
      %567 = vmatpush1.bf16.msra.mxu0 0
      %568 = vmatprep.subr.bf16.mxu0 0
      %569 = vmatpush1.bf16.msra.mxu0 0
      %570 = vmatprep.subr.bf16.mxu0 0
      %571 = vmatpush1.bf16.msra.mxu0 0
      %572 = vmatprep.subr.bf16.mxu0 0
      %573 = vmatpush1.bf16.msra.mxu0 0
      %574 = vmatprep.subr.bf16.mxu0 0
      %575 = vmatpush1.bf16.msra.mxu0 0
      %576 = vmatprep.subr.bf16.mxu0 0
      %577 = vmatpush1.bf16.msra.mxu0 0
      %578 = vmatprep.subr.bf16.mxu0 0
      %579 = vmatpush1.bf16.msra.mxu0 0
      %580 = vmatprep.mubr.bf16.mxu0 0
      %581 = vmatmul.mubr.bf16.gmra.mrb[0].mxu0 %v484
      %v582 = vpop.f32.mrb[0].mxu0
      %v583 = vadd.f32 %v450, %v582
      %v584 = vpop.f32.mrb[0].mxu0
      %v585 = vpop.f32.mrb[0].mxu0
      %v586 = vadd.f32 %v450, %v585
      %v587 = vpop.f32.mrb[0].mxu0
      %588 = vmatprep.mubr.bf16.mxu0 0
      %589 = vmatmul.mubr.bf16.gmra.mrb[0].mxu0 %v485
      %v590 = vpop.f32.mrb[0].mxu0
      %v591 = vadd.f32 %v450, %v590
      %v592 = vpop.f32.mrb[0].mxu0
      %v593 = vpop.f32.mrb[0].mxu0
      %v594 = vadd.f32 %v450, %v593
      %v595 = vpop.f32.mrb[0].mxu0
      %596 = vmatprep.mubr.bf16.mxu0 0
      %597 = vmatmul.mubr.bf16.gmra.mrb[0].mxu0 %v486
      %v598 = vpop.f32.mrb[0].mxu0
      %v599 = vadd.f32 %v450, %v598
      %v600 = vpop.f32.mrb[0].mxu0
      %v601 = vpop.f32.mrb[0].mxu0
      %v602 = vadd.f32 %v450, %v601
      %v603 = vpop.f32.mrb[0].mxu0
      %604 = vmatprep.mubr.bf16.mxu0 0
      %605 = vmatmul.mubr.bf16.gmra.mrb[0].mxu0 %v487
      %v606 = vpop.f32.mrb[0].mxu0
      %v607 = vadd.f32 %v450, %v606
      %v608 = vpop.f32.mrb[0].mxu0
      %v609 = vpop.f32.mrb[0].mxu0
      %v610 = vadd.f32 %v450, %v609
      %v611 = vpop.f32.mrb[0].mxu0
      %612 = vmatprep.mubr.bf16.mxu0 0
      %613 = vmatmul.mubr.bf16.gmra.mrb[0].mxu0 %v488
      %v614 = vpop.f32.mrb[0].mxu0
      %v615 = vadd.f32 %v450, %v614
      %v616 = vpop.f32.mrb[0].mxu0
      %v617 = vpop.f32.mrb[0].mxu0
      %v618 = vadd.f32 %v450, %v617
      %v619 = vpop.f32.mrb[0].mxu0
      %620 = vmatprep.mubr.bf16.mxu0 0
      %621 = vmatmul.mubr.bf16.gmra.mrb[0].mxu0 %v489
      %v622 = vpop.f32.mrb[0].mxu0
      %v623 = vadd.f32 %v450, %v622
      %v624 = vpop.f32.mrb[0].mxu0
      %v625 = vpop.f32.mrb[0].mxu0
      %v626 = vadd.f32 %v450, %v625
      %v627 = vpop.f32.mrb[0].mxu0
      %628 = vmatprep.mubr.bf16.mxu0 0
      %629 = vmatmul.mubr.bf16.gmra.mrb[0].mxu0 %v490
      %v630 = vpop.f32.mrb[0].mxu0
      %v631 = vadd.f32 %v450, %v630
      %v632 = vpop.f32.mrb[0].mxu0
      %v633 = vpop.f32.mrb[0].mxu0
      %v634 = vadd.f32 %v450, %v633
      %v635 = vpop.f32.mrb[0].mxu0
      %636 = vmatprep.mubr.bf16.mxu0 0
      %637 = vmatmul.mubr.bf16.gmra.mrb[0].mxu0 %v491
      %v638 = vpop.f32.mrb[0].mxu0
      %v639 = vadd.f32 %v450, %v638
      %v640 = vpop.f32.mrb[0].mxu0
      %v641 = vpop.f32.mrb[0].mxu0
      %v642 = vadd.f32 %v450, %v641
      %v643 = vpop.f32.mrb[0].mxu0
      %644 = vdwg.mxu0
      %v645 = vmax.f32 %v583, 0.0
      %v646 = vmax.f32 %v586, 0.0
      %v647 = vmax.f32 %v591, 0.0
      %v648 = vmax.f32 %v594, 0.0
      %v649 = vmax.f32 %v599, 0.0
      %v650 = vmax.f32 %v602, 0.0
      %v651 = vmax.f32 %v607, 0.0
      %v652 = vmax.f32 %v610, 0.0
      %v653 = vmax.f32 %v615, 0.0
      %v654 = vmax.f32 %v618, 0.0
      %v655 = vmax.f32 %v623, 0.0
      %v656 = vmax.f32 %v626, 0.0
      %v657 = vmax.f32 %v631, 0.0
      %v658 = vmax.f32 %v634, 0.0
      %v659 = vmax.f32 %v639, 0.0
      %v660 = vmax.f32 %v642, 0.0
      %v661 = vpack.c.bf16 %v646, %v645
      %v662 = vpack.c.bf16 %v648, %v647
      %v663 = vpack.c.bf16 %v650, %v649
      %v664 = vpack.c.bf16 %v652, %v651
      %v665 = vpack.c.bf16 %v654, %v653
      %v666 = vpack.c.bf16 %v656, %v655
      %v667 = vpack.c.bf16 %v658, %v657
      %v668 = vpack.c.bf16 %v660, %v659
      %v669 = vld [vmem:[%s5] sm:$0xf]
      %v670 = vld [vmem:[%s5 + $0x4] sm:$0xf]
      %v671 = vld [vmem:[%s5 + $0x8] sm:$0xf]
      %v672 = vld [vmem:[%s5 + $0xc] sm:$0xf]
      %v673 = vld [vmem:[%s5 + $0x10] sm:$0xf]
      %v674 = vld [vmem:[%s5 + $0x14] sm:$0xf]
      %v675 = vld [vmem:[%s5 + $0x18] sm:$0xf]
      %v676 = vld [vmem:[%s5 + $0x1c] sm:$0xf]
      %v677 = vld [vmem:[%s5 + $0x20] sm:$0xf]
      %v678 = vld [vmem:[%s5 + $0x24] sm:$0xf]
      %v679 = vld [vmem:[%s5 + $0x28] sm:$0xf]
      %v680 = vld [vmem:[%s5 + $0x2c] sm:$0xf]
      %v681 = vld [vmem:[%s5 + $0x30] sm:$0xf]
      %v682 = vld [vmem:[%s5 + $0x34] sm:$0xf]
      %v683 = vld [vmem:[%s5 + $0x38] sm:$0xf]
      %v684 = vld [vmem:[%s5 + $0x3c] sm:$0xf]
      %v685 = vld [vmem:[%s6] sm:$0x1]
      %v687 = vlaneseq
      %v688 = vshrl.u32 %v687, 7
      %v689 = vsub.s32 0, %v688
      %v690 = vrot.slane %v685, %v689
      %v708 = vunpack.c.l.b16 %v669
      %v709 = vunpack.c.l.b16 %v670
      %v710 = vunpack.c.l.b16 %v671
      %v711 = vunpack.c.l.b16 %v672
      %v712 = vunpack.c.l.b16 %v673
      %v713 = vunpack.c.l.b16 %v674
      %v714 = vunpack.c.l.b16 %v675
      %v715 = vunpack.c.l.b16 %v676
      %v716 = vunpack.c.l.b16 %v677
      %v717 = vunpack.c.l.b16 %v678
      %v718 = vunpack.c.l.b16 %v679
      %v719 = vunpack.c.l.b16 %v680
      %v720 = vunpack.c.l.b16 %v681
      %v721 = vunpack.c.l.b16 %v682
      %v722 = vunpack.c.l.b16 %v683
      %v723 = vunpack.c.l.b16 %v684
      %v724 = vpack.c.b16 %v709, %v708
      %v725 = vpack.c.b16 %v711, %v710
      %v726 = vpack.c.b16 %v713, %v712
      %v727 = vpack.c.b16 %v715, %v714
      %v728 = vpack.c.b16 %v717, %v716
      %v729 = vpack.c.b16 %v719, %v718
      %v730 = vpack.c.b16 %v721, %v720
      %v731 = vpack.c.b16 %v723, %v722
      %740 = vmatprep.subr.bf16.mxu0 0
      %741 = vmatpush1.bf16.msra.mxu0 %v724
      %742 = vmatprep.subr.bf16.mxu0 0
      %743 = vmatpush1.bf16.msra.mxu0 %v725
      %744 = vmatprep.subr.bf16.mxu0 0
      %745 = vmatpush1.bf16.msra.mxu0 %v726
      %746 = vmatprep.subr.bf16.mxu0 0
      %747 = vmatpush1.bf16.msra.mxu0 %v727
      %748 = vmatprep.subr.bf16.mxu0 0
      %749 = vmatpush1.bf16.msra.mxu0 %v728
      %750 = vmatprep.subr.bf16.mxu0 0
      %751 = vmatpush1.bf16.msra.mxu0 %v729
      %752 = vmatprep.subr.bf16.mxu0 0
      %753 = vmatpush1.bf16.msra.mxu0 %v730
      %754 = vmatprep.subr.bf16.mxu0 0
      %755 = vmatpush1.bf16.msra.mxu0 %v731
      %756 = vmatprep.subr.bf16.mxu0 0
      %757 = vmatpush1.bf16.msra.mxu0 0
      %758 = vmatprep.subr.bf16.mxu0 0
      %759 = vmatpush1.bf16.msra.mxu0 0
      %760 = vmatprep.subr.bf16.mxu0 0
      %761 = vmatpush1.bf16.msra.mxu0 0
      %762 = vmatprep.subr.bf16.mxu0 0
      %763 = vmatpush1.bf16.msra.mxu0 0
      %764 = vmatprep.subr.bf16.mxu0 0
      %765 = vmatpush1.bf16.msra.mxu0 0
      %766 = vmatprep.subr.bf16.mxu0 0
      %767 = vmatpush1.bf16.msra.mxu0 0
      %768 = vmatprep.subr.bf16.mxu0 0
      %769 = vmatpush1.bf16.msra.mxu0 0
      %770 = vmatprep.subr.bf16.mxu0 0
      %771 = vmatpush1.bf16.msra.mxu0 0
      %772 = vmatprep.mubr.bf16.mxu0 0
      %773 = vmatmul.mubr.bf16.gmra.mrb[0].mxu0 %v661
      %v774 = vpop.f32.mrb[0].mxu0
      %v775 = vadd.f32 %v690, %v774
      %v776 = vpop.f32.mrb[0].mxu0
      %v777 = vpop.f32.mrb[0].mxu0
      %v778 = vadd.f32 %v690, %v777
      %v779 = vpop.f32.mrb[0].mxu0
      %780 = vmatprep.mubr.bf16.mxu0 0
      %781 = vmatmul.mubr.bf16.gmra.mrb[0].mxu0 %v662
      %v782 = vpop.f32.mrb[0].mxu0
      %v783 = vadd.f32 %v690, %v782
      %v784 = vpop.f32.mrb[0].mxu0
      %v785 = vpop.f32.mrb[0].mxu0
      %v786 = vadd.f32 %v690, %v785
      %v787 = vpop.f32.mrb[0].mxu0
      %788 = vmatprep.mubr.bf16.mxu0 0
      %789 = vmatmul.mubr.bf16.gmra.mrb[0].mxu0 %v663
      %v790 = vpop.f32.mrb[0].mxu0
      %v791 = vadd.f32 %v690, %v790
      %v792 = vpop.f32.mrb[0].mxu0
      %v793 = vpop.f32.mrb[0].mxu0
      %v794 = vadd.f32 %v690, %v793
      %v795 = vpop.f32.mrb[0].mxu0
      %796 = vmatprep.mubr.bf16.mxu0 0
      %797 = vmatmul.mubr.bf16.gmra.mrb[0].mxu0 %v664
      %v798 = vpop.f32.mrb[0].mxu0
      %v799 = vadd.f32 %v690, %v798
      %v800 = vpop.f32.mrb[0].mxu0
      %v801 = vpop.f32.mrb[0].mxu0
      %v802 = vadd.f32 %v690, %v801
      %v803 = vpop.f32.mrb[0].mxu0
      %804 = vmatprep.mubr.bf16.mxu0 0
      %805 = vmatmul.mubr.bf16.gmra.mrb[0].mxu0 %v665
      %v806 = vpop.f32.mrb[0].mxu0
      %v807 = vadd.f32 %v690, %v806
      %v808 = vpop.f32.mrb[0].mxu0
      %v809 = vpop.f32.mrb[0].mxu0
      %v810 = vadd.f32 %v690, %v809
      %v811 = vpop.f32.mrb[0].mxu0
      %812 = vmatprep.mubr.bf16.mxu0 0
      %813 = vmatmul.mubr.bf16.gmra.mrb[0].mxu0 %v666
      %v814 = vpop.f32.mrb[0].mxu0
      %v815 = vadd.f32 %v690, %v814
      %v816 = vpop.f32.mrb[0].mxu0
      %v817 = vpop.f32.mrb[0].mxu0
      %v818 = vadd.f32 %v690, %v817
      %v819 = vpop.f32.mrb[0].mxu0
      %820 = vmatprep.mubr.bf16.mxu0 0
      %821 = vmatmul.mubr.bf16.gmra.mrb[0].mxu0 %v667
      %v822 = vpop.f32.mrb[0].mxu0
      %v823 = vadd.f32 %v690, %v822
      %v824 = vpop.f32.mrb[0].mxu0
      %v825 = vpop.f32.mrb[0].mxu0
      %v826 = vadd.f32 %v690, %v825
      %v827 = vpop.f32.mrb[0].mxu0
      %828 = vmatprep.mubr.bf16.mxu0 0
      %829 = vmatmul.mubr.bf16.gmra.mrb[0].mxu0 %v668
      %v830 = vpop.f32.mrb[0].mxu0
      %v831 = vadd.f32 %v690, %v830
      %v832 = vpop.f32.mrb[0].mxu0
      %v833 = vpop.f32.mrb[0].mxu0
      %v834 = vadd.f32 %v690, %v833
      %v835 = vpop.f32.mrb[0].mxu0
      %836 = vdwg.mxu0
      %v837 = vmax.f32 %v775, 0.0
      %v838 = vmax.f32 %v778, 0.0
      %v839 = vmax.f32 %v783, 0.0
      %v840 = vmax.f32 %v786, 0.0
      %v841 = vmax.f32 %v791, 0.0
      %v842 = vmax.f32 %v794, 0.0
      %v843 = vmax.f32 %v799, 0.0
      %v844 = vmax.f32 %v802, 0.0
      %v845 = vmax.f32 %v807, 0.0
      %v846 = vmax.f32 %v810, 0.0
      %v847 = vmax.f32 %v815, 0.0
      %v848 = vmax.f32 %v818, 0.0
      %v849 = vmax.f32 %v823, 0.0
      %v850 = vmax.f32 %v826, 0.0
      %v851 = vmax.f32 %v831, 0.0
      %v852 = vmax.f32 %v834, 0.0
      %v853 = vpack.c.bf16 %v838, %v837
      %v854 = vpack.c.bf16 %v840, %v839
      %v855 = vpack.c.bf16 %v842, %v841
      %v856 = vpack.c.bf16 %v844, %v843
      %v857 = vpack.c.bf16 %v846, %v845
      %v858 = vpack.c.bf16 %v848, %v847
      %v859 = vpack.c.bf16 %v850, %v849
      %v860 = vpack.c.bf16 %v852, %v851
      %v861 = vld [vmem:[%s404] sm:$0xff]
      %v862 = vld [vmem:[%s404 + $0x8] sm:$0xff]
      %v863 = vld [vmem:[%s404 + $0x10] sm:$0xff]
      %v864 = vld [vmem:[%s404 + $0x18] sm:$0xff]
      %v865 = vld [vmem:[%s404 + $0x20] sm:$0xff]
      %v866 = vld [vmem:[%s404 + $0x28] sm:$0xff]
      %v867 = vld [vmem:[%s404 + $0x30] sm:$0xff]
      %v868 = vld [vmem:[%s404 + $0x38] sm:$0xff]
      %v869 = vld [vmem:[%s404 + $0x40] sm:$0xff]
      %v870 = vld [vmem:[%s404 + $0x48] sm:$0xff]
      %v871 = vld [vmem:[%s404 + $0x50] sm:$0xff]
      %v872 = vld [vmem:[%s404 + $0x58] sm:$0xff]
      %v873 = vld [vmem:[%s404 + $0x60] sm:$0xff]
      %v874 = vld [vmem:[%s404 + $0x68] sm:$0xff]
      %v875 = vld [vmem:[%s404 + $0x70] sm:$0xff]
      %v876 = vld [vmem:[%s404 + $0x78] sm:$0xff]
      %v877 = vlaneseq
      %v878 = vand.u32 %v877, 127
      %879 = vset.pattern.permute.xlu0 0
      %880 = vperm.xlu0 %879, %v861
      %v881 = vpop.permute.xlu0 %880
      %882 = vset.pattern.permute.xlu0 0
      %883 = vperm.xlu0 %882, %v862
      %v884 = vpop.permute.xlu0 %883
      %885 = vset.pattern.permute.xlu0 0
      %886 = vperm.xlu0 %885, %v863
      %v887 = vpop.permute.xlu0 %886
      %888 = vset.pattern.permute.xlu0 0
      %889 = vperm.xlu0 %888, %v864
      %v890 = vpop.permute.xlu0 %889
      %891 = vset.pattern.permute.xlu0 0
      %892 = vperm.xlu0 %891, %v865
      %v893 = vpop.permute.xlu0 %892
      %894 = vset.pattern.permute.xlu0 0
      %895 = vperm.xlu0 %894, %v866
      %v896 = vpop.permute.xlu0 %895
      %897 = vset.pattern.permute.xlu0 0
      %898 = vperm.xlu0 %897, %v867
      %v899 = vpop.permute.xlu0 %898
      %900 = vset.pattern.permute.xlu0 0
      %901 = vperm.xlu0 %900, %v868
      %v902 = vpop.permute.xlu0 %901
      %903 = vset.pattern.permute.xlu0 0
      %904 = vperm.xlu0 %903, %v869
      %v905 = vpop.permute.xlu0 %904
      %906 = vset.pattern.permute.xlu0 0
      %907 = vperm.xlu0 %906, %v870
      %v908 = vpop.permute.xlu0 %907
      %909 = vset.pattern.permute.xlu0 0
      %910 = vperm.xlu0 %909, %v871
      %v911 = vpop.permute.xlu0 %910
      %912 = vset.pattern.permute.xlu0 0
      %913 = vperm.xlu0 %912, %v872
      %v914 = vpop.permute.xlu0 %913
      %915 = vset.pattern.permute.xlu0 0
      %916 = vperm.xlu0 %915, %v873
      %v917 = vpop.permute.xlu0 %916
      %918 = vset.pattern.permute.xlu0 0
      %919 = vperm.xlu0 %918, %v874
      %v920 = vpop.permute.xlu0 %919
      %921 = vset.pattern.permute.xlu0 0
      %922 = vperm.xlu0 %921, %v875
      %v923 = vpop.permute.xlu0 %922
      %924 = vset.pattern.permute.xlu0 0
      %925 = vperm.xlu0 %924, %v876
      %v926 = vpop.permute.xlu0 %925
      %vm927 = vcmp.eq.s32.totalorder %v881, %v878
      %vm928 = vcmp.eq.s32.totalorder %v884, %v878
      %vm929 = vcmp.eq.s32.totalorder %v887, %v878
      %vm930 = vcmp.eq.s32.totalorder %v890, %v878
      %vm931 = vcmp.eq.s32.totalorder %v893, %v878
      %vm932 = vcmp.eq.s32.totalorder %v896, %v878
      %vm933 = vcmp.eq.s32.totalorder %v899, %v878
      %vm934 = vcmp.eq.s32.totalorder %v902, %v878
      %vm935 = vcmp.eq.s32.totalorder %v905, %v878
      %vm936 = vcmp.eq.s32.totalorder %v908, %v878
      %vm937 = vcmp.eq.s32.totalorder %v911, %v878
      %vm938 = vcmp.eq.s32.totalorder %v914, %v878
      %vm939 = vcmp.eq.s32.totalorder %v917, %v878
      %vm940 = vcmp.eq.s32.totalorder %v920, %v878
      %vm941 = vcmp.eq.s32.totalorder %v923, %v878
      %vm942 = vcmp.eq.s32.totalorder %v926, %v878
      %v943 = vsel %vm927, 1, 0
      %v944 = vsel %vm928, 1, 0
      %v945 = vsel %vm929, 1, 0
      %v946 = vsel %vm930, 1, 0
      %v947 = vsel %vm931, 1, 0
      %v948 = vsel %vm932, 1, 0
      %v949 = vsel %vm933, 1, 0
      %v950 = vsel %vm934, 1, 0
      %v951 = vsel %vm935, 1, 0
      %v952 = vsel %vm936, 1, 0
      %v953 = vsel %vm937, 1, 0
      %v954 = vsel %vm938, 1, 0
      %v955 = vsel %vm939, 1, 0
      %v956 = vsel %vm940, 1, 0
      %v957 = vsel %vm941, 1, 0
      %v958 = vsel %vm942, 1, 0
      %v959 = vcvt.s32.f32 %v943
      %v960 = vcvt.s32.f32 %v944
      %v961 = vcvt.s32.f32 %v945
      %v962 = vcvt.s32.f32 %v946
      %v963 = vcvt.s32.f32 %v947
      %v964 = vcvt.s32.f32 %v948
      %v965 = vcvt.s32.f32 %v949
      %v966 = vcvt.s32.f32 %v950
      %v967 = vcvt.s32.f32 %v951
      %v968 = vcvt.s32.f32 %v952
      %v969 = vcvt.s32.f32 %v953
      %v970 = vcvt.s32.f32 %v954
      %v971 = vcvt.s32.f32 %v955
      %v972 = vcvt.s32.f32 %v956
      %v973 = vcvt.s32.f32 %v957
      %v974 = vcvt.s32.f32 %v958
      %v975 = vadd.f32 %v959, 0.0
      %v976 = vadd.f32 %v960, 0.0
      %v977 = vadd.f32 %v961, 0.0
      %v978 = vadd.f32 %v962, 0.0
      %v979 = vadd.f32 %v963, 0.0
      %v980 = vadd.f32 %v964, 0.0
      %v981 = vadd.f32 %v965, 0.0
      %v982 = vadd.f32 %v966, 0.0
      %v983 = vadd.f32 %v967, 0.0
      %v984 = vadd.f32 %v968, 0.0
      %v985 = vadd.f32 %v969, 0.0
      %v986 = vadd.f32 %v970, 0.0
      %v987 = vadd.f32 %v971, 0.0
      %v988 = vadd.f32 %v972, 0.0
      %v989 = vadd.f32 %v973, 0.0
      %v990 = vadd.f32 %v974, 0.0
      %991 = vset.pattern.permute.xlu0 1
      %992 = vperm.xlu0 %991, %v861
      %v993 = vpop.permute.xlu0 %992
      %994 = vset.pattern.permute.xlu0 1
      %995 = vperm.xlu0 %994, %v862
      %v996 = vpop.permute.xlu0 %995
      %997 = vset.pattern.permute.xlu0 1
      %998 = vperm.xlu0 %997, %v863
      %v999 = vpop.permute.xlu0 %998
      %1000 = vset.pattern.permute.xlu0 1
      %1001 = vperm.xlu0 %1000, %v864
      %v1002 = vpop.permute.xlu0 %1001
      %1003 = vset.pattern.permute.xlu0 1
      %1004 = vperm.xlu0 %1003, %v865
      %v1005 = vpop.permute.xlu0 %1004
      %1006 = vset.pattern.permute.xlu0 1
      %1007 = vperm.xlu0 %1006, %v866
      %v1008 = vpop.permute.xlu0 %1007
      %1009 = vset.pattern.permute.xlu0 1
      %1010 = vperm.xlu0 %1009, %v867
      %v1011 = vpop.permute.xlu0 %1010
      %1012 = vset.pattern.permute.xlu0 1
      %1013 = vperm.xlu0 %1012, %v868
      %v1014 = vpop.permute.xlu0 %1013
      %1015 = vset.pattern.permute.xlu0 1
      %1016 = vperm.xlu0 %1015, %v869
      %v1017 = vpop.permute.xlu0 %1016
      %1018 = vset.pattern.permute.xlu0 1
      %1019 = vperm.xlu0 %1018, %v870
      %v1020 = vpop.permute.xlu0 %1019
      %1021 = vset.pattern.permute.xlu0 1
      %1022 = vperm.xlu0 %1021, %v871
      %v1023 = vpop.permute.xlu0 %1022
      %1024 = vset.pattern.permute.xlu0 1
      %1025 = vperm.xlu0 %1024, %v872
      %v1026 = vpop.permute.xlu0 %1025
      %1027 = vset.pattern.permute.xlu0 1
      %1028 = vperm.xlu0 %1027, %v873
      %v1029 = vpop.permute.xlu0 %1028
      %1030 = vset.pattern.permute.xlu0 1
      %1031 = vperm.xlu0 %1030, %v874
      %v1032 = vpop.permute.xlu0 %1031
      %1033 = vset.pattern.permute.xlu0 1
      %1034 = vperm.xlu0 %1033, %v875
      %v1035 = vpop.permute.xlu0 %1034
      %1036 = vset.pattern.permute.xlu0 1
      %1037 = vperm.xlu0 %1036, %v876
      %v1038 = vpop.permute.xlu0 %1037
      %vm1039 = vcmp.eq.s32.totalorder %v993, %v878
      %vm1040 = vcmp.eq.s32.totalorder %v996, %v878
      %vm1041 = vcmp.eq.s32.totalorder %v999, %v878
      %vm1042 = vcmp.eq.s32.totalorder %v1002, %v878
      %vm1043 = vcmp.eq.s32.totalorder %v1005, %v878
      %vm1044 = vcmp.eq.s32.totalorder %v1008, %v878
      %vm1045 = vcmp.eq.s32.totalorder %v1011, %v878
      %vm1046 = vcmp.eq.s32.totalorder %v1014, %v878
      %vm1047 = vcmp.eq.s32.totalorder %v1017, %v878
      %vm1048 = vcmp.eq.s32.totalorder %v1020, %v878
      %vm1049 = vcmp.eq.s32.totalorder %v1023, %v878
      %vm1050 = vcmp.eq.s32.totalorder %v1026, %v878
      %vm1051 = vcmp.eq.s32.totalorder %v1029, %v878
      %vm1052 = vcmp.eq.s32.totalorder %v1032, %v878
      %vm1053 = vcmp.eq.s32.totalorder %v1035, %v878
      %vm1054 = vcmp.eq.s32.totalorder %v1038, %v878
      %v1055 = vsel %vm1039, 1, 0
      %v1056 = vsel %vm1040, 1, 0
      %v1057 = vsel %vm1041, 1, 0
      %v1058 = vsel %vm1042, 1, 0
      %v1059 = vsel %vm1043, 1, 0
      %v1060 = vsel %vm1044, 1, 0
      %v1061 = vsel %vm1045, 1, 0
      %v1062 = vsel %vm1046, 1, 0
      %v1063 = vsel %vm1047, 1, 0
      %v1064 = vsel %vm1048, 1, 0
      %v1065 = vsel %vm1049, 1, 0
      %v1066 = vsel %vm1050, 1, 0
      %v1067 = vsel %vm1051, 1, 0
      %v1068 = vsel %vm1052, 1, 0
      %v1069 = vsel %vm1053, 1, 0
      %v1070 = vsel %vm1054, 1, 0
      %v1071 = vcvt.s32.f32 %v1055
      %v1072 = vcvt.s32.f32 %v1056
      %v1073 = vcvt.s32.f32 %v1057
      %v1074 = vcvt.s32.f32 %v1058
      %v1075 = vcvt.s32.f32 %v1059
      %v1076 = vcvt.s32.f32 %v1060
      %v1077 = vcvt.s32.f32 %v1061
      %v1078 = vcvt.s32.f32 %v1062
      %v1079 = vcvt.s32.f32 %v1063
      %v1080 = vcvt.s32.f32 %v1064
      %v1081 = vcvt.s32.f32 %v1065
      %v1082 = vcvt.s32.f32 %v1066
      %v1083 = vcvt.s32.f32 %v1067
      %v1084 = vcvt.s32.f32 %v1068
      %v1085 = vcvt.s32.f32 %v1069
      %v1086 = vcvt.s32.f32 %v1070
      %v1087 = vadd.f32 %v975, %v1071
      %v1088 = vadd.f32 %v976, %v1072
      %v1089 = vadd.f32 %v977, %v1073
      %v1090 = vadd.f32 %v978, %v1074
      %v1091 = vadd.f32 %v979, %v1075
      %v1092 = vadd.f32 %v980, %v1076
      %v1093 = vadd.f32 %v981, %v1077
      %v1094 = vadd.f32 %v982, %v1078
      %v1095 = vadd.f32 %v983, %v1079
      %v1096 = vadd.f32 %v984, %v1080
      %v1097 = vadd.f32 %v985, %v1081
      %v1098 = vadd.f32 %v986, %v1082
      %v1099 = vadd.f32 %v987, %v1083
      %v1100 = vadd.f32 %v988, %v1084
      %v1101 = vadd.f32 %v989, %v1085
      %v1102 = vadd.f32 %v990, %v1086
      %1103 = vset.pattern.permute.xlu0 2
      %1104 = vperm.xlu0 %1103, %v861
      %v1105 = vpop.permute.xlu0 %1104
      %1106 = vset.pattern.permute.xlu0 2
      %1107 = vperm.xlu0 %1106, %v862
      %v1108 = vpop.permute.xlu0 %1107
      %1109 = vset.pattern.permute.xlu0 2
      %1110 = vperm.xlu0 %1109, %v863
      %v1111 = vpop.permute.xlu0 %1110
      %1112 = vset.pattern.permute.xlu0 2
      %1113 = vperm.xlu0 %1112, %v864
      %v1114 = vpop.permute.xlu0 %1113
      %1115 = vset.pattern.permute.xlu0 2
      %1116 = vperm.xlu0 %1115, %v865
      %v1117 = vpop.permute.xlu0 %1116
      %1118 = vset.pattern.permute.xlu0 2
      %1119 = vperm.xlu0 %1118, %v866
      %v1120 = vpop.permute.xlu0 %1119
      %1121 = vset.pattern.permute.xlu0 2
      %1122 = vperm.xlu0 %1121, %v867
      %v1123 = vpop.permute.xlu0 %1122
      %1124 = vset.pattern.permute.xlu0 2
      %1125 = vperm.xlu0 %1124, %v868
      %v1126 = vpop.permute.xlu0 %1125
      %1127 = vset.pattern.permute.xlu0 2
      %1128 = vperm.xlu0 %1127, %v869
      %v1129 = vpop.permute.xlu0 %1128
      %1130 = vset.pattern.permute.xlu0 2
      %1131 = vperm.xlu0 %1130, %v870
      %v1132 = vpop.permute.xlu0 %1131
      %1133 = vset.pattern.permute.xlu0 2
      %1134 = vperm.xlu0 %1133, %v871
      %v1135 = vpop.permute.xlu0 %1134
      %1136 = vset.pattern.permute.xlu0 2
      %1137 = vperm.xlu0 %1136, %v872
      %v1138 = vpop.permute.xlu0 %1137
      %1139 = vset.pattern.permute.xlu0 2
      %1140 = vperm.xlu0 %1139, %v873
      %v1141 = vpop.permute.xlu0 %1140
      %1142 = vset.pattern.permute.xlu0 2
      %1143 = vperm.xlu0 %1142, %v874
      %v1144 = vpop.permute.xlu0 %1143
      %1145 = vset.pattern.permute.xlu0 2
      %1146 = vperm.xlu0 %1145, %v875
      %v1147 = vpop.permute.xlu0 %1146
      %1148 = vset.pattern.permute.xlu0 2
      %1149 = vperm.xlu0 %1148, %v876
      %v1150 = vpop.permute.xlu0 %1149
      %vm1151 = vcmp.eq.s32.totalorder %v1105, %v878
      %vm1152 = vcmp.eq.s32.totalorder %v1108, %v878
      %vm1153 = vcmp.eq.s32.totalorder %v1111, %v878
      %vm1154 = vcmp.eq.s32.totalorder %v1114, %v878
      %vm1155 = vcmp.eq.s32.totalorder %v1117, %v878
      %vm1156 = vcmp.eq.s32.totalorder %v1120, %v878
      %vm1157 = vcmp.eq.s32.totalorder %v1123, %v878
      %vm1158 = vcmp.eq.s32.totalorder %v1126, %v878
      %vm1159 = vcmp.eq.s32.totalorder %v1129, %v878
      %vm1160 = vcmp.eq.s32.totalorder %v1132, %v878
      %vm1161 = vcmp.eq.s32.totalorder %v1135, %v878
      %vm1162 = vcmp.eq.s32.totalorder %v1138, %v878
      %vm1163 = vcmp.eq.s32.totalorder %v1141, %v878
      %vm1164 = vcmp.eq.s32.totalorder %v1144, %v878
      %vm1165 = vcmp.eq.s32.totalorder %v1147, %v878
      %vm1166 = vcmp.eq.s32.totalorder %v1150, %v878
      %v1167 = vsel %vm1151, 1, 0
      %v1168 = vsel %vm1152, 1, 0
      %v1169 = vsel %vm1153, 1, 0
      %v1170 = vsel %vm1154, 1, 0
      %v1171 = vsel %vm1155, 1, 0
      %v1172 = vsel %vm1156, 1, 0
      %v1173 = vsel %vm1157, 1, 0
      %v1174 = vsel %vm1158, 1, 0
      %v1175 = vsel %vm1159, 1, 0
      %v1176 = vsel %vm1160, 1, 0
      %v1177 = vsel %vm1161, 1, 0
      %v1178 = vsel %vm1162, 1, 0
      %v1179 = vsel %vm1163, 1, 0
      %v1180 = vsel %vm1164, 1, 0
      %v1181 = vsel %vm1165, 1, 0
      %v1182 = vsel %vm1166, 1, 0
      %v1183 = vcvt.s32.f32 %v1167
      %v1184 = vcvt.s32.f32 %v1168
      %v1185 = vcvt.s32.f32 %v1169
      %v1186 = vcvt.s32.f32 %v1170
      %v1187 = vcvt.s32.f32 %v1171
      %v1188 = vcvt.s32.f32 %v1172
      %v1189 = vcvt.s32.f32 %v1173
      %v1190 = vcvt.s32.f32 %v1174
      %v1191 = vcvt.s32.f32 %v1175
      %v1192 = vcvt.s32.f32 %v1176
      %v1193 = vcvt.s32.f32 %v1177
      %v1194 = vcvt.s32.f32 %v1178
      %v1195 = vcvt.s32.f32 %v1179
      %v1196 = vcvt.s32.f32 %v1180
      %v1197 = vcvt.s32.f32 %v1181
      %v1198 = vcvt.s32.f32 %v1182
      %v1199 = vadd.f32 %v1087, %v1183
      %v1200 = vadd.f32 %v1088, %v1184
      %v1201 = vadd.f32 %v1089, %v1185
      %v1202 = vadd.f32 %v1090, %v1186
      %v1203 = vadd.f32 %v1091, %v1187
      %v1204 = vadd.f32 %v1092, %v1188
      %v1205 = vadd.f32 %v1093, %v1189
      %v1206 = vadd.f32 %v1094, %v1190
      %v1207 = vadd.f32 %v1095, %v1191
      %v1208 = vadd.f32 %v1096, %v1192
      %v1209 = vadd.f32 %v1097, %v1193
      %v1210 = vadd.f32 %v1098, %v1194
      %v1211 = vadd.f32 %v1099, %v1195
      %v1212 = vadd.f32 %v1100, %v1196
      %v1213 = vadd.f32 %v1101, %v1197
      %v1214 = vadd.f32 %v1102, %v1198
      %1215 = vset.pattern.permute.xlu0 3
      %1216 = vperm.xlu0 %1215, %v861
      %v1217 = vpop.permute.xlu0 %1216
      %1218 = vset.pattern.permute.xlu0 3
      %1219 = vperm.xlu0 %1218, %v862
      %v1220 = vpop.permute.xlu0 %1219
      %1221 = vset.pattern.permute.xlu0 3
      %1222 = vperm.xlu0 %1221, %v863
      %v1223 = vpop.permute.xlu0 %1222
      %1224 = vset.pattern.permute.xlu0 3
      %1225 = vperm.xlu0 %1224, %v864
      %v1226 = vpop.permute.xlu0 %1225
      %1227 = vset.pattern.permute.xlu0 3
      %1228 = vperm.xlu0 %1227, %v865
      %v1229 = vpop.permute.xlu0 %1228
      %1230 = vset.pattern.permute.xlu0 3
      %1231 = vperm.xlu0 %1230, %v866
      %v1232 = vpop.permute.xlu0 %1231
      %1233 = vset.pattern.permute.xlu0 3
      %1234 = vperm.xlu0 %1233, %v867
      %v1235 = vpop.permute.xlu0 %1234
      %1236 = vset.pattern.permute.xlu0 3
      %1237 = vperm.xlu0 %1236, %v868
      %v1238 = vpop.permute.xlu0 %1237
      %1239 = vset.pattern.permute.xlu0 3
      %1240 = vperm.xlu0 %1239, %v869
      %v1241 = vpop.permute.xlu0 %1240
      %1242 = vset.pattern.permute.xlu0 3
      %1243 = vperm.xlu0 %1242, %v870
      %v1244 = vpop.permute.xlu0 %1243
      %1245 = vset.pattern.permute.xlu0 3
      %1246 = vperm.xlu0 %1245, %v871
      %v1247 = vpop.permute.xlu0 %1246
      %1248 = vset.pattern.permute.xlu0 3
      %1249 = vperm.xlu0 %1248, %v872
      %v1250 = vpop.permute.xlu0 %1249
      %1251 = vset.pattern.permute.xlu0 3
      %1252 = vperm.xlu0 %1251, %v873
      %v1253 = vpop.permute.xlu0 %1252
      %1254 = vset.pattern.permute.xlu0 3
      %1255 = vperm.xlu0 %1254, %v874
      %v1256 = vpop.permute.xlu0 %1255
      %1257 = vset.pattern.permute.xlu0 3
      %1258 = vperm.xlu0 %1257, %v875
      %v1259 = vpop.permute.xlu0 %1258
      %1260 = vset.pattern.permute.xlu0 3
      %1261 = vperm.xlu0 %1260, %v876
      %v1262 = vpop.permute.xlu0 %1261
      %vm1263 = vcmp.eq.s32.totalorder %v1217, %v878
      %vm1264 = vcmp.eq.s32.totalorder %v1220, %v878
      %vm1265 = vcmp.eq.s32.totalorder %v1223, %v878
      %vm1266 = vcmp.eq.s32.totalorder %v1226, %v878
      %vm1267 = vcmp.eq.s32.totalorder %v1229, %v878
      %vm1268 = vcmp.eq.s32.totalorder %v1232, %v878
      %vm1269 = vcmp.eq.s32.totalorder %v1235, %v878
      %vm1270 = vcmp.eq.s32.totalorder %v1238, %v878
      %vm1271 = vcmp.eq.s32.totalorder %v1241, %v878
      %vm1272 = vcmp.eq.s32.totalorder %v1244, %v878
      %vm1273 = vcmp.eq.s32.totalorder %v1247, %v878
      %vm1274 = vcmp.eq.s32.totalorder %v1250, %v878
      %vm1275 = vcmp.eq.s32.totalorder %v1253, %v878
      %vm1276 = vcmp.eq.s32.totalorder %v1256, %v878
      %vm1277 = vcmp.eq.s32.totalorder %v1259, %v878
      %vm1278 = vcmp.eq.s32.totalorder %v1262, %v878
      %v1279 = vsel %vm1263, 1, 0
      %v1280 = vsel %vm1264, 1, 0
      %v1281 = vsel %vm1265, 1, 0
      %v1282 = vsel %vm1266, 1, 0
      %v1283 = vsel %vm1267, 1, 0
      %v1284 = vsel %vm1268, 1, 0
      %v1285 = vsel %vm1269, 1, 0
      %v1286 = vsel %vm1270, 1, 0
      %v1287 = vsel %vm1271, 1, 0
      %v1288 = vsel %vm1272, 1, 0
      %v1289 = vsel %vm1273, 1, 0
      %v1290 = vsel %vm1274, 1, 0
      %v1291 = vsel %vm1275, 1, 0
      %v1292 = vsel %vm1276, 1, 0
      %v1293 = vsel %vm1277, 1, 0
      %v1294 = vsel %vm1278, 1, 0
      %v1295 = vcvt.s32.f32 %v1279
      %v1296 = vcvt.s32.f32 %v1280
      %v1297 = vcvt.s32.f32 %v1281
      %v1298 = vcvt.s32.f32 %v1282
      %v1299 = vcvt.s32.f32 %v1283
      %v1300 = vcvt.s32.f32 %v1284
      %v1301 = vcvt.s32.f32 %v1285
      %v1302 = vcvt.s32.f32 %v1286
      %v1303 = vcvt.s32.f32 %v1287
      %v1304 = vcvt.s32.f32 %v1288
      %v1305 = vcvt.s32.f32 %v1289
      %v1306 = vcvt.s32.f32 %v1290
      %v1307 = vcvt.s32.f32 %v1291
      %v1308 = vcvt.s32.f32 %v1292
      %v1309 = vcvt.s32.f32 %v1293
      %v1310 = vcvt.s32.f32 %v1294
      %v1311 = vadd.f32 %v1199, %v1295
      %v1312 = vadd.f32 %v1200, %v1296
      %v1313 = vadd.f32 %v1201, %v1297
      %v1314 = vadd.f32 %v1202, %v1298
      %v1315 = vadd.f32 %v1203, %v1299
      %v1316 = vadd.f32 %v1204, %v1300
      %v1317 = vadd.f32 %v1205, %v1301
      %v1318 = vadd.f32 %v1206, %v1302
      %v1319 = vadd.f32 %v1207, %v1303
      %v1320 = vadd.f32 %v1208, %v1304
      %v1321 = vadd.f32 %v1209, %v1305
      %v1322 = vadd.f32 %v1210, %v1306
      %v1323 = vadd.f32 %v1211, %v1307
      %v1324 = vadd.f32 %v1212, %v1308
      %v1325 = vadd.f32 %v1213, %v1309
      %v1326 = vadd.f32 %v1214, %v1310
      %1327 = vset.pattern.permute.xlu0 4
      %1328 = vperm.xlu0 %1327, %v861
      %v1329 = vpop.permute.xlu0 %1328
      %1330 = vset.pattern.permute.xlu0 4
      %1331 = vperm.xlu0 %1330, %v862
      %v1332 = vpop.permute.xlu0 %1331
      %1333 = vset.pattern.permute.xlu0 4
      %1334 = vperm.xlu0 %1333, %v863
      %v1335 = vpop.permute.xlu0 %1334
      %1336 = vset.pattern.permute.xlu0 4
      %1337 = vperm.xlu0 %1336, %v864
      %v1338 = vpop.permute.xlu0 %1337
      %1339 = vset.pattern.permute.xlu0 4
      %1340 = vperm.xlu0 %1339, %v865
      %v1341 = vpop.permute.xlu0 %1340
      %1342 = vset.pattern.permute.xlu0 4
      %1343 = vperm.xlu0 %1342, %v866
      %v1344 = vpop.permute.xlu0 %1343
      %1345 = vset.pattern.permute.xlu0 4
      %1346 = vperm.xlu0 %1345, %v867
      %v1347 = vpop.permute.xlu0 %1346
      %1348 = vset.pattern.permute.xlu0 4
      %1349 = vperm.xlu0 %1348, %v868
      %v1350 = vpop.permute.xlu0 %1349
      %1351 = vset.pattern.permute.xlu0 4
      %1352 = vperm.xlu0 %1351, %v869
      %v1353 = vpop.permute.xlu0 %1352
      %1354 = vset.pattern.permute.xlu0 4
      %1355 = vperm.xlu0 %1354, %v870
      %v1356 = vpop.permute.xlu0 %1355
      %1357 = vset.pattern.permute.xlu0 4
      %1358 = vperm.xlu0 %1357, %v871
      %v1359 = vpop.permute.xlu0 %1358
      %1360 = vset.pattern.permute.xlu0 4
      %1361 = vperm.xlu0 %1360, %v872
      %v1362 = vpop.permute.xlu0 %1361
      %1363 = vset.pattern.permute.xlu0 4
      %1364 = vperm.xlu0 %1363, %v873
      %v1365 = vpop.permute.xlu0 %1364
      %1366 = vset.pattern.permute.xlu0 4
      %1367 = vperm.xlu0 %1366, %v874
      %v1368 = vpop.permute.xlu0 %1367
      %1369 = vset.pattern.permute.xlu0 4
      %1370 = vperm.xlu0 %1369, %v875
      %v1371 = vpop.permute.xlu0 %1370
      %1372 = vset.pattern.permute.xlu0 4
      %1373 = vperm.xlu0 %1372, %v876
      %v1374 = vpop.permute.xlu0 %1373
      %vm1375 = vcmp.eq.s32.totalorder %v1329, %v878
      %vm1376 = vcmp.eq.s32.totalorder %v1332, %v878
      %vm1377 = vcmp.eq.s32.totalorder %v1335, %v878
      %vm1378 = vcmp.eq.s32.totalorder %v1338, %v878
      %vm1379 = vcmp.eq.s32.totalorder %v1341, %v878
      %vm1380 = vcmp.eq.s32.totalorder %v1344, %v878
      %vm1381 = vcmp.eq.s32.totalorder %v1347, %v878
      %vm1382 = vcmp.eq.s32.totalorder %v1350, %v878
      %vm1383 = vcmp.eq.s32.totalorder %v1353, %v878
      %vm1384 = vcmp.eq.s32.totalorder %v1356, %v878
      %vm1385 = vcmp.eq.s32.totalorder %v1359, %v878
      %vm1386 = vcmp.eq.s32.totalorder %v1362, %v878
      %vm1387 = vcmp.eq.s32.totalorder %v1365, %v878
      %vm1388 = vcmp.eq.s32.totalorder %v1368, %v878
      %vm1389 = vcmp.eq.s32.totalorder %v1371, %v878
      %vm1390 = vcmp.eq.s32.totalorder %v1374, %v878
      %v1391 = vsel %vm1375, 1, 0
      %v1392 = vsel %vm1376, 1, 0
      %v1393 = vsel %vm1377, 1, 0
      %v1394 = vsel %vm1378, 1, 0
      %v1395 = vsel %vm1379, 1, 0
      %v1396 = vsel %vm1380, 1, 0
      %v1397 = vsel %vm1381, 1, 0
      %v1398 = vsel %vm1382, 1, 0
      %v1399 = vsel %vm1383, 1, 0
      %v1400 = vsel %vm1384, 1, 0
      %v1401 = vsel %vm1385, 1, 0
      %v1402 = vsel %vm1386, 1, 0
      %v1403 = vsel %vm1387, 1, 0
      %v1404 = vsel %vm1388, 1, 0
      %v1405 = vsel %vm1389, 1, 0
      %v1406 = vsel %vm1390, 1, 0
      %v1407 = vcvt.s32.f32 %v1391
      %v1408 = vcvt.s32.f32 %v1392
      %v1409 = vcvt.s32.f32 %v1393
      %v1410 = vcvt.s32.f32 %v1394
      %v1411 = vcvt.s32.f32 %v1395
      %v1412 = vcvt.s32.f32 %v1396
      %v1413 = vcvt.s32.f32 %v1397
      %v1414 = vcvt.s32.f32 %v1398
      %v1415 = vcvt.s32.f32 %v1399
      %v1416 = vcvt.s32.f32 %v1400
      %v1417 = vcvt.s32.f32 %v1401
      %v1418 = vcvt.s32.f32 %v1402
      %v1419 = vcvt.s32.f32 %v1403
      %v1420 = vcvt.s32.f32 %v1404
      %v1421 = vcvt.s32.f32 %v1405
      %v1422 = vcvt.s32.f32 %v1406
      %v1423 = vadd.f32 %v1311, %v1407
      %v1424 = vadd.f32 %v1312, %v1408
      %v1425 = vadd.f32 %v1313, %v1409
      %v1426 = vadd.f32 %v1314, %v1410
      %v1427 = vadd.f32 %v1315, %v1411
      %v1428 = vadd.f32 %v1316, %v1412
      %v1429 = vadd.f32 %v1317, %v1413
      %v1430 = vadd.f32 %v1318, %v1414
      %v1431 = vadd.f32 %v1319, %v1415
      %v1432 = vadd.f32 %v1320, %v1416
      %v1433 = vadd.f32 %v1321, %v1417
      %v1434 = vadd.f32 %v1322, %v1418
      %v1435 = vadd.f32 %v1323, %v1419
      %v1436 = vadd.f32 %v1324, %v1420
      %v1437 = vadd.f32 %v1325, %v1421
      %v1438 = vadd.f32 %v1326, %v1422
      %1439 = vset.pattern.permute.xlu0 5
      %1440 = vperm.xlu0 %1439, %v861
      %v1441 = vpop.permute.xlu0 %1440
      %1442 = vset.pattern.permute.xlu0 5
      %1443 = vperm.xlu0 %1442, %v862
      %v1444 = vpop.permute.xlu0 %1443
      %1445 = vset.pattern.permute.xlu0 5
      %1446 = vperm.xlu0 %1445, %v863
      %v1447 = vpop.permute.xlu0 %1446
      %1448 = vset.pattern.permute.xlu0 5
      %1449 = vperm.xlu0 %1448, %v864
      %v1450 = vpop.permute.xlu0 %1449
      %1451 = vset.pattern.permute.xlu0 5
      %1452 = vperm.xlu0 %1451, %v865
      %v1453 = vpop.permute.xlu0 %1452
      %1454 = vset.pattern.permute.xlu0 5
      %1455 = vperm.xlu0 %1454, %v866
      %v1456 = vpop.permute.xlu0 %1455
      %1457 = vset.pattern.permute.xlu0 5
      %1458 = vperm.xlu0 %1457, %v867
      %v1459 = vpop.permute.xlu0 %1458
      %1460 = vset.pattern.permute.xlu0 5
      %1461 = vperm.xlu0 %1460, %v868
      %v1462 = vpop.permute.xlu0 %1461
      %1463 = vset.pattern.permute.xlu0 5
      %1464 = vperm.xlu0 %1463, %v869
      %v1465 = vpop.permute.xlu0 %1464
      %1466 = vset.pattern.permute.xlu0 5
      %1467 = vperm.xlu0 %1466, %v870
      %v1468 = vpop.permute.xlu0 %1467
      %1469 = vset.pattern.permute.xlu0 5
      %1470 = vperm.xlu0 %1469, %v871
      %v1471 = vpop.permute.xlu0 %1470
      %1472 = vset.pattern.permute.xlu0 5
      %1473 = vperm.xlu0 %1472, %v872
      %v1474 = vpop.permute.xlu0 %1473
      %1475 = vset.pattern.permute.xlu0 5
      %1476 = vperm.xlu0 %1475, %v873
      %v1477 = vpop.permute.xlu0 %1476
      %1478 = vset.pattern.permute.xlu0 5
      %1479 = vperm.xlu0 %1478, %v874
      %v1480 = vpop.permute.xlu0 %1479
      %1481 = vset.pattern.permute.xlu0 5
      %1482 = vperm.xlu0 %1481, %v875
      %v1483 = vpop.permute.xlu0 %1482
      %1484 = vset.pattern.permute.xlu0 5
      %1485 = vperm.xlu0 %1484, %v876
      %v1486 = vpop.permute.xlu0 %1485
      %vm1487 = vcmp.eq.s32.totalorder %v1441, %v878
      %vm1488 = vcmp.eq.s32.totalorder %v1444, %v878
      %vm1489 = vcmp.eq.s32.totalorder %v1447, %v878
      %vm1490 = vcmp.eq.s32.totalorder %v1450, %v878
      %vm1491 = vcmp.eq.s32.totalorder %v1453, %v878
      %vm1492 = vcmp.eq.s32.totalorder %v1456, %v878
      %vm1493 = vcmp.eq.s32.totalorder %v1459, %v878
      %vm1494 = vcmp.eq.s32.totalorder %v1462, %v878
      %vm1495 = vcmp.eq.s32.totalorder %v1465, %v878
      %vm1496 = vcmp.eq.s32.totalorder %v1468, %v878
      %vm1497 = vcmp.eq.s32.totalorder %v1471, %v878
      %vm1498 = vcmp.eq.s32.totalorder %v1474, %v878
      %vm1499 = vcmp.eq.s32.totalorder %v1477, %v878
      %vm1500 = vcmp.eq.s32.totalorder %v1480, %v878
      %vm1501 = vcmp.eq.s32.totalorder %v1483, %v878
      %vm1502 = vcmp.eq.s32.totalorder %v1486, %v878
      %v1503 = vsel %vm1487, 1, 0
      %v1504 = vsel %vm1488, 1, 0
      %v1505 = vsel %vm1489, 1, 0
      %v1506 = vsel %vm1490, 1, 0
      %v1507 = vsel %vm1491, 1, 0
      %v1508 = vsel %vm1492, 1, 0
      %v1509 = vsel %vm1493, 1, 0
      %v1510 = vsel %vm1494, 1, 0
      %v1511 = vsel %vm1495, 1, 0
      %v1512 = vsel %vm1496, 1, 0
      %v1513 = vsel %vm1497, 1, 0
      %v1514 = vsel %vm1498, 1, 0
      %v1515 = vsel %vm1499, 1, 0
      %v1516 = vsel %vm1500, 1, 0
      %v1517 = vsel %vm1501, 1, 0
      %v1518 = vsel %vm1502, 1, 0
      %v1519 = vcvt.s32.f32 %v1503
      %v1520 = vcvt.s32.f32 %v1504
      %v1521 = vcvt.s32.f32 %v1505
      %v1522 = vcvt.s32.f32 %v1506
      %v1523 = vcvt.s32.f32 %v1507
      %v1524 = vcvt.s32.f32 %v1508
      %v1525 = vcvt.s32.f32 %v1509
      %v1526 = vcvt.s32.f32 %v1510
      %v1527 = vcvt.s32.f32 %v1511
      %v1528 = vcvt.s32.f32 %v1512
      %v1529 = vcvt.s32.f32 %v1513
      %v1530 = vcvt.s32.f32 %v1514
      %v1531 = vcvt.s32.f32 %v1515
      %v1532 = vcvt.s32.f32 %v1516
      %v1533 = vcvt.s32.f32 %v1517
      %v1534 = vcvt.s32.f32 %v1518
      %v1535 = vadd.f32 %v1423, %v1519
      %v1536 = vadd.f32 %v1424, %v1520
      %v1537 = vadd.f32 %v1425, %v1521
      %v1538 = vadd.f32 %v1426, %v1522
      %v1539 = vadd.f32 %v1427, %v1523
      %v1540 = vadd.f32 %v1428, %v1524
      %v1541 = vadd.f32 %v1429, %v1525
      %v1542 = vadd.f32 %v1430, %v1526
      %v1543 = vadd.f32 %v1431, %v1527
      %v1544 = vadd.f32 %v1432, %v1528
      %v1545 = vadd.f32 %v1433, %v1529
      %v1546 = vadd.f32 %v1434, %v1530
      %v1547 = vadd.f32 %v1435, %v1531
      %v1548 = vadd.f32 %v1436, %v1532
      %v1549 = vadd.f32 %v1437, %v1533
      %v1550 = vadd.f32 %v1438, %v1534
      %1551 = vset.pattern.permute.xlu0 6
      %1552 = vperm.xlu0 %1551, %v861
      %v1553 = vpop.permute.xlu0 %1552
      %1554 = vset.pattern.permute.xlu0 6
      %1555 = vperm.xlu0 %1554, %v862
      %v1556 = vpop.permute.xlu0 %1555
      %1557 = vset.pattern.permute.xlu0 6
      %1558 = vperm.xlu0 %1557, %v863
      %v1559 = vpop.permute.xlu0 %1558
      %1560 = vset.pattern.permute.xlu0 6
      %1561 = vperm.xlu0 %1560, %v864
      %v1562 = vpop.permute.xlu0 %1561
      %1563 = vset.pattern.permute.xlu0 6
      %1564 = vperm.xlu0 %1563, %v865
      %v1565 = vpop.permute.xlu0 %1564
      %1566 = vset.pattern.permute.xlu0 6
      %1567 = vperm.xlu0 %1566, %v866
      %v1568 = vpop.permute.xlu0 %1567
      %1569 = vset.pattern.permute.xlu0 6
      %1570 = vperm.xlu0 %1569, %v867
      %v1571 = vpop.permute.xlu0 %1570
      %1572 = vset.pattern.permute.xlu0 6
      %1573 = vperm.xlu0 %1572, %v868
      %v1574 = vpop.permute.xlu0 %1573
      %1575 = vset.pattern.permute.xlu0 6
      %1576 = vperm.xlu0 %1575, %v869
      %v1577 = vpop.permute.xlu0 %1576
      %1578 = vset.pattern.permute.xlu0 6
      %1579 = vperm.xlu0 %1578, %v870
      %v1580 = vpop.permute.xlu0 %1579
      %1581 = vset.pattern.permute.xlu0 6
      %1582 = vperm.xlu0 %1581, %v871
      %v1583 = vpop.permute.xlu0 %1582
      %1584 = vset.pattern.permute.xlu0 6
      %1585 = vperm.xlu0 %1584, %v872
      %v1586 = vpop.permute.xlu0 %1585
      %1587 = vset.pattern.permute.xlu0 6
      %1588 = vperm.xlu0 %1587, %v873
      %v1589 = vpop.permute.xlu0 %1588
      %1590 = vset.pattern.permute.xlu0 6
      %1591 = vperm.xlu0 %1590, %v874
      %v1592 = vpop.permute.xlu0 %1591
      %1593 = vset.pattern.permute.xlu0 6
      %1594 = vperm.xlu0 %1593, %v875
      %v1595 = vpop.permute.xlu0 %1594
      %1596 = vset.pattern.permute.xlu0 6
      %1597 = vperm.xlu0 %1596, %v876
      %v1598 = vpop.permute.xlu0 %1597
      %vm1599 = vcmp.eq.s32.totalorder %v1553, %v878
      %vm1600 = vcmp.eq.s32.totalorder %v1556, %v878
      %vm1601 = vcmp.eq.s32.totalorder %v1559, %v878
      %vm1602 = vcmp.eq.s32.totalorder %v1562, %v878
      %vm1603 = vcmp.eq.s32.totalorder %v1565, %v878
      %vm1604 = vcmp.eq.s32.totalorder %v1568, %v878
      %vm1605 = vcmp.eq.s32.totalorder %v1571, %v878
      %vm1606 = vcmp.eq.s32.totalorder %v1574, %v878
      %vm1607 = vcmp.eq.s32.totalorder %v1577, %v878
      %vm1608 = vcmp.eq.s32.totalorder %v1580, %v878
      %vm1609 = vcmp.eq.s32.totalorder %v1583, %v878
      %vm1610 = vcmp.eq.s32.totalorder %v1586, %v878
      %vm1611 = vcmp.eq.s32.totalorder %v1589, %v878
      %vm1612 = vcmp.eq.s32.totalorder %v1592, %v878
      %vm1613 = vcmp.eq.s32.totalorder %v1595, %v878
      %vm1614 = vcmp.eq.s32.totalorder %v1598, %v878
      %v1615 = vsel %vm1599, 1, 0
      %v1616 = vsel %vm1600, 1, 0
      %v1617 = vsel %vm1601, 1, 0
      %v1618 = vsel %vm1602, 1, 0
      %v1619 = vsel %vm1603, 1, 0
      %v1620 = vsel %vm1604, 1, 0
      %v1621 = vsel %vm1605, 1, 0
      %v1622 = vsel %vm1606, 1, 0
      %v1623 = vsel %vm1607, 1, 0
      %v1624 = vsel %vm1608, 1, 0
      %v1625 = vsel %vm1609, 1, 0
      %v1626 = vsel %vm1610, 1, 0
      %v1627 = vsel %vm1611, 1, 0
      %v1628 = vsel %vm1612, 1, 0
      %v1629 = vsel %vm1613, 1, 0
      %v1630 = vsel %vm1614, 1, 0
      %v1631 = vcvt.s32.f32 %v1615
      %v1632 = vcvt.s32.f32 %v1616
      %v1633 = vcvt.s32.f32 %v1617
      %v1634 = vcvt.s32.f32 %v1618
      %v1635 = vcvt.s32.f32 %v1619
      %v1636 = vcvt.s32.f32 %v1620
      %v1637 = vcvt.s32.f32 %v1621
      %v1638 = vcvt.s32.f32 %v1622
      %v1639 = vcvt.s32.f32 %v1623
      %v1640 = vcvt.s32.f32 %v1624
      %v1641 = vcvt.s32.f32 %v1625
      %v1642 = vcvt.s32.f32 %v1626
      %v1643 = vcvt.s32.f32 %v1627
      %v1644 = vcvt.s32.f32 %v1628
      %v1645 = vcvt.s32.f32 %v1629
      %v1646 = vcvt.s32.f32 %v1630
      %v1647 = vadd.f32 %v1535, %v1631
      %v1648 = vadd.f32 %v1536, %v1632
      %v1649 = vadd.f32 %v1537, %v1633
      %v1650 = vadd.f32 %v1538, %v1634
      %v1651 = vadd.f32 %v1539, %v1635
      %v1652 = vadd.f32 %v1540, %v1636
      %v1653 = vadd.f32 %v1541, %v1637
      %v1654 = vadd.f32 %v1542, %v1638
      %v1655 = vadd.f32 %v1543, %v1639
      %v1656 = vadd.f32 %v1544, %v1640
      %v1657 = vadd.f32 %v1545, %v1641
      %v1658 = vadd.f32 %v1546, %v1642
      %v1659 = vadd.f32 %v1547, %v1643
      %v1660 = vadd.f32 %v1548, %v1644
      %v1661 = vadd.f32 %v1549, %v1645
      %v1662 = vadd.f32 %v1550, %v1646
      %1663 = vset.pattern.permute.xlu0 7
      %1664 = vperm.xlu0 %1663, %v861
      %v1665 = vpop.permute.xlu0 %1664
      %1666 = vset.pattern.permute.xlu0 7
      %1667 = vperm.xlu0 %1666, %v862
      %v1668 = vpop.permute.xlu0 %1667
      %1669 = vset.pattern.permute.xlu0 7
      %1670 = vperm.xlu0 %1669, %v863
      %v1671 = vpop.permute.xlu0 %1670
      %1672 = vset.pattern.permute.xlu0 7
      %1673 = vperm.xlu0 %1672, %v864
      %v1674 = vpop.permute.xlu0 %1673
      %1675 = vset.pattern.permute.xlu0 7
      %1676 = vperm.xlu0 %1675, %v865
      %v1677 = vpop.permute.xlu0 %1676
      %1678 = vset.pattern.permute.xlu0 7
      %1679 = vperm.xlu0 %1678, %v866
      %v1680 = vpop.permute.xlu0 %1679
      %1681 = vset.pattern.permute.xlu0 7
      %1682 = vperm.xlu0 %1681, %v867
      %v1683 = vpop.permute.xlu0 %1682
      %1684 = vset.pattern.permute.xlu0 7
      %1685 = vperm.xlu0 %1684, %v868
      %v1686 = vpop.permute.xlu0 %1685
      %1687 = vset.pattern.permute.xlu0 7
      %1688 = vperm.xlu0 %1687, %v869
      %v1689 = vpop.permute.xlu0 %1688
      %1690 = vset.pattern.permute.xlu0 7
      %1691 = vperm.xlu0 %1690, %v870
      %v1692 = vpop.permute.xlu0 %1691
      %1693 = vset.pattern.permute.xlu0 7
      %1694 = vperm.xlu0 %1693, %v871
      %v1695 = vpop.permute.xlu0 %1694
      %1696 = vset.pattern.permute.xlu0 7
      %1697 = vperm.xlu0 %1696, %v872
      %v1698 = vpop.permute.xlu0 %1697
      %1699 = vset.pattern.permute.xlu0 7
      %1700 = vperm.xlu0 %1699, %v873
      %v1701 = vpop.permute.xlu0 %1700
      %1702 = vset.pattern.permute.xlu0 7
      %1703 = vperm.xlu0 %1702, %v874
      %v1704 = vpop.permute.xlu0 %1703
      %1705 = vset.pattern.permute.xlu0 7
      %1706 = vperm.xlu0 %1705, %v875
      %v1707 = vpop.permute.xlu0 %1706
      %1708 = vset.pattern.permute.xlu0 7
      %1709 = vperm.xlu0 %1708, %v876
      %v1710 = vpop.permute.xlu0 %1709
      %vm1711 = vcmp.eq.s32.totalorder %v1665, %v878
      %vm1712 = vcmp.eq.s32.totalorder %v1668, %v878
      %vm1713 = vcmp.eq.s32.totalorder %v1671, %v878
      %vm1714 = vcmp.eq.s32.totalorder %v1674, %v878
      %vm1715 = vcmp.eq.s32.totalorder %v1677, %v878
      %vm1716 = vcmp.eq.s32.totalorder %v1680, %v878
      %vm1717 = vcmp.eq.s32.totalorder %v1683, %v878
      %vm1718 = vcmp.eq.s32.totalorder %v1686, %v878
      %vm1719 = vcmp.eq.s32.totalorder %v1689, %v878
      %vm1720 = vcmp.eq.s32.totalorder %v1692, %v878
      %vm1721 = vcmp.eq.s32.totalorder %v1695, %v878
      %vm1722 = vcmp.eq.s32.totalorder %v1698, %v878
      %vm1723 = vcmp.eq.s32.totalorder %v1701, %v878
      %vm1724 = vcmp.eq.s32.totalorder %v1704, %v878
      %vm1725 = vcmp.eq.s32.totalorder %v1707, %v878
      %vm1726 = vcmp.eq.s32.totalorder %v1710, %v878
      %v1727 = vsel %vm1711, 1, 0
      %v1728 = vsel %vm1712, 1, 0
      %v1729 = vsel %vm1713, 1, 0
      %v1730 = vsel %vm1714, 1, 0
      %v1731 = vsel %vm1715, 1, 0
      %v1732 = vsel %vm1716, 1, 0
      %v1733 = vsel %vm1717, 1, 0
      %v1734 = vsel %vm1718, 1, 0
      %v1735 = vsel %vm1719, 1, 0
      %v1736 = vsel %vm1720, 1, 0
      %v1737 = vsel %vm1721, 1, 0
      %v1738 = vsel %vm1722, 1, 0
      %v1739 = vsel %vm1723, 1, 0
      %v1740 = vsel %vm1724, 1, 0
      %v1741 = vsel %vm1725, 1, 0
      %v1742 = vsel %vm1726, 1, 0
      %v1743 = vcvt.s32.f32 %v1727
      %v1744 = vcvt.s32.f32 %v1728
      %v1745 = vcvt.s32.f32 %v1729
      %v1746 = vcvt.s32.f32 %v1730
      %v1747 = vcvt.s32.f32 %v1731
      %v1748 = vcvt.s32.f32 %v1732
      %v1749 = vcvt.s32.f32 %v1733
      %v1750 = vcvt.s32.f32 %v1734
      %v1751 = vcvt.s32.f32 %v1735
      %v1752 = vcvt.s32.f32 %v1736
      %v1753 = vcvt.s32.f32 %v1737
      %v1754 = vcvt.s32.f32 %v1738
      %v1755 = vcvt.s32.f32 %v1739
      %v1756 = vcvt.s32.f32 %v1740
      %v1757 = vcvt.s32.f32 %v1741
      %v1758 = vcvt.s32.f32 %v1742
      %v1759 = vadd.f32 %v1647, %v1743
      %v1760 = vadd.f32 %v1648, %v1744
      %v1761 = vadd.f32 %v1649, %v1745
      %v1762 = vadd.f32 %v1650, %v1746
      %v1763 = vadd.f32 %v1651, %v1747
      %v1764 = vadd.f32 %v1652, %v1748
      %v1765 = vadd.f32 %v1653, %v1749
      %v1766 = vadd.f32 %v1654, %v1750
      %v1767 = vadd.f32 %v1655, %v1751
      %v1768 = vadd.f32 %v1656, %v1752
      %v1769 = vadd.f32 %v1657, %v1753
      %v1770 = vadd.f32 %v1658, %v1754
      %v1771 = vadd.f32 %v1659, %v1755
      %v1772 = vadd.f32 %v1660, %v1756
      %v1773 = vadd.f32 %v1661, %v1757
      %v1774 = vadd.f32 %v1662, %v1758
      %1775 = vset.pattern.permute.xlu0 8
      %1776 = vperm.xlu0 %1775, %v861
      %v1777 = vpop.permute.xlu0 %1776
      %1778 = vset.pattern.permute.xlu0 8
      %1779 = vperm.xlu0 %1778, %v862
      %v1780 = vpop.permute.xlu0 %1779
      %1781 = vset.pattern.permute.xlu0 8
      %1782 = vperm.xlu0 %1781, %v863
      %v1783 = vpop.permute.xlu0 %1782
      %1784 = vset.pattern.permute.xlu0 8
      %1785 = vperm.xlu0 %1784, %v864
      %v1786 = vpop.permute.xlu0 %1785
      %1787 = vset.pattern.permute.xlu0 8
      %1788 = vperm.xlu0 %1787, %v865
      %v1789 = vpop.permute.xlu0 %1788
      %1790 = vset.pattern.permute.xlu0 8
      %1791 = vperm.xlu0 %1790, %v866
      %v1792 = vpop.permute.xlu0 %1791
      %1793 = vset.pattern.permute.xlu0 8
      %1794 = vperm.xlu0 %1793, %v867
      %v1795 = vpop.permute.xlu0 %1794
      %1796 = vset.pattern.permute.xlu0 8
      %1797 = vperm.xlu0 %1796, %v868
      %v1798 = vpop.permute.xlu0 %1797
      %1799 = vset.pattern.permute.xlu0 8
      %1800 = vperm.xlu0 %1799, %v869
      %v1801 = vpop.permute.xlu0 %1800
      %1802 = vset.pattern.permute.xlu0 8
      %1803 = vperm.xlu0 %1802, %v870
      %v1804 = vpop.permute.xlu0 %1803
      %1805 = vset.pattern.permute.xlu0 8
      %1806 = vperm.xlu0 %1805, %v871
      %v1807 = vpop.permute.xlu0 %1806
      %1808 = vset.pattern.permute.xlu0 8
      %1809 = vperm.xlu0 %1808, %v872
      %v1810 = vpop.permute.xlu0 %1809
      %1811 = vset.pattern.permute.xlu0 8
      %1812 = vperm.xlu0 %1811, %v873
      %v1813 = vpop.permute.xlu0 %1812
      %1814 = vset.pattern.permute.xlu0 8
      %1815 = vperm.xlu0 %1814, %v874
      %v1816 = vpop.permute.xlu0 %1815
      %1817 = vset.pattern.permute.xlu0 8
      %1818 = vperm.xlu0 %1817, %v875
      %v1819 = vpop.permute.xlu0 %1818
      %1820 = vset.pattern.permute.xlu0 8
      %1821 = vperm.xlu0 %1820, %v876
      %v1822 = vpop.permute.xlu0 %1821
      %vm1823 = vcmp.eq.s32.totalorder %v1777, %v878
      %vm1824 = vcmp.eq.s32.totalorder %v1780, %v878
      %vm1825 = vcmp.eq.s32.totalorder %v1783, %v878
      %vm1826 = vcmp.eq.s32.totalorder %v1786, %v878
      %vm1827 = vcmp.eq.s32.totalorder %v1789, %v878
      %vm1828 = vcmp.eq.s32.totalorder %v1792, %v878
      %vm1829 = vcmp.eq.s32.totalorder %v1795, %v878
      %vm1830 = vcmp.eq.s32.totalorder %v1798, %v878
      %vm1831 = vcmp.eq.s32.totalorder %v1801, %v878
      %vm1832 = vcmp.eq.s32.totalorder %v1804, %v878
      %vm1833 = vcmp.eq.s32.totalorder %v1807, %v878
      %vm1834 = vcmp.eq.s32.totalorder %v1810, %v878
      %vm1835 = vcmp.eq.s32.totalorder %v1813, %v878
      %vm1836 = vcmp.eq.s32.totalorder %v1816, %v878
      %vm1837 = vcmp.eq.s32.totalorder %v1819, %v878
      %vm1838 = vcmp.eq.s32.totalorder %v1822, %v878
      %v1839 = vsel %vm1823, 1, 0
      %v1840 = vsel %vm1824, 1, 0
      %v1841 = vsel %vm1825, 1, 0
      %v1842 = vsel %vm1826, 1, 0
      %v1843 = vsel %vm1827, 1, 0
      %v1844 = vsel %vm1828, 1, 0
      %v1845 = vsel %vm1829, 1, 0
      %v1846 = vsel %vm1830, 1, 0
      %v1847 = vsel %vm1831, 1, 0
      %v1848 = vsel %vm1832, 1, 0
      %v1849 = vsel %vm1833, 1, 0
      %v1850 = vsel %vm1834, 1, 0
      %v1851 = vsel %vm1835, 1, 0
      %v1852 = vsel %vm1836, 1, 0
      %v1853 = vsel %vm1837, 1, 0
      %v1854 = vsel %vm1838, 1, 0
      %v1855 = vcvt.s32.f32 %v1839
      %v1856 = vcvt.s32.f32 %v1840
      %v1857 = vcvt.s32.f32 %v1841
      %v1858 = vcvt.s32.f32 %v1842
      %v1859 = vcvt.s32.f32 %v1843
      %v1860 = vcvt.s32.f32 %v1844
      %v1861 = vcvt.s32.f32 %v1845
      %v1862 = vcvt.s32.f32 %v1846
      %v1863 = vcvt.s32.f32 %v1847
      %v1864 = vcvt.s32.f32 %v1848
      %v1865 = vcvt.s32.f32 %v1849
      %v1866 = vcvt.s32.f32 %v1850
      %v1867 = vcvt.s32.f32 %v1851
      %v1868 = vcvt.s32.f32 %v1852
      %v1869 = vcvt.s32.f32 %v1853
      %v1870 = vcvt.s32.f32 %v1854
      %v1871 = vadd.f32 %v1759, %v1855
      %v1872 = vadd.f32 %v1760, %v1856
      %v1873 = vadd.f32 %v1761, %v1857
      %v1874 = vadd.f32 %v1762, %v1858
      %v1875 = vadd.f32 %v1763, %v1859
      %v1876 = vadd.f32 %v1764, %v1860
      %v1877 = vadd.f32 %v1765, %v1861
      %v1878 = vadd.f32 %v1766, %v1862
      %v1879 = vadd.f32 %v1767, %v1863
      %v1880 = vadd.f32 %v1768, %v1864
      %v1881 = vadd.f32 %v1769, %v1865
      %v1882 = vadd.f32 %v1770, %v1866
      %v1883 = vadd.f32 %v1771, %v1867
      %v1884 = vadd.f32 %v1772, %v1868
      %v1885 = vadd.f32 %v1773, %v1869
      %v1886 = vadd.f32 %v1774, %v1870
      %1887 = vset.pattern.permute.xlu0 9
      %1888 = vperm.xlu0 %1887, %v861
      %v1889 = vpop.permute.xlu0 %1888
      %1890 = vset.pattern.permute.xlu0 9
      %1891 = vperm.xlu0 %1890, %v862
      %v1892 = vpop.permute.xlu0 %1891
      %1893 = vset.pattern.permute.xlu0 9
      %1894 = vperm.xlu0 %1893, %v863
      %v1895 = vpop.permute.xlu0 %1894
      %1896 = vset.pattern.permute.xlu0 9
      %1897 = vperm.xlu0 %1896, %v864
      %v1898 = vpop.permute.xlu0 %1897
      %1899 = vset.pattern.permute.xlu0 9
      %1900 = vperm.xlu0 %1899, %v865
      %v1901 = vpop.permute.xlu0 %1900
      %1902 = vset.pattern.permute.xlu0 9
      %1903 = vperm.xlu0 %1902, %v866
      %v1904 = vpop.permute.xlu0 %1903
      %1905 = vset.pattern.permute.xlu0 9
      %1906 = vperm.xlu0 %1905, %v867
      %v1907 = vpop.permute.xlu0 %1906
      %1908 = vset.pattern.permute.xlu0 9
      %1909 = vperm.xlu0 %1908, %v868
      %v1910 = vpop.permute.xlu0 %1909
      %1911 = vset.pattern.permute.xlu0 9
      %1912 = vperm.xlu0 %1911, %v869
      %v1913 = vpop.permute.xlu0 %1912
      %1914 = vset.pattern.permute.xlu0 9
      %1915 = vperm.xlu0 %1914, %v870
      %v1916 = vpop.permute.xlu0 %1915
      %1917 = vset.pattern.permute.xlu0 9
      %1918 = vperm.xlu0 %1917, %v871
      %v1919 = vpop.permute.xlu0 %1918
      %1920 = vset.pattern.permute.xlu0 9
      %1921 = vperm.xlu0 %1920, %v872
      %v1922 = vpop.permute.xlu0 %1921
      %1923 = vset.pattern.permute.xlu0 9
      %1924 = vperm.xlu0 %1923, %v873
      %v1925 = vpop.permute.xlu0 %1924
      %1926 = vset.pattern.permute.xlu0 9
      %1927 = vperm.xlu0 %1926, %v874
      %v1928 = vpop.permute.xlu0 %1927
      %1929 = vset.pattern.permute.xlu0 9
      %1930 = vperm.xlu0 %1929, %v875
      %v1931 = vpop.permute.xlu0 %1930
      %1932 = vset.pattern.permute.xlu0 9
      %1933 = vperm.xlu0 %1932, %v876
      %v1934 = vpop.permute.xlu0 %1933
      %vm1935 = vcmp.eq.s32.totalorder %v1889, %v878
      %vm1936 = vcmp.eq.s32.totalorder %v1892, %v878
      %vm1937 = vcmp.eq.s32.totalorder %v1895, %v878
      %vm1938 = vcmp.eq.s32.totalorder %v1898, %v878
      %vm1939 = vcmp.eq.s32.totalorder %v1901, %v878
      %vm1940 = vcmp.eq.s32.totalorder %v1904, %v878
      %vm1941 = vcmp.eq.s32.totalorder %v1907, %v878
      %vm1942 = vcmp.eq.s32.totalorder %v1910, %v878
      %vm1943 = vcmp.eq.s32.totalorder %v1913, %v878
      %vm1944 = vcmp.eq.s32.totalorder %v1916, %v878
      %vm1945 = vcmp.eq.s32.totalorder %v1919, %v878
      %vm1946 = vcmp.eq.s32.totalorder %v1922, %v878
      %vm1947 = vcmp.eq.s32.totalorder %v1925, %v878
      %vm1948 = vcmp.eq.s32.totalorder %v1928, %v878
      %vm1949 = vcmp.eq.s32.totalorder %v1931, %v878
      %vm1950 = vcmp.eq.s32.totalorder %v1934, %v878
      %v1951 = vsel %vm1935, 1, 0
      %v1952 = vsel %vm1936, 1, 0
      %v1953 = vsel %vm1937, 1, 0
      %v1954 = vsel %vm1938, 1, 0
      %v1955 = vsel %vm1939, 1, 0
      %v1956 = vsel %vm1940, 1, 0
      %v1957 = vsel %vm1941, 1, 0
      %v1958 = vsel %vm1942, 1, 0
      %v1959 = vsel %vm1943, 1, 0
      %v1960 = vsel %vm1944, 1, 0
      %v1961 = vsel %vm1945, 1, 0
      %v1962 = vsel %vm1946, 1, 0
      %v1963 = vsel %vm1947, 1, 0
      %v1964 = vsel %vm1948, 1, 0
      %v1965 = vsel %vm1949, 1, 0
      %v1966 = vsel %vm1950, 1, 0
      %v1967 = vcvt.s32.f32 %v1951
      %v1968 = vcvt.s32.f32 %v1952
      %v1969 = vcvt.s32.f32 %v1953
      %v1970 = vcvt.s32.f32 %v1954
      %v1971 = vcvt.s32.f32 %v1955
      %v1972 = vcvt.s32.f32 %v1956
      %v1973 = vcvt.s32.f32 %v1957
      %v1974 = vcvt.s32.f32 %v1958
      %v1975 = vcvt.s32.f32 %v1959
      %v1976 = vcvt.s32.f32 %v1960
      %v1977 = vcvt.s32.f32 %v1961
      %v1978 = vcvt.s32.f32 %v1962
      %v1979 = vcvt.s32.f32 %v1963
      %v1980 = vcvt.s32.f32 %v1964
      %v1981 = vcvt.s32.f32 %v1965
      %v1982 = vcvt.s32.f32 %v1966
      %v1983 = vadd.f32 %v1871, %v1967
      %v1984 = vadd.f32 %v1872, %v1968
      %v1985 = vadd.f32 %v1873, %v1969
      %v1986 = vadd.f32 %v1874, %v1970
      %v1987 = vadd.f32 %v1875, %v1971
      %v1988 = vadd.f32 %v1876, %v1972
      %v1989 = vadd.f32 %v1877, %v1973
      %v1990 = vadd.f32 %v1878, %v1974
      %v1991 = vadd.f32 %v1879, %v1975
      %v1992 = vadd.f32 %v1880, %v1976
      %v1993 = vadd.f32 %v1881, %v1977
      %v1994 = vadd.f32 %v1882, %v1978
      %v1995 = vadd.f32 %v1883, %v1979
      %v1996 = vadd.f32 %v1884, %v1980
      %v1997 = vadd.f32 %v1885, %v1981
      %v1998 = vadd.f32 %v1886, %v1982
      %1999 = vset.pattern.permute.xlu0 10
      %2000 = vperm.xlu0 %1999, %v861
      %v2001 = vpop.permute.xlu0 %2000
      %2002 = vset.pattern.permute.xlu0 10
      %2003 = vperm.xlu0 %2002, %v862
      %v2004 = vpop.permute.xlu0 %2003
      %2005 = vset.pattern.permute.xlu0 10
      %2006 = vperm.xlu0 %2005, %v863
      %v2007 = vpop.permute.xlu0 %2006
      %2008 = vset.pattern.permute.xlu0 10
      %2009 = vperm.xlu0 %2008, %v864
      %v2010 = vpop.permute.xlu0 %2009
      %2011 = vset.pattern.permute.xlu0 10
      %2012 = vperm.xlu0 %2011, %v865
      %v2013 = vpop.permute.xlu0 %2012
      %2014 = vset.pattern.permute.xlu0 10
      %2015 = vperm.xlu0 %2014, %v866
      %v2016 = vpop.permute.xlu0 %2015
      %2017 = vset.pattern.permute.xlu0 10
      %2018 = vperm.xlu0 %2017, %v867
      %v2019 = vpop.permute.xlu0 %2018
      %2020 = vset.pattern.permute.xlu0 10
      %2021 = vperm.xlu0 %2020, %v868
      %v2022 = vpop.permute.xlu0 %2021
      %2023 = vset.pattern.permute.xlu0 10
      %2024 = vperm.xlu0 %2023, %v869
      %v2025 = vpop.permute.xlu0 %2024
      %2026 = vset.pattern.permute.xlu0 10
      %2027 = vperm.xlu0 %2026, %v870
      %v2028 = vpop.permute.xlu0 %2027
      %2029 = vset.pattern.permute.xlu0 10
      %2030 = vperm.xlu0 %2029, %v871
      %v2031 = vpop.permute.xlu0 %2030
      %2032 = vset.pattern.permute.xlu0 10
      %2033 = vperm.xlu0 %2032, %v872
      %v2034 = vpop.permute.xlu0 %2033
      %2035 = vset.pattern.permute.xlu0 10
      %2036 = vperm.xlu0 %2035, %v873
      %v2037 = vpop.permute.xlu0 %2036
      %2038 = vset.pattern.permute.xlu0 10
      %2039 = vperm.xlu0 %2038, %v874
      %v2040 = vpop.permute.xlu0 %2039
      %2041 = vset.pattern.permute.xlu0 10
      %2042 = vperm.xlu0 %2041, %v875
      %v2043 = vpop.permute.xlu0 %2042
      %2044 = vset.pattern.permute.xlu0 10
      %2045 = vperm.xlu0 %2044, %v876
      %v2046 = vpop.permute.xlu0 %2045
      %vm2047 = vcmp.eq.s32.totalorder %v2001, %v878
      %vm2048 = vcmp.eq.s32.totalorder %v2004, %v878
      %vm2049 = vcmp.eq.s32.totalorder %v2007, %v878
      %vm2050 = vcmp.eq.s32.totalorder %v2010, %v878
      %vm2051 = vcmp.eq.s32.totalorder %v2013, %v878
      %vm2052 = vcmp.eq.s32.totalorder %v2016, %v878
      %vm2053 = vcmp.eq.s32.totalorder %v2019, %v878
      %vm2054 = vcmp.eq.s32.totalorder %v2022, %v878
      %vm2055 = vcmp.eq.s32.totalorder %v2025, %v878
      %vm2056 = vcmp.eq.s32.totalorder %v2028, %v878
      %vm2057 = vcmp.eq.s32.totalorder %v2031, %v878
      %vm2058 = vcmp.eq.s32.totalorder %v2034, %v878
      %vm2059 = vcmp.eq.s32.totalorder %v2037, %v878
      %vm2060 = vcmp.eq.s32.totalorder %v2040, %v878
      %vm2061 = vcmp.eq.s32.totalorder %v2043, %v878
      %vm2062 = vcmp.eq.s32.totalorder %v2046, %v878
      %v2063 = vsel %vm2047, 1, 0
      %v2064 = vsel %vm2048, 1, 0
      %v2065 = vsel %vm2049, 1, 0
      %v2066 = vsel %vm2050, 1, 0
      %v2067 = vsel %vm2051, 1, 0
      %v2068 = vsel %vm2052, 1, 0
      %v2069 = vsel %vm2053, 1, 0
      %v2070 = vsel %vm2054, 1, 0
      %v2071 = vsel %vm2055, 1, 0
      %v2072 = vsel %vm2056, 1, 0
      %v2073 = vsel %vm2057, 1, 0
      %v2074 = vsel %vm2058, 1, 0
      %v2075 = vsel %vm2059, 1, 0
      %v2076 = vsel %vm2060, 1, 0
      %v2077 = vsel %vm2061, 1, 0
      %v2078 = vsel %vm2062, 1, 0
      %v2079 = vcvt.s32.f32 %v2063
      %v2080 = vcvt.s32.f32 %v2064
      %v2081 = vcvt.s32.f32 %v2065
      %v2082 = vcvt.s32.f32 %v2066
      %v2083 = vcvt.s32.f32 %v2067
      %v2084 = vcvt.s32.f32 %v2068
      %v2085 = vcvt.s32.f32 %v2069
      %v2086 = vcvt.s32.f32 %v2070
      %v2087 = vcvt.s32.f32 %v2071
      %v2088 = vcvt.s32.f32 %v2072
      %v2089 = vcvt.s32.f32 %v2073
      %v2090 = vcvt.s32.f32 %v2074
      %v2091 = vcvt.s32.f32 %v2075
      %v2092 = vcvt.s32.f32 %v2076
      %v2093 = vcvt.s32.f32 %v2077
      %v2094 = vcvt.s32.f32 %v2078
      %v2095 = vadd.f32 %v1983, %v2079
      %v2096 = vadd.f32 %v1984, %v2080
      %v2097 = vadd.f32 %v1985, %v2081
      %v2098 = vadd.f32 %v1986, %v2082
      %v2099 = vadd.f32 %v1987, %v2083
      %v2100 = vadd.f32 %v1988, %v2084
      %v2101 = vadd.f32 %v1989, %v2085
      %v2102 = vadd.f32 %v1990, %v2086
      %v2103 = vadd.f32 %v1991, %v2087
      %v2104 = vadd.f32 %v1992, %v2088
      %v2105 = vadd.f32 %v1993, %v2089
      %v2106 = vadd.f32 %v1994, %v2090
      %v2107 = vadd.f32 %v1995, %v2091
      %v2108 = vadd.f32 %v1996, %v2092
      %v2109 = vadd.f32 %v1997, %v2093
      %v2110 = vadd.f32 %v1998, %v2094
      %2111 = vset.pattern.permute.xlu0 11
      %2112 = vperm.xlu0 %2111, %v861
      %v2113 = vpop.permute.xlu0 %2112
      %2114 = vset.pattern.permute.xlu0 11
      %2115 = vperm.xlu0 %2114, %v862
      %v2116 = vpop.permute.xlu0 %2115
      %2117 = vset.pattern.permute.xlu0 11
      %2118 = vperm.xlu0 %2117, %v863
      %v2119 = vpop.permute.xlu0 %2118
      %2120 = vset.pattern.permute.xlu0 11
      %2121 = vperm.xlu0 %2120, %v864
      %v2122 = vpop.permute.xlu0 %2121
      %2123 = vset.pattern.permute.xlu0 11
      %2124 = vperm.xlu0 %2123, %v865
      %v2125 = vpop.permute.xlu0 %2124
      %2126 = vset.pattern.permute.xlu0 11
      %2127 = vperm.xlu0 %2126, %v866
      %v2128 = vpop.permute.xlu0 %2127
      %2129 = vset.pattern.permute.xlu0 11
      %2130 = vperm.xlu0 %2129, %v867
      %v2131 = vpop.permute.xlu0 %2130
      %2132 = vset.pattern.permute.xlu0 11
      %2133 = vperm.xlu0 %2132, %v868
      %v2134 = vpop.permute.xlu0 %2133
      %2135 = vset.pattern.permute.xlu0 11
      %2136 = vperm.xlu0 %2135, %v869
      %v2137 = vpop.permute.xlu0 %2136
      %2138 = vset.pattern.permute.xlu0 11
      %2139 = vperm.xlu0 %2138, %v870
      %v2140 = vpop.permute.xlu0 %2139
      %2141 = vset.pattern.permute.xlu0 11
      %2142 = vperm.xlu0 %2141, %v871
      %v2143 = vpop.permute.xlu0 %2142
      %2144 = vset.pattern.permute.xlu0 11
      %2145 = vperm.xlu0 %2144, %v872
      %v2146 = vpop.permute.xlu0 %2145
      %2147 = vset.pattern.permute.xlu0 11
      %2148 = vperm.xlu0 %2147, %v873
      %v2149 = vpop.permute.xlu0 %2148
      %2150 = vset.pattern.permute.xlu0 11
      %2151 = vperm.xlu0 %2150, %v874
      %v2152 = vpop.permute.xlu0 %2151
      %2153 = vset.pattern.permute.xlu0 11
      %2154 = vperm.xlu0 %2153, %v875
      %v2155 = vpop.permute.xlu0 %2154
      %2156 = vset.pattern.permute.xlu0 11
      %2157 = vperm.xlu0 %2156, %v876
      %v2158 = vpop.permute.xlu0 %2157
      %vm2159 = vcmp.eq.s32.totalorder %v2113, %v878
      %vm2160 = vcmp.eq.s32.totalorder %v2116, %v878
      %vm2161 = vcmp.eq.s32.totalorder %v2119, %v878
      %vm2162 = vcmp.eq.s32.totalorder %v2122, %v878
      %vm2163 = vcmp.eq.s32.totalorder %v2125, %v878
      %vm2164 = vcmp.eq.s32.totalorder %v2128, %v878
      %vm2165 = vcmp.eq.s32.totalorder %v2131, %v878
      %vm2166 = vcmp.eq.s32.totalorder %v2134, %v878
      %vm2167 = vcmp.eq.s32.totalorder %v2137, %v878
      %vm2168 = vcmp.eq.s32.totalorder %v2140, %v878
      %vm2169 = vcmp.eq.s32.totalorder %v2143, %v878
      %vm2170 = vcmp.eq.s32.totalorder %v2146, %v878
      %vm2171 = vcmp.eq.s32.totalorder %v2149, %v878
      %vm2172 = vcmp.eq.s32.totalorder %v2152, %v878
      %vm2173 = vcmp.eq.s32.totalorder %v2155, %v878
      %vm2174 = vcmp.eq.s32.totalorder %v2158, %v878
      %v2175 = vsel %vm2159, 1, 0
      %v2176 = vsel %vm2160, 1, 0
      %v2177 = vsel %vm2161, 1, 0
      %v2178 = vsel %vm2162, 1, 0
      %v2179 = vsel %vm2163, 1, 0
      %v2180 = vsel %vm2164, 1, 0
      %v2181 = vsel %vm2165, 1, 0
      %v2182 = vsel %vm2166, 1, 0
      %v2183 = vsel %vm2167, 1, 0
      %v2184 = vsel %vm2168, 1, 0
      %v2185 = vsel %vm2169, 1, 0
      %v2186 = vsel %vm2170, 1, 0
      %v2187 = vsel %vm2171, 1, 0
      %v2188 = vsel %vm2172, 1, 0
      %v2189 = vsel %vm2173, 1, 0
      %v2190 = vsel %vm2174, 1, 0
      %v2191 = vcvt.s32.f32 %v2175
      %v2192 = vcvt.s32.f32 %v2176
      %v2193 = vcvt.s32.f32 %v2177
      %v2194 = vcvt.s32.f32 %v2178
      %v2195 = vcvt.s32.f32 %v2179
      %v2196 = vcvt.s32.f32 %v2180
      %v2197 = vcvt.s32.f32 %v2181
      %v2198 = vcvt.s32.f32 %v2182
      %v2199 = vcvt.s32.f32 %v2183
      %v2200 = vcvt.s32.f32 %v2184
      %v2201 = vcvt.s32.f32 %v2185
      %v2202 = vcvt.s32.f32 %v2186
      %v2203 = vcvt.s32.f32 %v2187
      %v2204 = vcvt.s32.f32 %v2188
      %v2205 = vcvt.s32.f32 %v2189
      %v2206 = vcvt.s32.f32 %v2190
      %v2207 = vadd.f32 %v2095, %v2191
      %v2208 = vadd.f32 %v2096, %v2192
      %v2209 = vadd.f32 %v2097, %v2193
      %v2210 = vadd.f32 %v2098, %v2194
      %v2211 = vadd.f32 %v2099, %v2195
      %v2212 = vadd.f32 %v2100, %v2196
      %v2213 = vadd.f32 %v2101, %v2197
      %v2214 = vadd.f32 %v2102, %v2198
      %v2215 = vadd.f32 %v2103, %v2199
      %v2216 = vadd.f32 %v2104, %v2200
      %v2217 = vadd.f32 %v2105, %v2201
      %v2218 = vadd.f32 %v2106, %v2202
      %v2219 = vadd.f32 %v2107, %v2203
      %v2220 = vadd.f32 %v2108, %v2204
      %v2221 = vadd.f32 %v2109, %v2205
      %v2222 = vadd.f32 %v2110, %v2206
      %2223 = vset.pattern.permute.xlu0 12
      %2224 = vperm.xlu0 %2223, %v861
      %v2225 = vpop.permute.xlu0 %2224
      %2226 = vset.pattern.permute.xlu0 12
      %2227 = vperm.xlu0 %2226, %v862
      %v2228 = vpop.permute.xlu0 %2227
      %2229 = vset.pattern.permute.xlu0 12
      %2230 = vperm.xlu0 %2229, %v863
      %v2231 = vpop.permute.xlu0 %2230
      %2232 = vset.pattern.permute.xlu0 12
      %2233 = vperm.xlu0 %2232, %v864
      %v2234 = vpop.permute.xlu0 %2233
      %2235 = vset.pattern.permute.xlu0 12
      %2236 = vperm.xlu0 %2235, %v865
      %v2237 = vpop.permute.xlu0 %2236
      %2238 = vset.pattern.permute.xlu0 12
      %2239 = vperm.xlu0 %2238, %v866
      %v2240 = vpop.permute.xlu0 %2239
      %2241 = vset.pattern.permute.xlu0 12
      %2242 = vperm.xlu0 %2241, %v867
      %v2243 = vpop.permute.xlu0 %2242
      %2244 = vset.pattern.permute.xlu0 12
      %2245 = vperm.xlu0 %2244, %v868
      %v2246 = vpop.permute.xlu0 %2245
      %2247 = vset.pattern.permute.xlu0 12
      %2248 = vperm.xlu0 %2247, %v869
      %v2249 = vpop.permute.xlu0 %2248
      %2250 = vset.pattern.permute.xlu0 12
      %2251 = vperm.xlu0 %2250, %v870
      %v2252 = vpop.permute.xlu0 %2251
      %2253 = vset.pattern.permute.xlu0 12
      %2254 = vperm.xlu0 %2253, %v871
      %v2255 = vpop.permute.xlu0 %2254
      %2256 = vset.pattern.permute.xlu0 12
      %2257 = vperm.xlu0 %2256, %v872
      %v2258 = vpop.permute.xlu0 %2257
      %2259 = vset.pattern.permute.xlu0 12
      %2260 = vperm.xlu0 %2259, %v873
      %v2261 = vpop.permute.xlu0 %2260
      %2262 = vset.pattern.permute.xlu0 12
      %2263 = vperm.xlu0 %2262, %v874
      %v2264 = vpop.permute.xlu0 %2263
      %2265 = vset.pattern.permute.xlu0 12
      %2266 = vperm.xlu0 %2265, %v875
      %v2267 = vpop.permute.xlu0 %2266
      %2268 = vset.pattern.permute.xlu0 12
      %2269 = vperm.xlu0 %2268, %v876
      %v2270 = vpop.permute.xlu0 %2269
      %vm2271 = vcmp.eq.s32.totalorder %v2225, %v878
      %vm2272 = vcmp.eq.s32.totalorder %v2228, %v878
      %vm2273 = vcmp.eq.s32.totalorder %v2231, %v878
      %vm2274 = vcmp.eq.s32.totalorder %v2234, %v878
      %vm2275 = vcmp.eq.s32.totalorder %v2237, %v878
      %vm2276 = vcmp.eq.s32.totalorder %v2240, %v878
      %vm2277 = vcmp.eq.s32.totalorder %v2243, %v878
      %vm2278 = vcmp.eq.s32.totalorder %v2246, %v878
      %vm2279 = vcmp.eq.s32.totalorder %v2249, %v878
      %vm2280 = vcmp.eq.s32.totalorder %v2252, %v878
      %vm2281 = vcmp.eq.s32.totalorder %v2255, %v878
      %vm2282 = vcmp.eq.s32.totalorder %v2258, %v878
      %vm2283 = vcmp.eq.s32.totalorder %v2261, %v878
      %vm2284 = vcmp.eq.s32.totalorder %v2264, %v878
      %vm2285 = vcmp.eq.s32.totalorder %v2267, %v878
      %vm2286 = vcmp.eq.s32.totalorder %v2270, %v878
      %v2287 = vsel %vm2271, 1, 0
      %v2288 = vsel %vm2272, 1, 0
      %v2289 = vsel %vm2273, 1, 0
      %v2290 = vsel %vm2274, 1, 0
      %v2291 = vsel %vm2275, 1, 0
      %v2292 = vsel %vm2276, 1, 0
      %v2293 = vsel %vm2277, 1, 0
      %v2294 = vsel %vm2278, 1, 0
      %v2295 = vsel %vm2279, 1, 0
      %v2296 = vsel %vm2280, 1, 0
      %v2297 = vsel %vm2281, 1, 0
      %v2298 = vsel %vm2282, 1, 0
      %v2299 = vsel %vm2283, 1, 0
      %v2300 = vsel %vm2284, 1, 0
      %v2301 = vsel %vm2285, 1, 0
      %v2302 = vsel %vm2286, 1, 0
      %v2303 = vcvt.s32.f32 %v2287
      %v2304 = vcvt.s32.f32 %v2288
      %v2305 = vcvt.s32.f32 %v2289
      %v2306 = vcvt.s32.f32 %v2290
      %v2307 = vcvt.s32.f32 %v2291
      %v2308 = vcvt.s32.f32 %v2292
      %v2309 = vcvt.s32.f32 %v2293
      %v2310 = vcvt.s32.f32 %v2294
      %v2311 = vcvt.s32.f32 %v2295
      %v2312 = vcvt.s32.f32 %v2296
      %v2313 = vcvt.s32.f32 %v2297
      %v2314 = vcvt.s32.f32 %v2298
      %v2315 = vcvt.s32.f32 %v2299
      %v2316 = vcvt.s32.f32 %v2300
      %v2317 = vcvt.s32.f32 %v2301
      %v2318 = vcvt.s32.f32 %v2302
      %v2319 = vadd.f32 %v2207, %v2303
      %v2320 = vadd.f32 %v2208, %v2304
      %v2321 = vadd.f32 %v2209, %v2305
      %v2322 = vadd.f32 %v2210, %v2306
      %v2323 = vadd.f32 %v2211, %v2307
      %v2324 = vadd.f32 %v2212, %v2308
      %v2325 = vadd.f32 %v2213, %v2309
      %v2326 = vadd.f32 %v2214, %v2310
      %v2327 = vadd.f32 %v2215, %v2311
      %v2328 = vadd.f32 %v2216, %v2312
      %v2329 = vadd.f32 %v2217, %v2313
      %v2330 = vadd.f32 %v2218, %v2314
      %v2331 = vadd.f32 %v2219, %v2315
      %v2332 = vadd.f32 %v2220, %v2316
      %v2333 = vadd.f32 %v2221, %v2317
      %v2334 = vadd.f32 %v2222, %v2318
      %2335 = vset.pattern.permute.xlu0 13
      %2336 = vperm.xlu0 %2335, %v861
      %v2337 = vpop.permute.xlu0 %2336
      %2338 = vset.pattern.permute.xlu0 13
      %2339 = vperm.xlu0 %2338, %v862
      %v2340 = vpop.permute.xlu0 %2339
      %2341 = vset.pattern.permute.xlu0 13
      %2342 = vperm.xlu0 %2341, %v863
      %v2343 = vpop.permute.xlu0 %2342
      %2344 = vset.pattern.permute.xlu0 13
      %2345 = vperm.xlu0 %2344, %v864
      %v2346 = vpop.permute.xlu0 %2345
      %2347 = vset.pattern.permute.xlu0 13
      %2348 = vperm.xlu0 %2347, %v865
      %v2349 = vpop.permute.xlu0 %2348
      %2350 = vset.pattern.permute.xlu0 13
      %2351 = vperm.xlu0 %2350, %v866
      %v2352 = vpop.permute.xlu0 %2351
      %2353 = vset.pattern.permute.xlu0 13
      %2354 = vperm.xlu0 %2353, %v867
      %v2355 = vpop.permute.xlu0 %2354
      %2356 = vset.pattern.permute.xlu0 13
      %2357 = vperm.xlu0 %2356, %v868
      %v2358 = vpop.permute.xlu0 %2357
      %2359 = vset.pattern.permute.xlu0 13
      %2360 = vperm.xlu0 %2359, %v869
      %v2361 = vpop.permute.xlu0 %2360
      %2362 = vset.pattern.permute.xlu0 13
      %2363 = vperm.xlu0 %2362, %v870
      %v2364 = vpop.permute.xlu0 %2363
      %2365 = vset.pattern.permute.xlu0 13
      %2366 = vperm.xlu0 %2365, %v871
      %v2367 = vpop.permute.xlu0 %2366
      %2368 = vset.pattern.permute.xlu0 13
      %2369 = vperm.xlu0 %2368, %v872
      %v2370 = vpop.permute.xlu0 %2369
      %2371 = vset.pattern.permute.xlu0 13
      %2372 = vperm.xlu0 %2371, %v873
      %v2373 = vpop.permute.xlu0 %2372
      %2374 = vset.pattern.permute.xlu0 13
      %2375 = vperm.xlu0 %2374, %v874
      %v2376 = vpop.permute.xlu0 %2375
      %2377 = vset.pattern.permute.xlu0 13
      %2378 = vperm.xlu0 %2377, %v875
      %v2379 = vpop.permute.xlu0 %2378
      %2380 = vset.pattern.permute.xlu0 13
      %2381 = vperm.xlu0 %2380, %v876
      %v2382 = vpop.permute.xlu0 %2381
      %vm2383 = vcmp.eq.s32.totalorder %v2337, %v878
      %vm2384 = vcmp.eq.s32.totalorder %v2340, %v878
      %vm2385 = vcmp.eq.s32.totalorder %v2343, %v878
      %vm2386 = vcmp.eq.s32.totalorder %v2346, %v878
      %vm2387 = vcmp.eq.s32.totalorder %v2349, %v878
      %vm2388 = vcmp.eq.s32.totalorder %v2352, %v878
      %vm2389 = vcmp.eq.s32.totalorder %v2355, %v878
      %vm2390 = vcmp.eq.s32.totalorder %v2358, %v878
      %vm2391 = vcmp.eq.s32.totalorder %v2361, %v878
      %vm2392 = vcmp.eq.s32.totalorder %v2364, %v878
      %vm2393 = vcmp.eq.s32.totalorder %v2367, %v878
      %vm2394 = vcmp.eq.s32.totalorder %v2370, %v878
      %vm2395 = vcmp.eq.s32.totalorder %v2373, %v878
      %vm2396 = vcmp.eq.s32.totalorder %v2376, %v878
      %vm2397 = vcmp.eq.s32.totalorder %v2379, %v878
      %vm2398 = vcmp.eq.s32.totalorder %v2382, %v878
      %v2399 = vsel %vm2383, 1, 0
      %v2400 = vsel %vm2384, 1, 0
      %v2401 = vsel %vm2385, 1, 0
      %v2402 = vsel %vm2386, 1, 0
      %v2403 = vsel %vm2387, 1, 0
      %v2404 = vsel %vm2388, 1, 0
      %v2405 = vsel %vm2389, 1, 0
      %v2406 = vsel %vm2390, 1, 0
      %v2407 = vsel %vm2391, 1, 0
      %v2408 = vsel %vm2392, 1, 0
      %v2409 = vsel %vm2393, 1, 0
      %v2410 = vsel %vm2394, 1, 0
      %v2411 = vsel %vm2395, 1, 0
      %v2412 = vsel %vm2396, 1, 0
      %v2413 = vsel %vm2397, 1, 0
      %v2414 = vsel %vm2398, 1, 0
      %v2415 = vcvt.s32.f32 %v2399
      %v2416 = vcvt.s32.f32 %v2400
      %v2417 = vcvt.s32.f32 %v2401
      %v2418 = vcvt.s32.f32 %v2402
      %v2419 = vcvt.s32.f32 %v2403
      %v2420 = vcvt.s32.f32 %v2404
      %v2421 = vcvt.s32.f32 %v2405
      %v2422 = vcvt.s32.f32 %v2406
      %v2423 = vcvt.s32.f32 %v2407
      %v2424 = vcvt.s32.f32 %v2408
      %v2425 = vcvt.s32.f32 %v2409
      %v2426 = vcvt.s32.f32 %v2410
      %v2427 = vcvt.s32.f32 %v2411
      %v2428 = vcvt.s32.f32 %v2412
      %v2429 = vcvt.s32.f32 %v2413
      %v2430 = vcvt.s32.f32 %v2414
      %v2431 = vadd.f32 %v2319, %v2415
      %v2432 = vadd.f32 %v2320, %v2416
      %v2433 = vadd.f32 %v2321, %v2417
      %v2434 = vadd.f32 %v2322, %v2418
      %v2435 = vadd.f32 %v2323, %v2419
      %v2436 = vadd.f32 %v2324, %v2420
      %v2437 = vadd.f32 %v2325, %v2421
      %v2438 = vadd.f32 %v2326, %v2422
      %v2439 = vadd.f32 %v2327, %v2423
      %v2440 = vadd.f32 %v2328, %v2424
      %v2441 = vadd.f32 %v2329, %v2425
      %v2442 = vadd.f32 %v2330, %v2426
      %v2443 = vadd.f32 %v2331, %v2427
      %v2444 = vadd.f32 %v2332, %v2428
      %v2445 = vadd.f32 %v2333, %v2429
      %v2446 = vadd.f32 %v2334, %v2430
      %2447 = vset.pattern.permute.xlu0 14
      %2448 = vperm.xlu0 %2447, %v861
      %v2449 = vpop.permute.xlu0 %2448
      %2450 = vset.pattern.permute.xlu0 14
      %2451 = vperm.xlu0 %2450, %v862
      %v2452 = vpop.permute.xlu0 %2451
      %2453 = vset.pattern.permute.xlu0 14
      %2454 = vperm.xlu0 %2453, %v863
      %v2455 = vpop.permute.xlu0 %2454
      %2456 = vset.pattern.permute.xlu0 14
      %2457 = vperm.xlu0 %2456, %v864
      %v2458 = vpop.permute.xlu0 %2457
      %2459 = vset.pattern.permute.xlu0 14
      %2460 = vperm.xlu0 %2459, %v865
      %v2461 = vpop.permute.xlu0 %2460
      %2462 = vset.pattern.permute.xlu0 14
      %2463 = vperm.xlu0 %2462, %v866
      %v2464 = vpop.permute.xlu0 %2463
      %2465 = vset.pattern.permute.xlu0 14
      %2466 = vperm.xlu0 %2465, %v867
      %v2467 = vpop.permute.xlu0 %2466
      %2468 = vset.pattern.permute.xlu0 14
      %2469 = vperm.xlu0 %2468, %v868
      %v2470 = vpop.permute.xlu0 %2469
      %2471 = vset.pattern.permute.xlu0 14
      %2472 = vperm.xlu0 %2471, %v869
      %v2473 = vpop.permute.xlu0 %2472
      %2474 = vset.pattern.permute.xlu0 14
      %2475 = vperm.xlu0 %2474, %v870
      %v2476 = vpop.permute.xlu0 %2475
      %2477 = vset.pattern.permute.xlu0 14
      %2478 = vperm.xlu0 %2477, %v871
      %v2479 = vpop.permute.xlu0 %2478
      %2480 = vset.pattern.permute.xlu0 14
      %2481 = vperm.xlu0 %2480, %v872
      %v2482 = vpop.permute.xlu0 %2481
      %2483 = vset.pattern.permute.xlu0 14
      %2484 = vperm.xlu0 %2483, %v873
      %v2485 = vpop.permute.xlu0 %2484
      %2486 = vset.pattern.permute.xlu0 14
      %2487 = vperm.xlu0 %2486, %v874
      %v2488 = vpop.permute.xlu0 %2487
      %2489 = vset.pattern.permute.xlu0 14
      %2490 = vperm.xlu0 %2489, %v875
      %v2491 = vpop.permute.xlu0 %2490
      %2492 = vset.pattern.permute.xlu0 14
      %2493 = vperm.xlu0 %2492, %v876
      %v2494 = vpop.permute.xlu0 %2493
      %vm2495 = vcmp.eq.s32.totalorder %v2449, %v878
      %vm2496 = vcmp.eq.s32.totalorder %v2452, %v878
      %vm2497 = vcmp.eq.s32.totalorder %v2455, %v878
      %vm2498 = vcmp.eq.s32.totalorder %v2458, %v878
      %vm2499 = vcmp.eq.s32.totalorder %v2461, %v878
      %vm2500 = vcmp.eq.s32.totalorder %v2464, %v878
      %vm2501 = vcmp.eq.s32.totalorder %v2467, %v878
      %vm2502 = vcmp.eq.s32.totalorder %v2470, %v878
      %vm2503 = vcmp.eq.s32.totalorder %v2473, %v878
      %vm2504 = vcmp.eq.s32.totalorder %v2476, %v878
      %vm2505 = vcmp.eq.s32.totalorder %v2479, %v878
      %vm2506 = vcmp.eq.s32.totalorder %v2482, %v878
      %vm2507 = vcmp.eq.s32.totalorder %v2485, %v878
      %vm2508 = vcmp.eq.s32.totalorder %v2488, %v878
      %vm2509 = vcmp.eq.s32.totalorder %v2491, %v878
      %vm2510 = vcmp.eq.s32.totalorder %v2494, %v878
      %v2511 = vsel %vm2495, 1, 0
      %v2512 = vsel %vm2496, 1, 0
      %v2513 = vsel %vm2497, 1, 0
      %v2514 = vsel %vm2498, 1, 0
      %v2515 = vsel %vm2499, 1, 0
      %v2516 = vsel %vm2500, 1, 0
      %v2517 = vsel %vm2501, 1, 0
      %v2518 = vsel %vm2502, 1, 0
      %v2519 = vsel %vm2503, 1, 0
      %v2520 = vsel %vm2504, 1, 0
      %v2521 = vsel %vm2505, 1, 0
      %v2522 = vsel %vm2506, 1, 0
      %v2523 = vsel %vm2507, 1, 0
      %v2524 = vsel %vm2508, 1, 0
      %v2525 = vsel %vm2509, 1, 0
      %v2526 = vsel %vm2510, 1, 0
      %v2527 = vcvt.s32.f32 %v2511
      %v2528 = vcvt.s32.f32 %v2512
      %v2529 = vcvt.s32.f32 %v2513
      %v2530 = vcvt.s32.f32 %v2514
      %v2531 = vcvt.s32.f32 %v2515
      %v2532 = vcvt.s32.f32 %v2516
      %v2533 = vcvt.s32.f32 %v2517
      %v2534 = vcvt.s32.f32 %v2518
      %v2535 = vcvt.s32.f32 %v2519
      %v2536 = vcvt.s32.f32 %v2520
      %v2537 = vcvt.s32.f32 %v2521
      %v2538 = vcvt.s32.f32 %v2522
      %v2539 = vcvt.s32.f32 %v2523
      %v2540 = vcvt.s32.f32 %v2524
      %v2541 = vcvt.s32.f32 %v2525
      %v2542 = vcvt.s32.f32 %v2526
      %v2543 = vadd.f32 %v2431, %v2527
      %v2544 = vadd.f32 %v2432, %v2528
      %v2545 = vadd.f32 %v2433, %v2529
      %v2546 = vadd.f32 %v2434, %v2530
      %v2547 = vadd.f32 %v2435, %v2531
      %v2548 = vadd.f32 %v2436, %v2532
      %v2549 = vadd.f32 %v2437, %v2533
      %v2550 = vadd.f32 %v2438, %v2534
      %v2551 = vadd.f32 %v2439, %v2535
      %v2552 = vadd.f32 %v2440, %v2536
      %v2553 = vadd.f32 %v2441, %v2537
      %v2554 = vadd.f32 %v2442, %v2538
      %v2555 = vadd.f32 %v2443, %v2539
      %v2556 = vadd.f32 %v2444, %v2540
      %v2557 = vadd.f32 %v2445, %v2541
      %v2558 = vadd.f32 %v2446, %v2542
      %2559 = vset.pattern.permute.xlu0 15
      %2560 = vperm.xlu0 %2559, %v861
      %v2561 = vpop.permute.xlu0 %2560
      %2562 = vset.pattern.permute.xlu0 15
      %2563 = vperm.xlu0 %2562, %v862
      %v2564 = vpop.permute.xlu0 %2563
      %2565 = vset.pattern.permute.xlu0 15
      %2566 = vperm.xlu0 %2565, %v863
      %v2567 = vpop.permute.xlu0 %2566
      %2568 = vset.pattern.permute.xlu0 15
      %2569 = vperm.xlu0 %2568, %v864
      %v2570 = vpop.permute.xlu0 %2569
      %2571 = vset.pattern.permute.xlu0 15
      %2572 = vperm.xlu0 %2571, %v865
      %v2573 = vpop.permute.xlu0 %2572
      %2574 = vset.pattern.permute.xlu0 15
      %2575 = vperm.xlu0 %2574, %v866
      %v2576 = vpop.permute.xlu0 %2575
      %2577 = vset.pattern.permute.xlu0 15
      %2578 = vperm.xlu0 %2577, %v867
      %v2579 = vpop.permute.xlu0 %2578
      %2580 = vset.pattern.permute.xlu0 15
      %2581 = vperm.xlu0 %2580, %v868
      %v2582 = vpop.permute.xlu0 %2581
      %2583 = vset.pattern.permute.xlu0 15
      %2584 = vperm.xlu0 %2583, %v869
      %v2585 = vpop.permute.xlu0 %2584
      %2586 = vset.pattern.permute.xlu0 15
      %2587 = vperm.xlu0 %2586, %v870
      %v2588 = vpop.permute.xlu0 %2587
      %2589 = vset.pattern.permute.xlu0 15
      %2590 = vperm.xlu0 %2589, %v871
      %v2591 = vpop.permute.xlu0 %2590
      %2592 = vset.pattern.permute.xlu0 15
      %2593 = vperm.xlu0 %2592, %v872
      %v2594 = vpop.permute.xlu0 %2593
      %2595 = vset.pattern.permute.xlu0 15
      %2596 = vperm.xlu0 %2595, %v873
      %v2597 = vpop.permute.xlu0 %2596
      %2598 = vset.pattern.permute.xlu0 15
      %2599 = vperm.xlu0 %2598, %v874
      %v2600 = vpop.permute.xlu0 %2599
      %2601 = vset.pattern.permute.xlu0 15
      %2602 = vperm.xlu0 %2601, %v875
      %v2603 = vpop.permute.xlu0 %2602
      %2604 = vset.pattern.permute.xlu0 15
      %2605 = vperm.xlu0 %2604, %v876
      %v2606 = vpop.permute.xlu0 %2605
      %vm2607 = vcmp.eq.s32.totalorder %v2561, %v878
      %vm2608 = vcmp.eq.s32.totalorder %v2564, %v878
      %vm2609 = vcmp.eq.s32.totalorder %v2567, %v878
      %vm2610 = vcmp.eq.s32.totalorder %v2570, %v878
      %vm2611 = vcmp.eq.s32.totalorder %v2573, %v878
      %vm2612 = vcmp.eq.s32.totalorder %v2576, %v878
      %vm2613 = vcmp.eq.s32.totalorder %v2579, %v878
      %vm2614 = vcmp.eq.s32.totalorder %v2582, %v878
      %vm2615 = vcmp.eq.s32.totalorder %v2585, %v878
      %vm2616 = vcmp.eq.s32.totalorder %v2588, %v878
      %vm2617 = vcmp.eq.s32.totalorder %v2591, %v878
      %vm2618 = vcmp.eq.s32.totalorder %v2594, %v878
      %vm2619 = vcmp.eq.s32.totalorder %v2597, %v878
      %vm2620 = vcmp.eq.s32.totalorder %v2600, %v878
      %vm2621 = vcmp.eq.s32.totalorder %v2603, %v878
      %vm2622 = vcmp.eq.s32.totalorder %v2606, %v878
      %v2623 = vsel %vm2607, 1, 0
      %v2624 = vsel %vm2608, 1, 0
      %v2625 = vsel %vm2609, 1, 0
      %v2626 = vsel %vm2610, 1, 0
      %v2627 = vsel %vm2611, 1, 0
      %v2628 = vsel %vm2612, 1, 0
      %v2629 = vsel %vm2613, 1, 0
      %v2630 = vsel %vm2614, 1, 0
      %v2631 = vsel %vm2615, 1, 0
      %v2632 = vsel %vm2616, 1, 0
      %v2633 = vsel %vm2617, 1, 0
      %v2634 = vsel %vm2618, 1, 0
      %v2635 = vsel %vm2619, 1, 0
      %v2636 = vsel %vm2620, 1, 0
      %v2637 = vsel %vm2621, 1, 0
      %v2638 = vsel %vm2622, 1, 0
      %v2639 = vcvt.s32.f32 %v2623
      %v2640 = vcvt.s32.f32 %v2624
      %v2641 = vcvt.s32.f32 %v2625
      %v2642 = vcvt.s32.f32 %v2626
      %v2643 = vcvt.s32.f32 %v2627
      %v2644 = vcvt.s32.f32 %v2628
      %v2645 = vcvt.s32.f32 %v2629
      %v2646 = vcvt.s32.f32 %v2630
      %v2647 = vcvt.s32.f32 %v2631
      %v2648 = vcvt.s32.f32 %v2632
      %v2649 = vcvt.s32.f32 %v2633
      %v2650 = vcvt.s32.f32 %v2634
      %v2651 = vcvt.s32.f32 %v2635
      %v2652 = vcvt.s32.f32 %v2636
      %v2653 = vcvt.s32.f32 %v2637
      %v2654 = vcvt.s32.f32 %v2638
      %v2655 = vadd.f32 %v2543, %v2639
      %v2656 = vadd.f32 %v2544, %v2640
      %v2657 = vadd.f32 %v2545, %v2641
      %v2658 = vadd.f32 %v2546, %v2642
      %v2659 = vadd.f32 %v2547, %v2643
      %v2660 = vadd.f32 %v2548, %v2644
      %v2661 = vadd.f32 %v2549, %v2645
      %v2662 = vadd.f32 %v2550, %v2646
      %v2663 = vadd.f32 %v2551, %v2647
      %v2664 = vadd.f32 %v2552, %v2648
      %v2665 = vadd.f32 %v2553, %v2649
      %v2666 = vadd.f32 %v2554, %v2650
      %v2667 = vadd.f32 %v2555, %v2651
      %v2668 = vadd.f32 %v2556, %v2652
      %v2669 = vadd.f32 %v2557, %v2653
      %v2670 = vadd.f32 %v2558, %v2654
      %v2671 = vpack.c.bf16 %v2656, %v2655
      %v2672 = vpack.c.bf16 %v2658, %v2657
      %v2673 = vpack.c.bf16 %v2660, %v2659
      %v2674 = vpack.c.bf16 %v2662, %v2661
      %v2675 = vpack.c.bf16 %v2664, %v2663
      %v2676 = vpack.c.bf16 %v2666, %v2665
      %v2677 = vpack.c.bf16 %v2668, %v2667
      %v2678 = vpack.c.bf16 %v2670, %v2669
      %v2679 = vld [vmem:[%s2] sm:$0xf]
      %v2680 = vld [vmem:[%s2 + $0x4] sm:$0xf]
      %v2681 = vld [vmem:[%s2 + $0x8] sm:$0xf]
      %v2682 = vld [vmem:[%s2 + $0xc] sm:$0xf]
      %v2683 = vld [vmem:[%s2 + $0x10] sm:$0xf]
      %v2684 = vld [vmem:[%s2 + $0x14] sm:$0xf]
      %v2685 = vld [vmem:[%s2 + $0x18] sm:$0xf]
      %v2686 = vld [vmem:[%s2 + $0x1c] sm:$0xf]
      %v2687 = vld [vmem:[%s2 + $0x20] sm:$0xf]
      %v2688 = vld [vmem:[%s2 + $0x24] sm:$0xf]
      %v2689 = vld [vmem:[%s2 + $0x28] sm:$0xf]
      %v2690 = vld [vmem:[%s2 + $0x2c] sm:$0xf]
      %v2691 = vld [vmem:[%s2 + $0x30] sm:$0xf]
      %v2692 = vld [vmem:[%s2 + $0x34] sm:$0xf]
      %v2693 = vld [vmem:[%s2 + $0x38] sm:$0xf]
      %v2694 = vld [vmem:[%s2 + $0x3c] sm:$0xf]
      %v2711 = vunpack.c.l.b16 %v2679
      %v2712 = vunpack.c.l.b16 %v2680
      %v2713 = vunpack.c.l.b16 %v2681
      %v2714 = vunpack.c.l.b16 %v2682
      %v2715 = vunpack.c.l.b16 %v2683
      %v2716 = vunpack.c.l.b16 %v2684
      %v2717 = vunpack.c.l.b16 %v2685
      %v2718 = vunpack.c.l.b16 %v2686
      %v2719 = vunpack.c.l.b16 %v2687
      %v2720 = vunpack.c.l.b16 %v2688
      %v2721 = vunpack.c.l.b16 %v2689
      %v2722 = vunpack.c.l.b16 %v2690
      %v2723 = vunpack.c.l.b16 %v2691
      %v2724 = vunpack.c.l.b16 %v2692
      %v2725 = vunpack.c.l.b16 %v2693
      %v2726 = vunpack.c.l.b16 %v2694
      %v2727 = vpack.c.b16 %v2712, %v2711
      %v2728 = vpack.c.b16 %v2714, %v2713
      %v2729 = vpack.c.b16 %v2716, %v2715
      %v2730 = vpack.c.b16 %v2718, %v2717
      %v2731 = vpack.c.b16 %v2720, %v2719
      %v2732 = vpack.c.b16 %v2722, %v2721
      %v2733 = vpack.c.b16 %v2724, %v2723
      %v2734 = vpack.c.b16 %v2726, %v2725
      %2743 = vmatprep.subr.bf16.mxu0 0
      %2744 = vmatpush1.bf16.msra.mxu0 %v2727
      %2745 = vmatprep.subr.bf16.mxu0 0
      %2746 = vmatpush1.bf16.msra.mxu0 %v2728
      %2747 = vmatprep.subr.bf16.mxu0 0
      %2748 = vmatpush1.bf16.msra.mxu0 %v2729
      %2749 = vmatprep.subr.bf16.mxu0 0
      %2750 = vmatpush1.bf16.msra.mxu0 %v2730
      %2751 = vmatprep.subr.bf16.mxu0 0
      %2752 = vmatpush1.bf16.msra.mxu0 %v2731
      %2753 = vmatprep.subr.bf16.mxu0 0
      %2754 = vmatpush1.bf16.msra.mxu0 %v2732
      %2755 = vmatprep.subr.bf16.mxu0 0
      %2756 = vmatpush1.bf16.msra.mxu0 %v2733
      %2757 = vmatprep.subr.bf16.mxu0 0
      %2758 = vmatpush1.bf16.msra.mxu0 %v2734
      %2759 = vmatprep.subr.bf16.mxu0 0
      %2760 = vmatpush1.bf16.msra.mxu0 0
      %2761 = vmatprep.subr.bf16.mxu0 0
      %2762 = vmatpush1.bf16.msra.mxu0 0
      %2763 = vmatprep.subr.bf16.mxu0 0
      %2764 = vmatpush1.bf16.msra.mxu0 0
      %2765 = vmatprep.subr.bf16.mxu0 0
      %2766 = vmatpush1.bf16.msra.mxu0 0
      %2767 = vmatprep.subr.bf16.mxu0 0
      %2768 = vmatpush1.bf16.msra.mxu0 0
      %2769 = vmatprep.subr.bf16.mxu0 0
      %2770 = vmatpush1.bf16.msra.mxu0 0
      %2771 = vmatprep.subr.bf16.mxu0 0
      %2772 = vmatpush1.bf16.msra.mxu0 0
      %2773 = vmatprep.subr.bf16.mxu0 0
      %2774 = vmatpush1.bf16.msra.mxu0 0
      %2775 = vmatprep.mubr.bf16.mxu0 0
      %2776 = vmatmul.mubr.bf16.gmra.mrb[0].mxu0 %v2671
      %v2777 = vpop.f32.mrb[0].mxu0
      %v2778 = vadd.f32 0.0, %v2777
      %v2779 = vpop.f32.mrb[0].mxu0
      %v2780 = vpop.f32.mrb[0].mxu0
      %v2781 = vadd.f32 0.0, %v2780
      %v2782 = vpop.f32.mrb[0].mxu0
      %2783 = vmatprep.mubr.bf16.mxu0 0
      %2784 = vmatmul.mubr.bf16.gmra.mrb[0].mxu0 %v2672
      %v2785 = vpop.f32.mrb[0].mxu0
      %v2786 = vadd.f32 0.0, %v2785
      %v2787 = vpop.f32.mrb[0].mxu0
      %v2788 = vpop.f32.mrb[0].mxu0
      %v2789 = vadd.f32 0.0, %v2788
      %v2790 = vpop.f32.mrb[0].mxu0
      %2791 = vmatprep.mubr.bf16.mxu0 0
      %2792 = vmatmul.mubr.bf16.gmra.mrb[0].mxu0 %v2673
      %v2793 = vpop.f32.mrb[0].mxu0
      %v2794 = vadd.f32 0.0, %v2793
      %v2795 = vpop.f32.mrb[0].mxu0
      %v2796 = vpop.f32.mrb[0].mxu0
      %v2797 = vadd.f32 0.0, %v2796
      %v2798 = vpop.f32.mrb[0].mxu0
      %2799 = vmatprep.mubr.bf16.mxu0 0
      %2800 = vmatmul.mubr.bf16.gmra.mrb[0].mxu0 %v2674
      %v2801 = vpop.f32.mrb[0].mxu0
      %v2802 = vadd.f32 0.0, %v2801
      %v2803 = vpop.f32.mrb[0].mxu0
      %v2804 = vpop.f32.mrb[0].mxu0
      %v2805 = vadd.f32 0.0, %v2804
      %v2806 = vpop.f32.mrb[0].mxu0
      %2807 = vmatprep.mubr.bf16.mxu0 0
      %2808 = vmatmul.mubr.bf16.gmra.mrb[0].mxu0 %v2675
      %v2809 = vpop.f32.mrb[0].mxu0
      %v2810 = vadd.f32 0.0, %v2809
      %v2811 = vpop.f32.mrb[0].mxu0
      %v2812 = vpop.f32.mrb[0].mxu0
      %v2813 = vadd.f32 0.0, %v2812
      %v2814 = vpop.f32.mrb[0].mxu0
      %2815 = vmatprep.mubr.bf16.mxu0 0
      %2816 = vmatmul.mubr.bf16.gmra.mrb[0].mxu0 %v2676
      %v2817 = vpop.f32.mrb[0].mxu0
      %v2818 = vadd.f32 0.0, %v2817
      %v2819 = vpop.f32.mrb[0].mxu0
      %v2820 = vpop.f32.mrb[0].mxu0
      %v2821 = vadd.f32 0.0, %v2820
      %v2822 = vpop.f32.mrb[0].mxu0
      %2823 = vmatprep.mubr.bf16.mxu0 0
      %2824 = vmatmul.mubr.bf16.gmra.mrb[0].mxu0 %v2677
      %v2825 = vpop.f32.mrb[0].mxu0
      %v2826 = vadd.f32 0.0, %v2825
      %v2827 = vpop.f32.mrb[0].mxu0
      %v2828 = vpop.f32.mrb[0].mxu0
      %v2829 = vadd.f32 0.0, %v2828
      %v2830 = vpop.f32.mrb[0].mxu0
      %2831 = vmatprep.mubr.bf16.mxu0 0
      %2832 = vmatmul.mubr.bf16.gmra.mrb[0].mxu0 %v2678
      %v2833 = vpop.f32.mrb[0].mxu0
      %v2834 = vadd.f32 0.0, %v2833
      %v2835 = vpop.f32.mrb[0].mxu0
      %v2836 = vpop.f32.mrb[0].mxu0
      %v2837 = vadd.f32 0.0, %v2836
      %v2838 = vpop.f32.mrb[0].mxu0
      %2839 = vdwg.mxu0
      %v2840 = vpack.c.bf16 %v2781, %v2778
      %v2841 = vpack.c.bf16 %v2789, %v2786
      %v2842 = vpack.c.bf16 %v2797, %v2794
      %v2843 = vpack.c.bf16 %v2805, %v2802
      %v2844 = vpack.c.bf16 %v2813, %v2810
      %v2845 = vpack.c.bf16 %v2821, %v2818
      %v2846 = vpack.c.bf16 %v2829, %v2826
      %v2847 = vpack.c.bf16 %v2837, %v2834
      %v2848 = vld [vmem:[%s7] sm:$0xf]
      %v2849 = vld [vmem:[%s7 + $0x4] sm:$0xf]
      %v2850 = vld [vmem:[%s7 + $0x8] sm:$0xf]
      %v2851 = vld [vmem:[%s7 + $0xc] sm:$0xf]
      %v2852 = vld [vmem:[%s7 + $0x10] sm:$0xf]
      %v2853 = vld [vmem:[%s7 + $0x14] sm:$0xf]
      %v2854 = vld [vmem:[%s7 + $0x18] sm:$0xf]
      %v2855 = vld [vmem:[%s7 + $0x1c] sm:$0xf]
      %v2856 = vld [vmem:[%s7 + $0x20] sm:$0xf]
      %v2857 = vld [vmem:[%s7 + $0x24] sm:$0xf]
      %v2858 = vld [vmem:[%s7 + $0x28] sm:$0xf]
      %v2859 = vld [vmem:[%s7 + $0x2c] sm:$0xf]
      %v2860 = vld [vmem:[%s7 + $0x30] sm:$0xf]
      %v2861 = vld [vmem:[%s7 + $0x34] sm:$0xf]
      %v2862 = vld [vmem:[%s7 + $0x38] sm:$0xf]
      %v2863 = vld [vmem:[%s7 + $0x3c] sm:$0xf]
      %v2864 = vld [vmem:[%s7 + $0x40] sm:$0xf]
      %v2865 = vld [vmem:[%s7 + $0x44] sm:$0xf]
      %v2866 = vld [vmem:[%s7 + $0x48] sm:$0xf]
      %v2867 = vld [vmem:[%s7 + $0x4c] sm:$0xf]
      %v2868 = vld [vmem:[%s7 + $0x50] sm:$0xf]
      %v2869 = vld [vmem:[%s7 + $0x54] sm:$0xf]
      %v2870 = vld [vmem:[%s7 + $0x58] sm:$0xf]
      %v2871 = vld [vmem:[%s7 + $0x5c] sm:$0xf]
      %v2872 = vld [vmem:[%s7 + $0x60] sm:$0xf]
      %v2873 = vld [vmem:[%s7 + $0x64] sm:$0xf]
      %v2874 = vld [vmem:[%s7 + $0x68] sm:$0xf]
      %v2875 = vld [vmem:[%s7 + $0x6c] sm:$0xf]
      %v2876 = vld [vmem:[%s7 + $0x70] sm:$0xf]
      %v2877 = vld [vmem:[%s7 + $0x74] sm:$0xf]
      %v2878 = vld [vmem:[%s7 + $0x78] sm:$0xf]
      %v2879 = vld [vmem:[%s7 + $0x7c] sm:$0xf]
      %v2880 = vld [vmem:[%s8] sm:$0x1]
      %v2882 = vlaneseq
      %v2883 = vshrl.u32 %v2882, 7
      %v2884 = vsub.s32 0, %v2883
      %v2885 = vrot.slane %v2880, %v2884
      %v2919 = vunpack.c.l.b16 %v2848
      %v2920 = vunpack.c.l.b16 %v2849
      %v2921 = vunpack.c.l.b16 %v2850
      %v2922 = vunpack.c.l.b16 %v2851
      %v2923 = vunpack.c.l.b16 %v2852
      %v2924 = vunpack.c.l.b16 %v2853
      %v2925 = vunpack.c.l.b16 %v2854
      %v2926 = vunpack.c.l.b16 %v2855
      %v2927 = vunpack.c.l.b16 %v2856
      %v2928 = vunpack.c.l.b16 %v2857
      %v2929 = vunpack.c.l.b16 %v2858
      %v2930 = vunpack.c.l.b16 %v2859
      %v2931 = vunpack.c.l.b16 %v2860
      %v2932 = vunpack.c.l.b16 %v2861
      %v2933 = vunpack.c.l.b16 %v2862
      %v2934 = vunpack.c.l.b16 %v2863
      %v2935 = vunpack.c.l.b16 %v2864
      %v2936 = vunpack.c.l.b16 %v2865
      %v2937 = vunpack.c.l.b16 %v2866
      %v2938 = vunpack.c.l.b16 %v2867
      %v2939 = vunpack.c.l.b16 %v2868
      %v2940 = vunpack.c.l.b16 %v2869
      %v2941 = vunpack.c.l.b16 %v2870
      %v2942 = vunpack.c.l.b16 %v2871
      %v2943 = vunpack.c.l.b16 %v2872
      %v2944 = vunpack.c.l.b16 %v2873
      %v2945 = vunpack.c.l.b16 %v2874
      %v2946 = vunpack.c.l.b16 %v2875
      %v2947 = vunpack.c.l.b16 %v2876
      %v2948 = vunpack.c.l.b16 %v2877
      %v2949 = vunpack.c.l.b16 %v2878
      %v2950 = vunpack.c.l.b16 %v2879
      %v2951 = vpack.c.b16 %v2920, %v2919
      %v2952 = vpack.c.b16 %v2922, %v2921
      %v2953 = vpack.c.b16 %v2924, %v2923
      %v2954 = vpack.c.b16 %v2926, %v2925
      %v2955 = vpack.c.b16 %v2928, %v2927
      %v2956 = vpack.c.b16 %v2930, %v2929
      %v2957 = vpack.c.b16 %v2932, %v2931
      %v2958 = vpack.c.b16 %v2934, %v2933
      %v2959 = vpack.c.b16 %v2936, %v2935
      %v2960 = vpack.c.b16 %v2938, %v2937
      %v2961 = vpack.c.b16 %v2940, %v2939
      %v2962 = vpack.c.b16 %v2942, %v2941
      %v2963 = vpack.c.b16 %v2944, %v2943
      %v2964 = vpack.c.b16 %v2946, %v2945
      %v2965 = vpack.c.b16 %v2948, %v2947
      %v2966 = vpack.c.b16 %v2950, %v2949
      %2983 = vmatprep.subr.bf16.mxu0 0
      %2984 = vmatpush1.bf16.msra.mxu0 %v2951
      %2985 = vmatprep.subr.bf16.mxu0 0
      %2986 = vmatpush1.bf16.msra.mxu0 %v2952
      %2987 = vmatprep.subr.bf16.mxu0 0
      %2988 = vmatpush1.bf16.msra.mxu0 %v2953
      %2989 = vmatprep.subr.bf16.mxu0 0
      %2990 = vmatpush1.bf16.msra.mxu0 %v2954
      %2991 = vmatprep.subr.bf16.mxu0 0
      %2992 = vmatpush1.bf16.msra.mxu0 %v2955
      %2993 = vmatprep.subr.bf16.mxu0 0
      %2994 = vmatpush1.bf16.msra.mxu0 %v2956
      %2995 = vmatprep.subr.bf16.mxu0 0
      %2996 = vmatpush1.bf16.msra.mxu0 %v2957
      %2997 = vmatprep.subr.bf16.mxu0 0
      %2998 = vmatpush1.bf16.msra.mxu0 %v2958
      %2999 = vmatprep.subr.bf16.mxu0 0
      %3000 = vmatpush1.bf16.msra.mxu0 %v2959
      %3001 = vmatprep.subr.bf16.mxu0 0
      %3002 = vmatpush1.bf16.msra.mxu0 %v2960
      %3003 = vmatprep.subr.bf16.mxu0 0
      %3004 = vmatpush1.bf16.msra.mxu0 %v2961
      %3005 = vmatprep.subr.bf16.mxu0 0
      %3006 = vmatpush1.bf16.msra.mxu0 %v2962
      %3007 = vmatprep.subr.bf16.mxu0 0
      %3008 = vmatpush1.bf16.msra.mxu0 %v2963
      %3009 = vmatprep.subr.bf16.mxu0 0
      %3010 = vmatpush1.bf16.msra.mxu0 %v2964
      %3011 = vmatprep.subr.bf16.mxu0 0
      %3012 = vmatpush1.bf16.msra.mxu0 %v2965
      %3013 = vmatprep.subr.bf16.mxu0 0
      %3014 = vmatpush1.bf16.msra.mxu0 %v2966
      %3015 = vmatprep.mubr.bf16.mxu0 %v2840
      %3016 = vmatmul.mubr.bf16.gmra.mrb[0].mxu0 %v853
      %v3017 = vpop.f32.mrb[0].mxu0
      %v3018 = vadd.f32 %v2885, %v3017
      %v3019 = vpop.f32.mrb[0].mxu0
      %v3020 = vpop.f32.mrb[0].mxu0
      %v3021 = vadd.f32 %v2885, %v3020
      %v3022 = vpop.f32.mrb[0].mxu0
      %3023 = vmatprep.mubr.bf16.mxu0 %v2841
      %3024 = vmatmul.mubr.bf16.gmra.mrb[0].mxu0 %v854
      %v3025 = vpop.f32.mrb[0].mxu0
      %v3026 = vadd.f32 %v2885, %v3025
      %v3027 = vpop.f32.mrb[0].mxu0
      %v3028 = vpop.f32.mrb[0].mxu0
      %v3029 = vadd.f32 %v2885, %v3028
      %v3030 = vpop.f32.mrb[0].mxu0
      %3031 = vmatprep.mubr.bf16.mxu0 %v2842
      %3032 = vmatmul.mubr.bf16.gmra.mrb[0].mxu0 %v855
      %v3033 = vpop.f32.mrb[0].mxu0
      %v3034 = vadd.f32 %v2885, %v3033
      %v3035 = vpop.f32.mrb[0].mxu0
      %v3036 = vpop.f32.mrb[0].mxu0
      %v3037 = vadd.f32 %v2885, %v3036
      %v3038 = vpop.f32.mrb[0].mxu0
      %3039 = vmatprep.mubr.bf16.mxu0 %v2843
      %3040 = vmatmul.mubr.bf16.gmra.mrb[0].mxu0 %v856
      %v3041 = vpop.f32.mrb[0].mxu0
      %v3042 = vadd.f32 %v2885, %v3041
      %v3043 = vpop.f32.mrb[0].mxu0
      %v3044 = vpop.f32.mrb[0].mxu0
      %v3045 = vadd.f32 %v2885, %v3044
      %v3046 = vpop.f32.mrb[0].mxu0
      %3047 = vmatprep.mubr.bf16.mxu0 %v2844
      %3048 = vmatmul.mubr.bf16.gmra.mrb[0].mxu0 %v857
      %v3049 = vpop.f32.mrb[0].mxu0
      %v3050 = vadd.f32 %v2885, %v3049
      %v3051 = vpop.f32.mrb[0].mxu0
      %v3052 = vpop.f32.mrb[0].mxu0
      %v3053 = vadd.f32 %v2885, %v3052
      %v3054 = vpop.f32.mrb[0].mxu0
      %3055 = vmatprep.mubr.bf16.mxu0 %v2845
      %3056 = vmatmul.mubr.bf16.gmra.mrb[0].mxu0 %v858
      %v3057 = vpop.f32.mrb[0].mxu0
      %v3058 = vadd.f32 %v2885, %v3057
      %v3059 = vpop.f32.mrb[0].mxu0
      %v3060 = vpop.f32.mrb[0].mxu0
      %v3061 = vadd.f32 %v2885, %v3060
      %v3062 = vpop.f32.mrb[0].mxu0
      %3063 = vmatprep.mubr.bf16.mxu0 %v2846
      %3064 = vmatmul.mubr.bf16.gmra.mrb[0].mxu0 %v859
      %v3065 = vpop.f32.mrb[0].mxu0
      %v3066 = vadd.f32 %v2885, %v3065
      %v3067 = vpop.f32.mrb[0].mxu0
      %v3068 = vpop.f32.mrb[0].mxu0
      %v3069 = vadd.f32 %v2885, %v3068
      %v3070 = vpop.f32.mrb[0].mxu0
      %3071 = vmatprep.mubr.bf16.mxu0 %v2847
      %3072 = vmatmul.mubr.bf16.gmra.mrb[0].mxu0 %v860
      %v3073 = vpop.f32.mrb[0].mxu0
      %v3074 = vadd.f32 %v2885, %v3073
      %v3075 = vpop.f32.mrb[0].mxu0
      %v3076 = vpop.f32.mrb[0].mxu0
      %v3077 = vadd.f32 %v2885, %v3076
      %v3078 = vpop.f32.mrb[0].mxu0
      %3079 = vdwg.mxu0
      %v3080 = vmax.f32 %v3018, 0.0
      %v3081 = vmax.f32 %v3021, 0.0
      %v3082 = vmax.f32 %v3026, 0.0
      %v3083 = vmax.f32 %v3029, 0.0
      %v3084 = vmax.f32 %v3034, 0.0
      %v3085 = vmax.f32 %v3037, 0.0
      %v3086 = vmax.f32 %v3042, 0.0
      %v3087 = vmax.f32 %v3045, 0.0
      %v3088 = vmax.f32 %v3050, 0.0
      %v3089 = vmax.f32 %v3053, 0.0
      %v3090 = vmax.f32 %v3058, 0.0
      %v3091 = vmax.f32 %v3061, 0.0
      %v3092 = vmax.f32 %v3066, 0.0
      %v3093 = vmax.f32 %v3069, 0.0
      %v3094 = vmax.f32 %v3074, 0.0
      %v3095 = vmax.f32 %v3077, 0.0
      %v3096 = vpack.c.bf16 %v3081, %v3080
      %v3097 = vpack.c.bf16 %v3083, %v3082
      %v3098 = vpack.c.bf16 %v3085, %v3084
      %v3099 = vpack.c.bf16 %v3087, %v3086
      %v3100 = vpack.c.bf16 %v3089, %v3088
      %v3101 = vpack.c.bf16 %v3091, %v3090
      %v3102 = vpack.c.bf16 %v3093, %v3092
      %v3103 = vpack.c.bf16 %v3095, %v3094
      %v3104 = vld [vmem:[%s9] sm:$0xf]
      %v3105 = vld [vmem:[%s9 + $0x4] sm:$0xf]
      %v3106 = vld [vmem:[%s9 + $0x8] sm:$0xf]
      %v3107 = vld [vmem:[%s9 + $0xc] sm:$0xf]
      %v3108 = vld [vmem:[%s9 + $0x10] sm:$0xf]
      %v3109 = vld [vmem:[%s9 + $0x14] sm:$0xf]
      %v3110 = vld [vmem:[%s9 + $0x18] sm:$0xf]
      %v3111 = vld [vmem:[%s9 + $0x1c] sm:$0xf]
      %v3112 = vld [vmem:[%s9 + $0x20] sm:$0xf]
      %v3113 = vld [vmem:[%s9 + $0x24] sm:$0xf]
      %v3114 = vld [vmem:[%s9 + $0x28] sm:$0xf]
      %v3115 = vld [vmem:[%s9 + $0x2c] sm:$0xf]
      %v3116 = vld [vmem:[%s9 + $0x30] sm:$0xf]
      %v3117 = vld [vmem:[%s9 + $0x34] sm:$0xf]
      %v3118 = vld [vmem:[%s9 + $0x38] sm:$0xf]
      %v3119 = vld [vmem:[%s9 + $0x3c] sm:$0xf]
      %v3120 = vld [vmem:[%s10] sm:$0x1]
      %v3122 = vlaneseq
      %v3123 = vshrl.u32 %v3122, 7
      %v3124 = vsub.s32 0, %v3123
      %v3125 = vrot.slane %v3120, %v3124
      %v3143 = vunpack.c.l.b16 %v3104
      %v3144 = vunpack.c.l.b16 %v3105
      %v3145 = vunpack.c.l.b16 %v3106
      %v3146 = vunpack.c.l.b16 %v3107
      %v3147 = vunpack.c.l.b16 %v3108
      %v3148 = vunpack.c.l.b16 %v3109
      %v3149 = vunpack.c.l.b16 %v3110
      %v3150 = vunpack.c.l.b16 %v3111
      %v3151 = vunpack.c.l.b16 %v3112
      %v3152 = vunpack.c.l.b16 %v3113
      %v3153 = vunpack.c.l.b16 %v3114
      %v3154 = vunpack.c.l.b16 %v3115
      %v3155 = vunpack.c.l.b16 %v3116
      %v3156 = vunpack.c.l.b16 %v3117
      %v3157 = vunpack.c.l.b16 %v3118
      %v3158 = vunpack.c.l.b16 %v3119
      %v3159 = vpack.c.b16 %v3144, %v3143
      %v3160 = vpack.c.b16 %v3146, %v3145
      %v3161 = vpack.c.b16 %v3148, %v3147
      %v3162 = vpack.c.b16 %v3150, %v3149
      %v3163 = vpack.c.b16 %v3152, %v3151
      %v3164 = vpack.c.b16 %v3154, %v3153
      %v3165 = vpack.c.b16 %v3156, %v3155
      %v3166 = vpack.c.b16 %v3158, %v3157
      %3175 = vmatprep.subr.bf16.mxu0 0
      %3176 = vmatpush1.bf16.msra.mxu0 %v3159
      %3177 = vmatprep.subr.bf16.mxu0 0
      %3178 = vmatpush1.bf16.msra.mxu0 %v3160
      %3179 = vmatprep.subr.bf16.mxu0 0
      %3180 = vmatpush1.bf16.msra.mxu0 %v3161
      %3181 = vmatprep.subr.bf16.mxu0 0
      %3182 = vmatpush1.bf16.msra.mxu0 %v3162
      %3183 = vmatprep.subr.bf16.mxu0 0
      %3184 = vmatpush1.bf16.msra.mxu0 %v3163
      %3185 = vmatprep.subr.bf16.mxu0 0
      %3186 = vmatpush1.bf16.msra.mxu0 %v3164
      %3187 = vmatprep.subr.bf16.mxu0 0
      %3188 = vmatpush1.bf16.msra.mxu0 %v3165
      %3189 = vmatprep.subr.bf16.mxu0 0
      %3190 = vmatpush1.bf16.msra.mxu0 %v3166
      %3191 = vmatprep.subr.bf16.mxu0 0
      %3192 = vmatpush1.bf16.msra.mxu0 0
      %3193 = vmatprep.subr.bf16.mxu0 0
      %3194 = vmatpush1.bf16.msra.mxu0 0
      %3195 = vmatprep.subr.bf16.mxu0 0
      %3196 = vmatpush1.bf16.msra.mxu0 0
      %3197 = vmatprep.subr.bf16.mxu0 0
      %3198 = vmatpush1.bf16.msra.mxu0 0
      %3199 = vmatprep.subr.bf16.mxu0 0
      %3200 = vmatpush1.bf16.msra.mxu0 0
      %3201 = vmatprep.subr.bf16.mxu0 0
      %3202 = vmatpush1.bf16.msra.mxu0 0
      %3203 = vmatprep.subr.bf16.mxu0 0
      %3204 = vmatpush1.bf16.msra.mxu0 0
      %3205 = vmatprep.subr.bf16.mxu0 0
      %3206 = vmatpush1.bf16.msra.mxu0 0
      %3207 = vmatprep.mubr.bf16.mxu0 0
      %3208 = vmatmul.mubr.bf16.gmra.mrb[0].mxu0 %v3096
      %v3209 = vpop.f32.mrb[0].mxu0
      %v3210 = vadd.f32 %v3125, %v3209
      %v3211 = vpop.f32.mrb[0].mxu0
      %v3212 = vpop.f32.mrb[0].mxu0
      %v3213 = vadd.f32 %v3125, %v3212
      %v3214 = vpop.f32.mrb[0].mxu0
      %3215 = vmatprep.mubr.bf16.mxu0 0
      %3216 = vmatmul.mubr.bf16.gmra.mrb[0].mxu0 %v3097
      %v3217 = vpop.f32.mrb[0].mxu0
      %v3218 = vadd.f32 %v3125, %v3217
      %v3219 = vpop.f32.mrb[0].mxu0
      %v3220 = vpop.f32.mrb[0].mxu0
      %v3221 = vadd.f32 %v3125, %v3220
      %v3222 = vpop.f32.mrb[0].mxu0
      %3223 = vmatprep.mubr.bf16.mxu0 0
      %3224 = vmatmul.mubr.bf16.gmra.mrb[0].mxu0 %v3098
      %v3225 = vpop.f32.mrb[0].mxu0
      %v3226 = vadd.f32 %v3125, %v3225
      %v3227 = vpop.f32.mrb[0].mxu0
      %v3228 = vpop.f32.mrb[0].mxu0
      %v3229 = vadd.f32 %v3125, %v3228
      %v3230 = vpop.f32.mrb[0].mxu0
      %3231 = vmatprep.mubr.bf16.mxu0 0
      %3232 = vmatmul.mubr.bf16.gmra.mrb[0].mxu0 %v3099
      %v3233 = vpop.f32.mrb[0].mxu0
      %v3234 = vadd.f32 %v3125, %v3233
      %v3235 = vpop.f32.mrb[0].mxu0
      %v3236 = vpop.f32.mrb[0].mxu0
      %v3237 = vadd.f32 %v3125, %v3236
      %v3238 = vpop.f32.mrb[0].mxu0
      %3239 = vmatprep.mubr.bf16.mxu0 0
      %3240 = vmatmul.mubr.bf16.gmra.mrb[0].mxu0 %v3100
      %v3241 = vpop.f32.mrb[0].mxu0
      %v3242 = vadd.f32 %v3125, %v3241
      %v3243 = vpop.f32.mrb[0].mxu0
      %v3244 = vpop.f32.mrb[0].mxu0
      %v3245 = vadd.f32 %v3125, %v3244
      %v3246 = vpop.f32.mrb[0].mxu0
      %3247 = vmatprep.mubr.bf16.mxu0 0
      %3248 = vmatmul.mubr.bf16.gmra.mrb[0].mxu0 %v3101
      %v3249 = vpop.f32.mrb[0].mxu0
      %v3250 = vadd.f32 %v3125, %v3249
      %v3251 = vpop.f32.mrb[0].mxu0
      %v3252 = vpop.f32.mrb[0].mxu0
      %v3253 = vadd.f32 %v3125, %v3252
      %v3254 = vpop.f32.mrb[0].mxu0
      %3255 = vmatprep.mubr.bf16.mxu0 0
      %3256 = vmatmul.mubr.bf16.gmra.mrb[0].mxu0 %v3102
      %v3257 = vpop.f32.mrb[0].mxu0
      %v3258 = vadd.f32 %v3125, %v3257
      %v3259 = vpop.f32.mrb[0].mxu0
      %v3260 = vpop.f32.mrb[0].mxu0
      %v3261 = vadd.f32 %v3125, %v3260
      %v3262 = vpop.f32.mrb[0].mxu0
      %3263 = vmatprep.mubr.bf16.mxu0 0
      %3264 = vmatmul.mubr.bf16.gmra.mrb[0].mxu0 %v3103
      %v3265 = vpop.f32.mrb[0].mxu0
      %v3266 = vadd.f32 %v3125, %v3265
      %v3267 = vpop.f32.mrb[0].mxu0
      %v3268 = vpop.f32.mrb[0].mxu0
      %v3269 = vadd.f32 %v3125, %v3268
      %v3270 = vpop.f32.mrb[0].mxu0
      %3271 = vdwg.mxu0
      %v3272 = vxor.u32 %v3210, 2147483648
      %v3273 = vxor.u32 %v3213, 2147483648
      %v3274 = vxor.u32 %v3218, 2147483648
      %v3275 = vxor.u32 %v3221, 2147483648
      %v3276 = vxor.u32 %v3226, 2147483648
      %v3277 = vxor.u32 %v3229, 2147483648
      %v3278 = vxor.u32 %v3234, 2147483648
      %v3279 = vxor.u32 %v3237, 2147483648
      %v3280 = vxor.u32 %v3242, 2147483648
      %v3281 = vxor.u32 %v3245, 2147483648
      %v3282 = vxor.u32 %v3250, 2147483648
      %v3283 = vxor.u32 %v3253, 2147483648
      %v3284 = vxor.u32 %v3258, 2147483648
      %v3285 = vxor.u32 %v3261, 2147483648
      %v3286 = vxor.u32 %v3266, 2147483648
      %v3287 = vxor.u32 %v3269, 2147483648
      %v3288 = vmul.f32 %v3272, 1.442695
      %v3289 = vpow.pop %v3288
      %v3290 = vmul.f32 %v3273, 1.442695
      %v3291 = vpow.pop %v3290
      %v3292 = vmul.f32 %v3274, 1.442695
      %v3293 = vpow.pop %v3292
      %v3294 = vmul.f32 %v3275, 1.442695
      %v3295 = vpow.pop %v3294
      %v3296 = vmul.f32 %v3276, 1.442695
      %v3297 = vpow.pop %v3296
      %v3298 = vmul.f32 %v3277, 1.442695
      %v3299 = vpow.pop %v3298
      %v3300 = vmul.f32 %v3278, 1.442695
      %v3301 = vpow.pop %v3300
      %v3302 = vmul.f32 %v3279, 1.442695
      %v3303 = vpow.pop %v3302
      %v3304 = vmul.f32 %v3280, 1.442695
      %v3305 = vpow.pop %v3304
      %v3306 = vmul.f32 %v3281, 1.442695
      %v3307 = vpow.pop %v3306
      %v3308 = vmul.f32 %v3282, 1.442695
      %v3309 = vpow.pop %v3308
      %v3310 = vmul.f32 %v3283, 1.442695
      %v3311 = vpow.pop %v3310
      %v3312 = vmul.f32 %v3284, 1.442695
      %v3313 = vpow.pop %v3312
      %v3314 = vmul.f32 %v3285, 1.442695
      %v3315 = vpow.pop %v3314
      %v3316 = vmul.f32 %v3286, 1.442695
      %v3317 = vpow.pop %v3316
      %v3318 = vmul.f32 %v3287, 1.442695
      %v3319 = vpow.pop %v3318
      %v3320 = vadd.f32 %v3289, 1.0
      %v3321 = vadd.f32 %v3291, 1.0
      %v3322 = vadd.f32 %v3293, 1.0
      %v3323 = vadd.f32 %v3295, 1.0
      %v3324 = vadd.f32 %v3297, 1.0
      %v3325 = vadd.f32 %v3299, 1.0
      %v3326 = vadd.f32 %v3301, 1.0
      %v3327 = vadd.f32 %v3303, 1.0
      %v3328 = vadd.f32 %v3305, 1.0
      %v3329 = vadd.f32 %v3307, 1.0
      %v3330 = vadd.f32 %v3309, 1.0
      %v3331 = vadd.f32 %v3311, 1.0
      %v3332 = vadd.f32 %v3313, 1.0
      %v3333 = vadd.f32 %v3315, 1.0
      %v3334 = vadd.f32 %v3317, 1.0
      %v3335 = vadd.f32 %v3319, 1.0
      %v3336 = vrcp.pop %v3320
      %v3337 = vmul.f32 1.0, %v3336
      %v3338 = vrcp.pop %v3321
      %v3339 = vmul.f32 1.0, %v3338
      %v3340 = vrcp.pop %v3322
      %v3341 = vmul.f32 1.0, %v3340
      %v3342 = vrcp.pop %v3323
      %v3343 = vmul.f32 1.0, %v3342
      %v3344 = vrcp.pop %v3324
      %v3345 = vmul.f32 1.0, %v3344
      %v3346 = vrcp.pop %v3325
      %v3347 = vmul.f32 1.0, %v3346
      %v3348 = vrcp.pop %v3326
      %v3349 = vmul.f32 1.0, %v3348
      %v3350 = vrcp.pop %v3327
      %v3351 = vmul.f32 1.0, %v3350
      %v3352 = vrcp.pop %v3328
      %v3353 = vmul.f32 1.0, %v3352
      %v3354 = vrcp.pop %v3329
      %v3355 = vmul.f32 1.0, %v3354
      %v3356 = vrcp.pop %v3330
      %v3357 = vmul.f32 1.0, %v3356
      %v3358 = vrcp.pop %v3331
      %v3359 = vmul.f32 1.0, %v3358
      %v3360 = vrcp.pop %v3332
      %v3361 = vmul.f32 1.0, %v3360
      %v3362 = vrcp.pop %v3333
      %v3363 = vmul.f32 1.0, %v3362
      %v3364 = vrcp.pop %v3334
      %v3365 = vmul.f32 1.0, %v3364
      %v3366 = vrcp.pop %v3335
      %v3367 = vmul.f32 1.0, %v3366
      %3368 = vst [vmem:[%s410] sm:$0xff] %v3337
      %3369 = vst [vmem:[%s410 + $0x8] sm:$0xff] %v3339
      %3370 = vst [vmem:[%s410 + $0x10] sm:$0xff] %v3341
      %3371 = vst [vmem:[%s410 + $0x18] sm:$0xff] %v3343
      %3372 = vst [vmem:[%s410 + $0x20] sm:$0xff] %v3345
      %3373 = vst [vmem:[%s410 + $0x28] sm:$0xff] %v3347
      %3374 = vst [vmem:[%s410 + $0x30] sm:$0xff] %v3349
      %3375 = vst [vmem:[%s410 + $0x38] sm:$0xff] %v3351
      %3376 = vst [vmem:[%s410 + $0x40] sm:$0xff] %v3353
      %3377 = vst [vmem:[%s410 + $0x48] sm:$0xff] %v3355
      %3378 = vst [vmem:[%s410 + $0x50] sm:$0xff] %v3357
      %3379 = vst [vmem:[%s410 + $0x58] sm:$0xff] %v3359
      %3380 = vst [vmem:[%s410 + $0x60] sm:$0xff] %v3361
      %3381 = vst [vmem:[%s410 + $0x68] sm:$0xff] %v3363
      %3382 = vst [vmem:[%s410 + $0x70] sm:$0xff] %v3365
      %3383 = vst [vmem:[%s410 + $0x78] sm:$0xff] %v3367
      %s3384 = smul.u32 16, %s22
      %p3385 = scmp.lt.s32.totalorder %s3384, 31
      %s3386 = scalar_select %p3385, %s3384, 31
      %s3387 = smul.addr %s3386, 8
      %s3388 = scalar_lea.vmem %s11, %s3387
      // Predicated region
      $region65: #{fwd.1} parent=63 // pred_check
        %p3389 = pneg %p281
      $region66: #{fwd.1} parent=63 // pred_check_branch
        %3391 = sbr.rel (%p3389) target = $region68
      $region67: #{fwd.1} parent=63 // pred_region
        %s3392 = smul.u32 16, %s22
      $region68: #{fwd.1} parent=63 // pred_fallthru
        _
    $region64: #{fwd.1} parent=5 // pred_fallthru
      _
    %p3393 = scmp.le.s32.totalorder 2, %s17
    // Predicated region
    $region69: #{fwd.1} parent=5 // pred_check
      %p3394 = pneg %p3393
    $region70: #{fwd.1} parent=5 // pred_check_branch
      %3396 = sbr.rel (%p3394) target = $region72
    $region71: #{fwd.1} parent=5 // pred_region
      %s3397 = ssub.s32 %s17, 2
      // Predicated region
      $region73: #{fwd.1} parent=71 // pred_check
        %p3398 = pneg %p287
      $region74: #{fwd.1} parent=71 // pred_check_branch
        %3400 = sbr.rel (%p3398) target = $region76
      $region75: #{fwd.1} parent=71 // pred_region
        %s3401 = smul.u32 16, %s23
        %p3402 = scmp.lt.s32.totalorder %s3401, 31
        %s3403 = scalar_select %p3402, %s3401, 31
        %s3404 = smul.addr %s3403, 8
        %s3405 = scalar_lea.vmem %s11, %s3404
      $region76: #{fwd.1} parent=71 // pred_fallthru
        _
    $region72: #{fwd.1} parent=5 // pred_fallthru
      _
  $region6: #{fwd.1} parent=0 // loop_footer
    %s21 = sadd.s32 1, %s17
  $region7: #{fwd.1} parent=0 // loop_footer_branch
    %16 = sbr.rel target = $region3
  $region8: #{fwd.1} parent=0 // loop_exit
    _

</llo_original>
